<compile_context>
chip_gen: v5e
topology: v5e:2x2
jax: 0.10.0
libtpu: 0.0.40
codegen_flags: <defaults>
</compile_context>

<pallas_src>
import functools
import math

import jax
import jax.numpy as jnp
from jax.experimental import pallas as pl
from jax.experimental.pallas import tpu as pltpu

# ----------------------------- model hyper-params -----------------------------
D_MODEL = 128          # hidden size (lane aligned)
N_HEADS = 4
HEAD_DIM = D_MODEL // N_HEADS
MLP_DIM = 512
N_LAYERS = 2
PATCH = 16             # self.patch_size
AUDIO_PATCH = (16, 16) # self.audio_patch_size
LN_EPS = 1e-5          # torch.nn.LayerNorm default


# ----------------------------- kernel helpers ----------------------------------
def _layernorm(x, gamma, beta):
    """f32 LayerNorm over the last dim (biased variance, matches torch)."""
    mu = jnp.mean(x, axis=-1, keepdims=True)
    var = jnp.mean(jnp.square(x - mu), axis=-1, keepdims=True)
    return (x - mu) * jax.lax.rsqrt(var + LN_EPS) * gamma + beta


def _erf(x):
    """Abramowitz & Stegun 7.1.26 erf (|err| < 1.5e-7); VPU/EUP ops only."""
    a1, a2, a3, a4, a5 = (0.254829592, -0.284496736, 1.421413741,
                          -1.453152027, 1.061405429)
    p = 0.3275911
    ax = jnp.abs(x)
    t = 1.0 / (1.0 + p * ax)
    poly = ((((a5 * t + a4) * t + a3) * t + a2) * t + a1) * t
    e = 1.0 - poly * jnp.exp(-ax * ax)
    return jnp.where(x < 0.0, -e, e)


def _gelu(x):
    """erf-GELU (torch.nn.GELU default)."""
    return 0.5 * x * (1.0 + _erf(x * 0.7071067811865476))


# ----------------------------- fused backbone kernel ---------------------------
def _backbone_kernel(patch_ref, wp_ref, tb_ref,
                     wqkv_ref, bqkv_ref, wo_ref, bo_ref,
                     w1_ref, b1_ref, w2_ref, b2_ref,
                     g1_ref, be1_ref, g2_ref, be2_ref,
                     lnfg_ref, lnfb_ref, o_ref,
                     *, n_layers, n_heads, d_model):
    S = patch_ref.shape[1]
    hd = d_model // n_heads
    bf16 = jnp.bfloat16

    def mm(x_bf16, w_bf16):
        # bf16 operands for the MXU, f32 accumulation.
        return jnp.dot(x_bf16, w_bf16, preferred_element_type=jnp.float32)

    # ---- patch-embed + cls token + pos embed in ONE lane-dense matmul ---------
    # patch_ref rows: [zero row (cls) | audio patches | video patches], padded to a
    # combined 1024-wide feature; tb_ref = [cls | b_patch_a | b_patch_v] + pos.
    x = mm(patch_ref[0], wp_ref[...]) + tb_ref[...]              # (S, D) f32

    for l in range(n_layers):
        # ---- pre-LN multi-head self-attention (fused QKV, fused out-proj) -----
        h = _layernorm(x, g1_ref[l], be1_ref[l]).astype(bf16)    # cast once
        qkv = (mm(h, wqkv_ref[l]) + bqkv_ref[l]).astype(bf16)    # (S, 3D), 1 matmul
        # 1/sqrt(hd) is pre-folded into the Q columns of wqkv/bqkv on the host.

        scores = []
        for hi in range(n_heads):                                # lane slices @ k*32
            q_h = qkv[:, hi * hd:(hi + 1) * hd]                  # (S, hd)
            k_h = qkv[:, d_model + hi * hd:d_model + (hi + 1) * hd]
            scores.append(jax.lax.dot_general(                   # (S, S) f32
                q_h, k_h, (((1,), (1,)), ((), ())),
                preferred_element_type=jnp.float32))
        # stack heads along sublanes -> one softmax per layer
        s_all = jnp.concatenate(scores, axis=0)                  # (H*S, S) f32
        s_all = s_all - jnp.max(s_all, axis=-1, keepdims=True)
        p_all = jnp.exp(s_all)
        p_all = (p_all / jnp.sum(p_all, axis=-1, keepdims=True)).astype(bf16)

        ctx = []
        for hi in range(n_heads):
            v_h = qkv[:, 2 * d_model + hi * hd:2 * d_model + (hi + 1) * hd]
            ctx.append(mm(p_all[hi * S:(hi + 1) * S, :], v_h))   # (S, hd) f32
        ctx2d = jnp.concatenate(ctx, axis=-1).astype(bf16)       # (S, D): lane concat
        x = x + mm(ctx2d, wo_ref[l]) + bo_ref[l]                 # single out-proj

        # ---- pre-LN MLP (erf GELU == torch.nn.GELU default) -------------------
        h2 = _layernorm(x, g2_ref[l], be2_ref[l]).astype(bf16)
        m = _gelu(mm(h2, w1_ref[l]) + b1_ref[l]).astype(bf16)
        x = x + mm(m, w2_ref[l]) + b2_ref[l]

    # ---- final LayerNorm --------------------------------------------------------
    o_ref[0] = _layernorm(x, lnfg_ref[...], lnfb_ref[...]).astype(o_ref.dtype)


# ----------------------------- host-side glue ----------------------------------
def patchify(x, ph, pw):
    """NCHW -> (B, num_patches, C*ph*pw); equivalent to Conv2d stride=patch unfold."""
    B, C, H, W = x.shape
    gh, gw = H // ph, W // pw
    x = x.reshape(B, C, gh, ph, gw, pw)
    x = x.transpose(0, 2, 4, 1, 3, 5)
    return x.reshape(B, gh * gw, C * ph * pw)


def init_params(key):
    """Deterministic synthetic weights (objectives.init_weights ~ trunc_normal(0.02))."""
    ks = jax.random.split(key, 8 + 4 * N_LAYERS)
    std = 0.02
    p = {
        "w_patch_v": jax.random.normal(ks[0], (3 * PATCH * PATCH, D_MODEL)) * std,
        "b_patch_v": jnp.zeros((1, D_MODEL)),
        "w_patch_a": jax.random.normal(ks[1], (AUDIO_PATCH[0] * AUDIO_PATCH[1], D_MODEL)) * std,
        "b_patch_a": jnp.zeros((1, D_MODEL)),
        "cls": jax.random.normal(ks[2], (1, 1, D_MODEL)) * std,
        "ln_f_g": jnp.ones((1, D_MODEL)),
        "ln_f_b": jnp.zeros((1, D_MODEL)),
        "blocks": [],
    }
    for l in range(N_LAYERS):
        kk = jax.random.split(ks[3 + l], 4)
        p["blocks"].append({
            "wqkv": jax.random.normal(kk[0], (D_MODEL, 3 * D_MODEL)) * std,
            "bqkv": jnp.zeros((1, 3 * D_MODEL)),
            "wo": jax.random.normal(kk[1], (D_MODEL, D_MODEL)) * std,
            "bo": jnp.zeros((1, D_MODEL)),
            "w1": jax.random.normal(kk[2], (D_MODEL, MLP_DIM)) * std,
            "b1": jnp.zeros((1, MLP_DIM)),
            "w2": jax.random.normal(kk[3], (MLP_DIM, D_MODEL)) * std,
            "b2": jnp.zeros((1, D_MODEL)),
            "g1": jnp.ones((1, D_MODEL)), "be1": jnp.zeros((1, D_MODEL)),
            "g2": jnp.ones((1, D_MODEL)), "be2": jnp.zeros((1, D_MODEL)),
        })
    return p


def make_pos_embed(key, seq_len):
    return jax.random.normal(key, (1, seq_len, D_MODEL)) * 0.02


def _pack_backbone_weights(params, pos_embed, na, nv):
    """Stack per-layer params into fused bf16 matmul operands (free under jit).

    * wqkv: (L, D, 3D) with the attention scale 1/sqrt(hd) folded into the Q columns.
    * w_patch: combined (256+768, D) patch-embed weight for the zero-padded patches.
    * tok_bias: per-token bias [cls | b_patch_a | b_patch_v] + positional embedding.
    Mathematically identical to the per-module projections of the reference backbone.
    """
    bf16 = jnp.bfloat16
    D = D_MODEL
    scale = 1.0 / math.sqrt(HEAD_DIM)
    wqkv, bqkv, wo, bo, w1, b1, w2, b2 = [], [], [], [], [], [], [], []
    g1, be1, g2, be2 = [], [], [], []
    for blk in params["blocks"]:
        wqkv.append(jnp.concatenate([blk["wqkv"][:, :D] * scale, blk["wqkv"][:, D:]], axis=1))
        bqkv.append(jnp.concatenate([blk["bqkv"][:, :D] * scale, blk["bqkv"][:, D:]], axis=1))
        wo.append(blk["wo"]); bo.append(blk["bo"])
        w1.append(blk["w1"]); b1.append(blk["b1"])
        w2.append(blk["w2"]); b2.append(blk["b2"])
        g1.append(blk["g1"]); be1.append(blk["be1"])
        g2.append(blk["g2"]); be2.append(blk["be2"])

    S = 1 + na + nv
    w_patch = jnp.concatenate([params["w_patch_a"], params["w_patch_v"]], axis=0)
    tok_bias = jnp.concatenate(
        [params["cls"].reshape(1, D),
         jnp.broadcast_to(params["b_patch_a"], (na, D)),
         jnp.broadcast_to(params["b_patch_v"], (nv, D))], axis=0) + pos_embed.reshape(S, D)

    stack = jnp.stack
    return dict(
        w_patch=w_patch.astype(bf16), tok_bias=tok_bias,
        wqkv=stack(wqkv).astype(bf16), bqkv=stack(bqkv),
        wo=stack(wo).astype(bf16), bo=stack(bo),
        w1=stack(w1).astype(bf16), b1=stack(b1),
        w2=stack(w2).astype(bf16), b2=stack(b2),
        g1=stack(g1), be1=stack(be1), g2=stack(g2), be2=stack(be2),
    )


def _pack_patch_tokens(a_patches, v_patches):
    """(B,Na,256)+(B,Nv,768) -> (B, 1+Na+Nv, 1024) bf16 combined token-patch matrix.

    Row 0 is all-zero (cls token comes from tok_bias); audio rows occupy the first 256
    columns, video rows the last 768.  One matmul with the combined weight reproduces
    both patch-embeds and leaves the cls row equal to its bias."""
    B, na, fa = a_patches.shape
    _, nv, fv = v_patches.shape
    cls_row = jnp.zeros((B, 1, fa + fv), jnp.float32)
    a_pad = jnp.pad(a_patches, ((0, 0), (0, 0), (0, fv)))
    v_pad = jnp.pad(v_patches, ((0, 0), (0, 0), (fa, 0)))
    return jnp.concatenate([cls_row, a_pad, v_pad], axis=1).astype(jnp.bfloat16)


@jax.jit
def backbone_forward(params, pos_embed, audio, video):
    """Equivalent of self.transformer(audio=..., video=...) in `infer`, fused into a
    single pallas_call (patch-embed + cls/pos + N encoder blocks + final LN)."""
    B = audio.shape[0]
    a_patches = patchify(audio, *AUDIO_PATCH)          # (B, Na, 256)
    v_patches = patchify(video, PATCH, PATCH)          # (B, Nv, 768)
    Na, Nv = a_patches.shape[1], v_patches.shape[1]
    S = 1 + Na + Nv
    feat = a_patches.shape[-1] + v_patches.shape[-1]   # 1024

    packed = _pack_backbone_weights(params, pos_embed, Na, Nv)
    patch_tokens = _pack_patch_tokens(a_patches, v_patches)   # (B, S, feat) bf16

    weights = [
        packed["w_patch"], packed["tok_bias"],
        packed["wqkv"], packed["bqkv"], packed["wo"], packed["bo"],
        packed["w1"], packed["b1"], packed["w2"], packed["b2"],
        packed["g1"], packed["be1"], packed["g2"], packed["be2"],
        params["ln_f_g"], params["ln_f_b"],
    ]

    def rep_spec(arr):
        nd = arr.ndim                                  # replicated across the batch grid
        return pl.BlockSpec(arr.shape, lambda b, _nd=nd: (0,) * _nd)

    kernel = functools.partial(_backbone_kernel, n_layers=N_LAYERS,
                               n_heads=N_HEADS, d_model=D_MODEL)

    tokens = pl.pallas_call(
        kernel,
        out_shape=jax.ShapeDtypeStruct((B, S, D_MODEL), jnp.float32),
        grid=(B,),                                     # one batch element per program
        in_specs=[pl.BlockSpec((1, S, feat), lambda b: (b, 0, 0))]
                 + [rep_spec(w) for w in weights],
        out_specs=pl.BlockSpec((1, S, D_MODEL), lambda b: (b, 0, 0)),
        compiler_params=pltpu.CompilerParams(
            dimension_semantics=("parallel",)),        # both v7x TensorCores get work
    )(patch_tokens, *weights)

    cls_feats = tokens[:, 0]                           # (B, D)
    audio_feats = tokens[:, 1:1 + Na]                  # (B, Na, D)
    video_feats = tokens[:, 1 + Na:]                   # (B, Nv, D)
    return cls_feats, audio_feats, video_feats


def transformer_infer(params, pos_embed, batch):
    """Mirrors Transformer.infer's output dict (mask/latent outputs not modeled)."""
    audio = batch.get("audio_data")
    video = batch.get("video_data")
    cls_feats, audio_feats, video_feats = backbone_forward(params, pos_embed, audio, video)
    return {
        "audio_feats": audio_feats,
        "video_feats": video_feats,
        "cls_feats": cls_feats,
        "video_masks": None,
        "video": video,
        "audio_masks": None,
        "audio": audio,
        "label_idx": batch.get("label_idx"),
        "latent_c_a": None, "latent_c_v": None,
        "inter_c_a": None, "inter_c_v": None,
    }


# ----------------------------------- main --------------------------------------
if __name__ == "__main__":
    key = jax.random.PRNGKey(0)
    k_param, k_pos, k_a, k_v = jax.random.split(key, 4)

    B = 2
    audio = jax.random.normal(k_a, (B, 1, 16, 112), dtype=jnp.float32)  # NCHW -> 7 patches
    video = jax.random.normal(k_v, (B, 3, 32, 64), dtype=jnp.float32)   # NCHW -> 8 patches
    seq_len = 1 + 7 + 8                                                 # cls + audio + video = 16

    params = init_params(k_param)
    pos_embed = make_pos_embed(k_pos, seq_len)

    batch = {"audio_data": audio, "video_data": video,
             "label_idx": jnp.zeros((B,), dtype=jnp.int32)}

    ret = transformer_infer(params, pos_embed, batch)
    jax.block_until_ready(ret["cls_feats"])
    jax.block_until_ready(ret["audio_feats"])
    jax.block_until_ready(ret["video_feats"])

    assert ret["cls_feats"].shape == (B, D_MODEL)
    assert ret["audio_feats"].shape == (B, 7, D_MODEL)
    assert ret["video_feats"].shape == (B, 8, D_MODEL)
    print("KERNEL_OK")
</pallas_src>

<mosaic_0001>
module attributes {stable_mosaic.version = 11 : i64} {
  func.func @_backbone_kernel(%arg0: i32, %arg1: memref<1x16x1024xbf16, #tpu.memory_space<vmem>>, %arg2: memref<1024x128xbf16, #tpu.memory_space<vmem>>, %arg3: memref<16x128xf32, #tpu.memory_space<vmem>>, %arg4: memref<2x128x384xbf16, #tpu.memory_space<vmem>>, %arg5: memref<2x1x384xf32, #tpu.memory_space<vmem>>, %arg6: memref<2x128x128xbf16, #tpu.memory_space<vmem>>, %arg7: memref<2x1x128xf32, #tpu.memory_space<vmem>>, %arg8: memref<2x128x512xbf16, #tpu.memory_space<vmem>>, %arg9: memref<2x1x512xf32, #tpu.memory_space<vmem>>, %arg10: memref<2x512x128xbf16, #tpu.memory_space<vmem>>, %arg11: memref<2x1x128xf32, #tpu.memory_space<vmem>>, %arg12: memref<2x1x128xf32, #tpu.memory_space<vmem>>, %arg13: memref<2x1x128xf32, #tpu.memory_space<vmem>>, %arg14: memref<2x1x128xf32, #tpu.memory_space<vmem>>, %arg15: memref<2x1x128xf32, #tpu.memory_space<vmem>>, %arg16: memref<1x128xf32, #tpu.memory_space<vmem>>, %arg17: memref<1x128xf32, #tpu.memory_space<vmem>>, %arg18: memref<1x16x128xf32, #tpu.memory_space<vmem>>) attributes {dimension_semantics = [#tpu.dimension_semantics<parallel>], iteration_bounds = array<i64: 2>, scalar_prefetch = 0 : i64, scratch_operands = 0 : i64, tpu.core_type = #tpu.core_type<tc>, window_params = [{transform_indices = @transform_0, window_bounds = array<i64: 1, 16, 1024>}, {pipeline_mode = #tpu.pipeline_mode<synchronous>, transform_indices = @transform_1, window_bounds = array<i64: 1024, 128>}, {pipeline_mode = #tpu.pipeline_mode<synchronous>, transform_indices = @transform_2, window_bounds = array<i64: 16, 128>}, {pipeline_mode = #tpu.pipeline_mode<synchronous>, transform_indices = @transform_3, window_bounds = array<i64: 2, 128, 384>}, {pipeline_mode = #tpu.pipeline_mode<synchronous>, transform_indices = @transform_4, window_bounds = array<i64: 2, 1, 384>}, {pipeline_mode = #tpu.pipeline_mode<synchronous>, transform_indices = @transform_5, window_bounds = array<i64: 2, 128, 128>}, {pipeline_mode = #tpu.pipeline_mode<synchronous>, transform_indices = @transform_6, window_bounds = array<i64: 2, 1, 128>}, {pipeline_mode = #tpu.pipeline_mode<synchronous>, transform_indices = @transform_7, window_bounds = array<i64: 2, 128, 512>}, {pipeline_mode = #tpu.pipeline_mode<synchronous>, transform_indices = @transform_8, window_bounds = array<i64: 2, 1, 512>}, {pipeline_mode = #tpu.pipeline_mode<synchronous>, transform_indices = @transform_9, window_bounds = array<i64: 2, 512, 128>}, {pipeline_mode = #tpu.pipeline_mode<synchronous>, transform_indices = @transform_10, window_bounds = array<i64: 2, 1, 128>}, {pipeline_mode = #tpu.pipeline_mode<synchronous>, transform_indices = @transform_11, window_bounds = array<i64: 2, 1, 128>}, {pipeline_mode = #tpu.pipeline_mode<synchronous>, transform_indices = @transform_12, window_bounds = array<i64: 2, 1, 128>}, {pipeline_mode = #tpu.pipeline_mode<synchronous>, transform_indices = @transform_13, window_bounds = array<i64: 2, 1, 128>}, {pipeline_mode = #tpu.pipeline_mode<synchronous>, transform_indices = @transform_14, window_bounds = array<i64: 2, 1, 128>}, {pipeline_mode = #tpu.pipeline_mode<synchronous>, transform_indices = @transform_15, window_bounds = array<i64: 1, 128>}, {pipeline_mode = #tpu.pipeline_mode<synchronous>, transform_indices = @transform_16, window_bounds = array<i64: 1, 128>}, {transform_indices = @transform_17, window_bounds = array<i64: 1, 16, 128>}]} {
    %c0 = arith.constant 0 : index
    %c0_0 = arith.constant 0 : index
    %c0_1 = arith.constant 0 : index
    %0 = vector.load %arg1[%c0, %c0_0, %c0_1] : memref<1x16x1024xbf16, #tpu.memory_space<vmem>>, vector<1x16x1024xbf16>
    %1 = vector.shape_cast %0 : vector<1x16x1024xbf16> to vector<16x1024xbf16>
    %c0_2 = arith.constant 0 : index
    %c0_3 = arith.constant 0 : index
    %2 = vector.load %arg2[%c0_2, %c0_3] : memref<1024x128xbf16, #tpu.memory_space<vmem>>, vector<1024x128xbf16>
    %cst = arith.constant dense<0.000000e+00> : vector<16x128xf32>
    %3 = tpu.matmul %1, %2, %cst {dimension_numbers = #tpu.dot_dimension_numbers<[1], [0], [0], [1], [0, 0, 1, 1], [], []>} : vector<16x1024xbf16>, vector<1024x128xbf16>, vector<16x128xf32> -> vector<16x128xf32>
    %c0_4 = arith.constant 0 : index
    %c0_5 = arith.constant 0 : index
    %4 = vector.load %arg3[%c0_4, %c0_5] : memref<16x128xf32, #tpu.memory_space<vmem>>, vector<16x128xf32>
    %5 = arith.addf %3, %4 : vector<16x128xf32>
    %c0_6 = arith.constant 0 : index
    %c0_7 = arith.constant 0 : index
    %c0_8 = arith.constant 0 : index
    %6 = vector.load %arg12[%c0_6, %c0_7, %c0_8] : memref<2x1x128xf32, #tpu.memory_space<vmem>>, vector<1x1x128xf32>
    %7 = vector.shape_cast %6 : vector<1x1x128xf32> to vector<1x128xf32>
    %c0_9 = arith.constant 0 : index
    %c0_10 = arith.constant 0 : index
    %c0_11 = arith.constant 0 : index
    %8 = vector.load %arg13[%c0_9, %c0_10, %c0_11] : memref<2x1x128xf32, #tpu.memory_space<vmem>>, vector<1x1x128xf32>
    %9 = vector.shape_cast %8 : vector<1x1x128xf32> to vector<1x128xf32>
    %cst_12 = arith.constant dense<0.000000e+00> : vector<16xf32>
    %10 = vector.multi_reduction <add>, %5, %cst_12 [1] : vector<16x128xf32> to vector<16xf32>
    %11 = vector.shape_cast %10 : vector<16xf32> to vector<16x1xf32>
    %cst_13 = arith.constant 1.280000e+02 : f32
    %12 = vector.broadcast %cst_13 : f32 to vector<16x1xf32>
    %13 = arith.divf %11, %12 : vector<16x1xf32>
    %14 = vector.broadcast %13 : vector<16x1xf32> to vector<16x128xf32>
    %15 = arith.subf %5, %14 : vector<16x128xf32>
    %16 = arith.mulf %15, %15 : vector<16x128xf32>
    %cst_14 = arith.constant dense<0.000000e+00> : vector<16xf32>
    %17 = vector.multi_reduction <add>, %16, %cst_14 [1] : vector<16x128xf32> to vector<16xf32>
    %18 = vector.shape_cast %17 : vector<16xf32> to vector<16x1xf32>
    %cst_15 = arith.constant 1.280000e+02 : f32
    %19 = vector.broadcast %cst_15 : f32 to vector<16x1xf32>
    %20 = arith.divf %18, %19 : vector<16x1xf32>
    %21 = vector.broadcast %13 : vector<16x1xf32> to vector<16x128xf32>
    %22 = arith.subf %5, %21 : vector<16x128xf32>
    %cst_16 = arith.constant 9.99999974E-6 : f32
    %23 = vector.broadcast %cst_16 : f32 to vector<16x1xf32>
    %24 = arith.addf %20, %23 : vector<16x1xf32>
    %25 = math.rsqrt %24 : vector<16x1xf32>
    %26 = vector.broadcast %25 : vector<16x1xf32> to vector<16x128xf32>
    %27 = arith.mulf %22, %26 : vector<16x128xf32>
    %28 = vector.broadcast %7 : vector<1x128xf32> to vector<16x128xf32>
    %29 = arith.mulf %27, %28 : vector<16x128xf32>
    %30 = vector.broadcast %9 : vector<1x128xf32> to vector<16x128xf32>
    %31 = arith.addf %29, %30 : vector<16x128xf32>
    %32 = arith.truncf %31 : vector<16x128xf32> to vector<16x128xbf16>
    %c0_17 = arith.constant 0 : index
    %c0_18 = arith.constant 0 : index
    %c0_19 = arith.constant 0 : index
    %33 = vector.load %arg4[%c0_17, %c0_18, %c0_19] : memref<2x128x384xbf16, #tpu.memory_space<vmem>>, vector<1x128x384xbf16>
    %34 = vector.shape_cast %33 : vector<1x128x384xbf16> to vector<128x384xbf16>
    %cst_20 = arith.constant dense<0.000000e+00> : vector<16x384xf32>
    %35 = tpu.matmul %32, %34, %cst_20 {dimension_numbers = #tpu.dot_dimension_numbers<[1], [0], [0], [1], [0, 0, 1, 1], [], []>} : vector<16x128xbf16>, vector<128x384xbf16>, vector<16x384xf32> -> vector<16x384xf32>
    %c0_21 = arith.constant 0 : index
    %c0_22 = arith.constant 0 : index
    %c0_23 = arith.constant 0 : index
    %36 = vector.load %arg5[%c0_21, %c0_22, %c0_23] : memref<2x1x384xf32, #tpu.memory_space<vmem>>, vector<1x1x384xf32>
    %37 = vector.shape_cast %36 : vector<1x1x384xf32> to vector<1x384xf32>
    %38 = vector.broadcast %37 : vector<1x384xf32> to vector<16x384xf32>
    %39 = arith.addf %35, %38 : vector<16x384xf32>
    %40 = arith.truncf %39 : vector<16x384xf32> to vector<16x384xbf16>
    %41 = vector.extract_strided_slice %40 {offsets = [0, 0], sizes = [16, 32], strides = [1, 1]} : vector<16x384xbf16> to vector<16x32xbf16>
    %42 = vector.extract_strided_slice %40 {offsets = [0, 128], sizes = [16, 32], strides = [1, 1]} : vector<16x384xbf16> to vector<16x32xbf16>
    %cst_24 = arith.constant dense<0.000000e+00> : vector<16x16xf32>
    %43 = tpu.matmul %41, %42, %cst_24 {dimension_numbers = #tpu.dot_dimension_numbers<[1], [1], [0], [0], [0, 0, 1, 0], [], []>} : vector<16x32xbf16>, vector<16x32xbf16>, vector<16x16xf32> -> vector<16x16xf32>
    %44 = vector.extract_strided_slice %40 {offsets = [0, 32], sizes = [16, 32], strides = [1, 1]} : vector<16x384xbf16> to vector<16x32xbf16>
    %45 = vector.extract_strided_slice %40 {offsets = [0, 160], sizes = [16, 32], strides = [1, 1]} : vector<16x384xbf16> to vector<16x32xbf16>
    %cst_25 = arith.constant dense<0.000000e+00> : vector<16x16xf32>
    %46 = tpu.matmul %44, %45, %cst_25 {dimension_numbers = #tpu.dot_dimension_numbers<[1], [1], [0], [0], [0, 0, 1, 0], [], []>} : vector<16x32xbf16>, vector<16x32xbf16>, vector<16x16xf32> -> vector<16x16xf32>
    %47 = vector.extract_strided_slice %40 {offsets = [0, 64], sizes = [16, 32], strides = [1, 1]} : vector<16x384xbf16> to vector<16x32xbf16>
    %48 = vector.extract_strided_slice %40 {offsets = [0, 192], sizes = [16, 32], strides = [1, 1]} : vector<16x384xbf16> to vector<16x32xbf16>
    %cst_26 = arith.constant dense<0.000000e+00> : vector<16x16xf32>
    %49 = tpu.matmul %47, %48, %cst_26 {dimension_numbers = #tpu.dot_dimension_numbers<[1], [1], [0], [0], [0, 0, 1, 0], [], []>} : vector<16x32xbf16>, vector<16x32xbf16>, vector<16x16xf32> -> vector<16x16xf32>
    %50 = vector.extract_strided_slice %40 {offsets = [0, 96], sizes = [16, 32], strides = [1, 1]} : vector<16x384xbf16> to vector<16x32xbf16>
    %51 = vector.extract_strided_slice %40 {offsets = [0, 224], sizes = [16, 32], strides = [1, 1]} : vector<16x384xbf16> to vector<16x32xbf16>
    %cst_27 = arith.constant dense<0.000000e+00> : vector<16x16xf32>
    %52 = tpu.matmul %50, %51, %cst_27 {dimension_numbers = #tpu.dot_dimension_numbers<[1], [1], [0], [0], [0, 0, 1, 0], [], []>} : vector<16x32xbf16>, vector<16x32xbf16>, vector<16x16xf32> -> vector<16x16xf32>
    %53 = tpu.concatenate %43, %46, %49, %52 in 0 : vector<16x16xf32>, vector<16x16xf32>, vector<16x16xf32>, vector<16x16xf32> -> vector<64x16xf32>
    %cst_28 = arith.constant dense<0xFF800000> : vector<64xf32>
    %54 = vector.multi_reduction <maximumf>, %53, %cst_28 [1] : vector<64x16xf32> to vector<64xf32>
    %55 = vector.shape_cast %54 : vector<64xf32> to vector<64x1xf32>
    %56 = vector.broadcast %55 : vector<64x1xf32> to vector<64x16xf32>
    %57 = arith.subf %53, %56 : vector<64x16xf32>
    %58 = math.exp %57 : vector<64x16xf32>
    %cst_29 = arith.constant dense<0.000000e+00> : vector<64xf32>
    %59 = vector.multi_reduction <add>, %58, %cst_29 [1] : vector<64x16xf32> to vector<64xf32>
    %60 = vector.shape_cast %59 : vector<64xf32> to vector<64x1xf32>
    %61 = vector.broadcast %60 : vector<64x1xf32> to vector<64x16xf32>
    %62 = arith.divf %58, %61 : vector<64x16xf32>
    %63 = arith.truncf %62 : vector<64x16xf32> to vector<64x16xbf16>
    %64 = vector.extract_strided_slice %40 {offsets = [0, 256], sizes = [16, 32], strides = [1, 1]} : vector<16x384xbf16> to vector<16x32xbf16>
    %65 = vector.extract_strided_slice %63 {offsets = [0, 0], sizes = [16, 16], strides = [1, 1]} : vector<64x16xbf16> to vector<16x16xbf16>
    %cst_30 = arith.constant dense<0.000000e+00> : vector<16x32xf32>
    %66 = tpu.matmul %65, %64, %cst_30 {dimension_numbers = #tpu.dot_dimension_numbers<[1], [0], [0], [1], [0, 0, 1, 1], [], []>} : vector<16x16xbf16>, vector<16x32xbf16>, vector<16x32xf32> -> vector<16x32xf32>
    %67 = vector.extract_strided_slice %40 {offsets = [0, 288], sizes = [16, 32], strides = [1, 1]} : vector<16x384xbf16> to vector<16x32xbf16>
    %68 = vector.extract_strided_slice %63 {offsets = [16, 0], sizes = [16, 16], strides = [1, 1]} : vector<64x16xbf16> to vector<16x16xbf16>
    %cst_31 = arith.constant dense<0.000000e+00> : vector<16x32xf32>
    %69 = tpu.matmul %68, %67, %cst_31 {dimension_numbers = #tpu.dot_dimension_numbers<[1], [0], [0], [1], [0, 0, 1, 1], [], []>} : vector<16x16xbf16>, vector<16x32xbf16>, vector<16x32xf32> -> vector<16x32xf32>
    %70 = vector.extract_strided_slice %40 {offsets = [0, 320], sizes = [16, 32], strides = [1, 1]} : vector<16x384xbf16> to vector<16x32xbf16>
    %71 = vector.extract_strided_slice %63 {offsets = [32, 0], sizes = [16, 16], strides = [1, 1]} : vector<64x16xbf16> to vector<16x16xbf16>
    %cst_32 = arith.constant dense<0.000000e+00> : vector<16x32xf32>
    %72 = tpu.matmul %71, %70, %cst_32 {dimension_numbers = #tpu.dot_dimension_numbers<[1], [0], [0], [1], [0, 0, 1, 1], [], []>} : vector<16x16xbf16>, vector<16x32xbf16>, vector<16x32xf32> -> vector<16x32xf32>
    %73 = vector.extract_strided_slice %40 {offsets = [0, 352], sizes = [16, 32], strides = [1, 1]} : vector<16x384xbf16> to vector<16x32xbf16>
    %74 = vector.extract_strided_slice %63 {offsets = [48, 0], sizes = [16, 16], strides = [1, 1]} : vector<64x16xbf16> to vector<16x16xbf16>
    %cst_33 = arith.constant dense<0.000000e+00> : vector<16x32xf32>
    %75 = tpu.matmul %74, %73, %cst_33 {dimension_numbers = #tpu.dot_dimension_numbers<[1], [0], [0], [1], [0, 0, 1, 1], [], []>} : vector<16x16xbf16>, vector<16x32xbf16>, vector<16x32xf32> -> vector<16x32xf32>
    %76 = tpu.concatenate %66, %69, %72, %75 in 1 : vector<16x32xf32>, vector<16x32xf32>, vector<16x32xf32>, vector<16x32xf32> -> vector<16x128xf32>
    %77 = arith.truncf %76 : vector<16x128xf32> to vector<16x128xbf16>
    %c0_34 = arith.constant 0 : index
    %c0_35 = arith.constant 0 : index
    %c0_36 = arith.constant 0 : index
    %78 = vector.load %arg6[%c0_34, %c0_35, %c0_36] : memref<2x128x128xbf16, #tpu.memory_space<vmem>>, vector<1x128x128xbf16>
    %79 = vector.shape_cast %78 : vector<1x128x128xbf16> to vector<128x128xbf16>
    %cst_37 = arith.constant dense<0.000000e+00> : vector<16x128xf32>
    %80 = tpu.matmul %77, %79, %cst_37 {dimension_numbers = #tpu.dot_dimension_numbers<[1], [0], [0], [1], [0, 0, 1, 1], [], []>} : vector<16x128xbf16>, vector<128x128xbf16>, vector<16x128xf32> -> vector<16x128xf32>
    %81 = arith.addf %5, %80 : vector<16x128xf32>
    %c0_38 = arith.constant 0 : index
    %c0_39 = arith.constant 0 : index
    %c0_40 = arith.constant 0 : index
    %82 = vector.load %arg7[%c0_38, %c0_39, %c0_40] : memref<2x1x128xf32, #tpu.memory_space<vmem>>, vector<1x1x128xf32>
    %83 = vector.shape_cast %82 : vector<1x1x128xf32> to vector<1x128xf32>
    %84 = vector.broadcast %83 : vector<1x128xf32> to vector<16x128xf32>
    %85 = arith.addf %81, %84 : vector<16x128xf32>
    %c0_41 = arith.constant 0 : index
    %c0_42 = arith.constant 0 : index
    %c0_43 = arith.constant 0 : index
    %86 = vector.load %arg14[%c0_41, %c0_42, %c0_43] : memref<2x1x128xf32, #tpu.memory_space<vmem>>, vector<1x1x128xf32>
    %87 = vector.shape_cast %86 : vector<1x1x128xf32> to vector<1x128xf32>
    %c0_44 = arith.constant 0 : index
    %c0_45 = arith.constant 0 : index
    %c0_46 = arith.constant 0 : index
    %88 = vector.load %arg15[%c0_44, %c0_45, %c0_46] : memref<2x1x128xf32, #tpu.memory_space<vmem>>, vector<1x1x128xf32>
    %89 = vector.shape_cast %88 : vector<1x1x128xf32> to vector<1x128xf32>
    %cst_47 = arith.constant dense<0.000000e+00> : vector<16xf32>
    %90 = vector.multi_reduction <add>, %85, %cst_47 [1] : vector<16x128xf32> to vector<16xf32>
    %91 = vector.shape_cast %90 : vector<16xf32> to vector<16x1xf32>
    %cst_48 = arith.constant 1.280000e+02 : f32
    %92 = vector.broadcast %cst_48 : f32 to vector<16x1xf32>
    %93 = arith.divf %91, %92 : vector<16x1xf32>
    %94 = vector.broadcast %93 : vector<16x1xf32> to vector<16x128xf32>
    %95 = arith.subf %85, %94 : vector<16x128xf32>
    %96 = arith.mulf %95, %95 : vector<16x128xf32>
    %cst_49 = arith.constant dense<0.000000e+00> : vector<16xf32>
    %97 = vector.multi_reduction <add>, %96, %cst_49 [1] : vector<16x128xf32> to vector<16xf32>
    %98 = vector.shape_cast %97 : vector<16xf32> to vector<16x1xf32>
    %cst_50 = arith.constant 1.280000e+02 : f32
    %99 = vector.broadcast %cst_50 : f32 to vector<16x1xf32>
    %100 = arith.divf %98, %99 : vector<16x1xf32>
    %101 = vector.broadcast %93 : vector<16x1xf32> to vector<16x128xf32>
    %102 = arith.subf %85, %101 : vector<16x128xf32>
    %cst_51 = arith.constant 9.99999974E-6 : f32
    %103 = vector.broadcast %cst_51 : f32 to vector<16x1xf32>
    %104 = arith.addf %100, %103 : vector<16x1xf32>
    %105 = math.rsqrt %104 : vector<16x1xf32>
    %106 = vector.broadcast %105 : vector<16x1xf32> to vector<16x128xf32>
    %107 = arith.mulf %102, %106 : vector<16x128xf32>
    %108 = vector.broadcast %87 : vector<1x128xf32> to vector<16x128xf32>
    %109 = arith.mulf %107, %108 : vector<16x128xf32>
    %110 = vector.broadcast %89 : vector<1x128xf32> to vector<16x128xf32>
    %111 = arith.addf %109, %110 : vector<16x128xf32>
    %112 = arith.truncf %111 : vector<16x128xf32> to vector<16x128xbf16>
    %c0_52 = arith.constant 0 : index
    %c0_53 = arith.constant 0 : index
    %c0_54 = arith.constant 0 : index
    %113 = vector.load %arg8[%c0_52, %c0_53, %c0_54] : memref<2x128x512xbf16, #tpu.memory_space<vmem>>, vector<1x128x512xbf16>
    %114 = vector.shape_cast %113 : vector<1x128x512xbf16> to vector<128x512xbf16>
    %cst_55 = arith.constant dense<0.000000e+00> : vector<16x512xf32>
    %115 = tpu.matmul %112, %114, %cst_55 {dimension_numbers = #tpu.dot_dimension_numbers<[1], [0], [0], [1], [0, 0, 1, 1], [], []>} : vector<16x128xbf16>, vector<128x512xbf16>, vector<16x512xf32> -> vector<16x512xf32>
    %c0_56 = arith.constant 0 : index
    %c0_57 = arith.constant 0 : index
    %c0_58 = arith.constant 0 : index
    %116 = vector.load %arg9[%c0_56, %c0_57, %c0_58] : memref<2x1x512xf32, #tpu.memory_space<vmem>>, vector<1x1x512xf32>
    %117 = vector.shape_cast %116 : vector<1x1x512xf32> to vector<1x512xf32>
    %118 = vector.broadcast %117 : vector<1x512xf32> to vector<16x512xf32>
    %119 = arith.addf %115, %118 : vector<16x512xf32>
    %cst_59 = arith.constant 5.000000e-01 : f32
    %120 = vector.broadcast %cst_59 : f32 to vector<16x512xf32>
    %121 = arith.mulf %120, %119 : vector<16x512xf32>
    %cst_60 = arith.constant 0.707106769 : f32
    %122 = vector.broadcast %cst_60 : f32 to vector<16x512xf32>
    %123 = arith.mulf %119, %122 : vector<16x512xf32>
    %124 = math.absf %123 : vector<16x512xf32>
    %cst_61 = arith.constant 0.327591091 : f32
    %125 = vector.broadcast %cst_61 : f32 to vector<16x512xf32>
    %126 = arith.mulf %125, %124 : vector<16x512xf32>
    %cst_62 = arith.constant 1.000000e+00 : f32
    %127 = vector.broadcast %cst_62 : f32 to vector<16x512xf32>
    %128 = arith.addf %127, %126 : vector<16x512xf32>
    %cst_63 = arith.constant 1.000000e+00 : f32
    %129 = vector.broadcast %cst_63 : f32 to vector<16x512xf32>
    %130 = arith.divf %129, %128 : vector<16x512xf32>
    %cst_64 = arith.constant 1.06140542 : f32
    %131 = vector.broadcast %cst_64 : f32 to vector<16x512xf32>
    %132 = arith.mulf %131, %130 : vector<16x512xf32>
    %cst_65 = arith.constant -1.45315206 : f32
    %133 = vector.broadcast %cst_65 : f32 to vector<16x512xf32>
    %134 = arith.addf %132, %133 : vector<16x512xf32>
    %135 = arith.mulf %134, %130 : vector<16x512xf32>
    %cst_66 = arith.constant 1.42141378 : f32
    %136 = vector.broadcast %cst_66 : f32 to vector<16x512xf32>
    %137 = arith.addf %135, %136 : vector<16x512xf32>
    %138 = arith.mulf %137, %130 : vector<16x512xf32>
    %cst_67 = arith.constant -0.284496725 : f32
    %139 = vector.broadcast %cst_67 : f32 to vector<16x512xf32>
    %140 = arith.addf %138, %139 : vector<16x512xf32>
    %141 = arith.mulf %140, %130 : vector<16x512xf32>
    %cst_68 = arith.constant 0.254829586 : f32
    %142 = vector.broadcast %cst_68 : f32 to vector<16x512xf32>
    %143 = arith.addf %141, %142 : vector<16x512xf32>
    %144 = arith.mulf %143, %130 : vector<16x512xf32>
    %cst_69 = arith.constant 0.000000e+00 : f32
    %145 = vector.broadcast %cst_69 : f32 to vector<16x512xf32>
    %146 = arith.subf %145, %124 : vector<16x512xf32>
    %147 = arith.mulf %146, %124 : vector<16x512xf32>
    %148 = math.exp %147 : vector<16x512xf32>
    %149 = arith.mulf %144, %148 : vector<16x512xf32>
    %cst_70 = arith.constant 1.000000e+00 : f32
    %150 = vector.broadcast %cst_70 : f32 to vector<16x512xf32>
    %151 = arith.subf %150, %149 : vector<16x512xf32>
    %cst_71 = arith.constant 0.000000e+00 : f32
    %152 = vector.broadcast %cst_71 : f32 to vector<16x512xf32>
    %153 = arith.cmpf olt, %123, %152 : vector<16x512xf32>
    %cst_72 = arith.constant 0.000000e+00 : f32
    %154 = vector.broadcast %cst_72 : f32 to vector<16x512xf32>
    %155 = arith.subf %154, %151 : vector<16x512xf32>
    %156 = arith.select %153, %155, %151 : vector<16x512xi1>, vector<16x512xf32>
    %cst_73 = arith.constant 1.000000e+00 : f32
    %157 = vector.broadcast %cst_73 : f32 to vector<16x512xf32>
    %158 = arith.addf %157, %156 : vector<16x512xf32>
    %159 = arith.mulf %121, %158 : vector<16x512xf32>
    %160 = arith.truncf %159 : vector<16x512xf32> to vector<16x512xbf16>
    %c0_74 = arith.constant 0 : index
    %c0_75 = arith.constant 0 : index
    %c0_76 = arith.constant 0 : index
    %161 = vector.load %arg10[%c0_74, %c0_75, %c0_76] : memref<2x512x128xbf16, #tpu.memory_space<vmem>>, vector<1x512x128xbf16>
    %162 = vector.shape_cast %161 : vector<1x512x128xbf16> to vector<512x128xbf16>
    %cst_77 = arith.constant dense<0.000000e+00> : vector<16x128xf32>
    %163 = tpu.matmul %160, %162, %cst_77 {dimension_numbers = #tpu.dot_dimension_numbers<[1], [0], [0], [1], [0, 0, 1, 1], [], []>} : vector<16x512xbf16>, vector<512x128xbf16>, vector<16x128xf32> -> vector<16x128xf32>
    %164 = arith.addf %85, %163 : vector<16x128xf32>
    %c0_78 = arith.constant 0 : index
    %c0_79 = arith.constant 0 : index
    %c0_80 = arith.constant 0 : index
    %165 = vector.load %arg11[%c0_78, %c0_79, %c0_80] : memref<2x1x128xf32, #tpu.memory_space<vmem>>, vector<1x1x128xf32>
    %166 = vector.shape_cast %165 : vector<1x1x128xf32> to vector<1x128xf32>
    %167 = vector.broadcast %166 : vector<1x128xf32> to vector<16x128xf32>
    %168 = arith.addf %164, %167 : vector<16x128xf32>
    %c1 = arith.constant 1 : index
    %c0_81 = arith.constant 0 : index
    %c0_82 = arith.constant 0 : index
    %169 = vector.load %arg12[%c1, %c0_81, %c0_82] : memref<2x1x128xf32, #tpu.memory_space<vmem>>, vector<1x1x128xf32>
    %170 = vector.shape_cast %169 : vector<1x1x128xf32> to vector<1x128xf32>
    %c1_83 = arith.constant 1 : index
    %c0_84 = arith.constant 0 : index
    %c0_85 = arith.constant 0 : index
    %171 = vector.load %arg13[%c1_83, %c0_84, %c0_85] : memref<2x1x128xf32, #tpu.memory_space<vmem>>, vector<1x1x128xf32>
    %172 = vector.shape_cast %171 : vector<1x1x128xf32> to vector<1x128xf32>
    %cst_86 = arith.constant dense<0.000000e+00> : vector<16xf32>
    %173 = vector.multi_reduction <add>, %168, %cst_86 [1] : vector<16x128xf32> to vector<16xf32>
    %174 = vector.shape_cast %173 : vector<16xf32> to vector<16x1xf32>
    %cst_87 = arith.constant 1.280000e+02 : f32
    %175 = vector.broadcast %cst_87 : f32 to vector<16x1xf32>
    %176 = arith.divf %174, %175 : vector<16x1xf32>
    %177 = vector.broadcast %176 : vector<16x1xf32> to vector<16x128xf32>
    %178 = arith.subf %168, %177 : vector<16x128xf32>
    %179 = arith.mulf %178, %178 : vector<16x128xf32>
    %cst_88 = arith.constant dense<0.000000e+00> : vector<16xf32>
    %180 = vector.multi_reduction <add>, %179, %cst_88 [1] : vector<16x128xf32> to vector<16xf32>
    %181 = vector.shape_cast %180 : vector<16xf32> to vector<16x1xf32>
    %cst_89 = arith.constant 1.280000e+02 : f32
    %182 = vector.broadcast %cst_89 : f32 to vector<16x1xf32>
    %183 = arith.divf %181, %182 : vector<16x1xf32>
    %184 = vector.broadcast %176 : vector<16x1xf32> to vector<16x128xf32>
    %185 = arith.subf %168, %184 : vector<16x128xf32>
    %cst_90 = arith.constant 9.99999974E-6 : f32
    %186 = vector.broadcast %cst_90 : f32 to vector<16x1xf32>
    %187 = arith.addf %183, %186 : vector<16x1xf32>
    %188 = math.rsqrt %187 : vector<16x1xf32>
    %189 = vector.broadcast %188 : vector<16x1xf32> to vector<16x128xf32>
    %190 = arith.mulf %185, %189 : vector<16x128xf32>
    %191 = vector.broadcast %170 : vector<1x128xf32> to vector<16x128xf32>
    %192 = arith.mulf %190, %191 : vector<16x128xf32>
    %193 = vector.broadcast %172 : vector<1x128xf32> to vector<16x128xf32>
    %194 = arith.addf %192, %193 : vector<16x128xf32>
    %195 = arith.truncf %194 : vector<16x128xf32> to vector<16x128xbf16>
    %c1_91 = arith.constant 1 : index
    %c0_92 = arith.constant 0 : index
    %c0_93 = arith.constant 0 : index
    %196 = vector.load %arg4[%c1_91, %c0_92, %c0_93] : memref<2x128x384xbf16, #tpu.memory_space<vmem>>, vector<1x128x384xbf16>
    %197 = vector.shape_cast %196 : vector<1x128x384xbf16> to vector<128x384xbf16>
    %cst_94 = arith.constant dense<0.000000e+00> : vector<16x384xf32>
    %198 = tpu.matmul %195, %197, %cst_94 {dimension_numbers = #tpu.dot_dimension_numbers<[1], [0], [0], [1], [0, 0, 1, 1], [], []>} : vector<16x128xbf16>, vector<128x384xbf16>, vector<16x384xf32> -> vector<16x384xf32>
    %c1_95 = arith.constant 1 : index
    %c0_96 = arith.constant 0 : index
    %c0_97 = arith.constant 0 : index
    %199 = vector.load %arg5[%c1_95, %c0_96, %c0_97] : memref<2x1x384xf32, #tpu.memory_space<vmem>>, vector<1x1x384xf32>
    %200 = vector.shape_cast %199 : vector<1x1x384xf32> to vector<1x384xf32>
    %201 = vector.broadcast %200 : vector<1x384xf32> to vector<16x384xf32>
    %202 = arith.addf %198, %201 : vector<16x384xf32>
    %203 = arith.truncf %202 : vector<16x384xf32> to vector<16x384xbf16>
    %204 = vector.extract_strided_slice %203 {offsets = [0, 0], sizes = [16, 32], strides = [1, 1]} : vector<16x384xbf16> to vector<16x32xbf16>
    %205 = vector.extract_strided_slice %203 {offsets = [0, 128], sizes = [16, 32], strides = [1, 1]} : vector<16x384xbf16> to vector<16x32xbf16>
    %cst_98 = arith.constant dense<0.000000e+00> : vector<16x16xf32>
    %206 = tpu.matmul %204, %205, %cst_98 {dimension_numbers = #tpu.dot_dimension_numbers<[1], [1], [0], [0], [0, 0, 1, 0], [], []>} : vector<16x32xbf16>, vector<16x32xbf16>, vector<16x16xf32> -> vector<16x16xf32>
    %207 = vector.extract_strided_slice %203 {offsets = [0, 32], sizes = [16, 32], strides = [1, 1]} : vector<16x384xbf16> to vector<16x32xbf16>
    %208 = vector.extract_strided_slice %203 {offsets = [0, 160], sizes = [16, 32], strides = [1, 1]} : vector<16x384xbf16> to vector<16x32xbf16>
    %cst_99 = arith.constant dense<0.000000e+00> : vector<16x16xf32>
    %209 = tpu.matmul %207, %208, %cst_99 {dimension_numbers = #tpu.dot_dimension_numbers<[1], [1], [0], [0], [0, 0, 1, 0], [], []>} : vector<16x32xbf16>, vector<16x32xbf16>, vector<16x16xf32> -> vector<16x16xf32>
    %210 = vector.extract_strided_slice %203 {offsets = [0, 64], sizes = [16, 32], strides = [1, 1]} : vector<16x384xbf16> to vector<16x32xbf16>
    %211 = vector.extract_strided_slice %203 {offsets = [0, 192], sizes = [16, 32], strides = [1, 1]} : vector<16x384xbf16> to vector<16x32xbf16>
    %cst_100 = arith.constant dense<0.000000e+00> : vector<16x16xf32>
    %212 = tpu.matmul %210, %211, %cst_100 {dimension_numbers = #tpu.dot_dimension_numbers<[1], [1], [0], [0], [0, 0, 1, 0], [], []>} : vector<16x32xbf16>, vector<16x32xbf16>, vector<16x16xf32> -> vector<16x16xf32>
    %213 = vector.extract_strided_slice %203 {offsets = [0, 96], sizes = [16, 32], strides = [1, 1]} : vector<16x384xbf16> to vector<16x32xbf16>
    %214 = vector.extract_strided_slice %203 {offsets = [0, 224], sizes = [16, 32], strides = [1, 1]} : vector<16x384xbf16> to vector<16x32xbf16>
    %cst_101 = arith.constant dense<0.000000e+00> : vector<16x16xf32>
    %215 = tpu.matmul %213, %214, %cst_101 {dimension_numbers = #tpu.dot_dimension_numbers<[1], [1], [0], [0], [0, 0, 1, 0], [], []>} : vector<16x32xbf16>, vector<16x32xbf16>, vector<16x16xf32> -> vector<16x16xf32>
    %216 = tpu.concatenate %206, %209, %212, %215 in 0 : vector<16x16xf32>, vector<16x16xf32>, vector<16x16xf32>, vector<16x16xf32> -> vector<64x16xf32>
    %cst_102 = arith.constant dense<0xFF800000> : vector<64xf32>
    %217 = vector.multi_reduction <maximumf>, %216, %cst_102 [1] : vector<64x16xf32> to vector<64xf32>
    %218 = vector.shape_cast %217 : vector<64xf32> to vector<64x1xf32>
    %219 = vector.broadcast %218 : vector<64x1xf32> to vector<64x16xf32>
    %220 = arith.subf %216, %219 : vector<64x16xf32>
    %221 = math.exp %220 : vector<64x16xf32>
    %cst_103 = arith.constant dense<0.000000e+00> : vector<64xf32>
    %222 = vector.multi_reduction <add>, %221, %cst_103 [1] : vector<64x16xf32> to vector<64xf32>
    %223 = vector.shape_cast %222 : vector<64xf32> to vector<64x1xf32>
    %224 = vector.broadcast %223 : vector<64x1xf32> to vector<64x16xf32>
    %225 = arith.divf %221, %224 : vector<64x16xf32>
    %226 = arith.truncf %225 : vector<64x16xf32> to vector<64x16xbf16>
    %227 = vector.extract_strided_slice %203 {offsets = [0, 256], sizes = [16, 32], strides = [1, 1]} : vector<16x384xbf16> to vector<16x32xbf16>
    %228 = vector.extract_strided_slice %226 {offsets = [0, 0], sizes = [16, 16], strides = [1, 1]} : vector<64x16xbf16> to vector<16x16xbf16>
    %cst_104 = arith.constant dense<0.000000e+00> : vector<16x32xf32>
    %229 = tpu.matmul %228, %227, %cst_104 {dimension_numbers = #tpu.dot_dimension_numbers<[1], [0], [0], [1], [0, 0, 1, 1], [], []>} : vector<16x16xbf16>, vector<16x32xbf16>, vector<16x32xf32> -> vector<16x32xf32>
    %230 = vector.extract_strided_slice %203 {offsets = [0, 288], sizes = [16, 32], strides = [1, 1]} : vector<16x384xbf16> to vector<16x32xbf16>
    %231 = vector.extract_strided_slice %226 {offsets = [16, 0], sizes = [16, 16], strides = [1, 1]} : vector<64x16xbf16> to vector<16x16xbf16>
    %cst_105 = arith.constant dense<0.000000e+00> : vector<16x32xf32>
    %232 = tpu.matmul %231, %230, %cst_105 {dimension_numbers = #tpu.dot_dimension_numbers<[1], [0], [0], [1], [0, 0, 1, 1], [], []>} : vector<16x16xbf16>, vector<16x32xbf16>, vector<16x32xf32> -> vector<16x32xf32>
    %233 = vector.extract_strided_slice %203 {offsets = [0, 320], sizes = [16, 32], strides = [1, 1]} : vector<16x384xbf16> to vector<16x32xbf16>
    %234 = vector.extract_strided_slice %226 {offsets = [32, 0], sizes = [16, 16], strides = [1, 1]} : vector<64x16xbf16> to vector<16x16xbf16>
    %cst_106 = arith.constant dense<0.000000e+00> : vector<16x32xf32>
    %235 = tpu.matmul %234, %233, %cst_106 {dimension_numbers = #tpu.dot_dimension_numbers<[1], [0], [0], [1], [0, 0, 1, 1], [], []>} : vector<16x16xbf16>, vector<16x32xbf16>, vector<16x32xf32> -> vector<16x32xf32>
    %236 = vector.extract_strided_slice %203 {offsets = [0, 352], sizes = [16, 32], strides = [1, 1]} : vector<16x384xbf16> to vector<16x32xbf16>
    %237 = vector.extract_strided_slice %226 {offsets = [48, 0], sizes = [16, 16], strides = [1, 1]} : vector<64x16xbf16> to vector<16x16xbf16>
    %cst_107 = arith.constant dense<0.000000e+00> : vector<16x32xf32>
    %238 = tpu.matmul %237, %236, %cst_107 {dimension_numbers = #tpu.dot_dimension_numbers<[1], [0], [0], [1], [0, 0, 1, 1], [], []>} : vector<16x16xbf16>, vector<16x32xbf16>, vector<16x32xf32> -> vector<16x32xf32>
    %239 = tpu.concatenate %229, %232, %235, %238 in 1 : vector<16x32xf32>, vector<16x32xf32>, vector<16x32xf32>, vector<16x32xf32> -> vector<16x128xf32>
    %240 = arith.truncf %239 : vector<16x128xf32> to vector<16x128xbf16>
    %c1_108 = arith.constant 1 : index
    %c0_109 = arith.constant 0 : index
    %c0_110 = arith.constant 0 : index
    %241 = vector.load %arg6[%c1_108, %c0_109, %c0_110] : memref<2x128x128xbf16, #tpu.memory_space<vmem>>, vector<1x128x128xbf16>
    %242 = vector.shape_cast %241 : vector<1x128x128xbf16> to vector<128x128xbf16>
    %cst_111 = arith.constant dense<0.000000e+00> : vector<16x128xf32>
    %243 = tpu.matmul %240, %242, %cst_111 {dimension_numbers = #tpu.dot_dimension_numbers<[1], [0], [0], [1], [0, 0, 1, 1], [], []>} : vector<16x128xbf16>, vector<128x128xbf16>, vector<16x128xf32> -> vector<16x128xf32>
    %244 = arith.addf %168, %243 : vector<16x128xf32>
    %c1_112 = arith.constant 1 : index
    %c0_113 = arith.constant 0 : index
    %c0_114 = arith.constant 0 : index
    %245 = vector.load %arg7[%c1_112, %c0_113, %c0_114] : memref<2x1x128xf32, #tpu.memory_space<vmem>>, vector<1x1x128xf32>
    %246 = vector.shape_cast %245 : vector<1x1x128xf32> to vector<1x128xf32>
    %247 = vector.broadcast %246 : vector<1x128xf32> to vector<16x128xf32>
    %248 = arith.addf %244, %247 : vector<16x128xf32>
    %c1_115 = arith.constant 1 : index
    %c0_116 = arith.constant 0 : index
    %c0_117 = arith.constant 0 : index
    %249 = vector.load %arg14[%c1_115, %c0_116, %c0_117] : memref<2x1x128xf32, #tpu.memory_space<vmem>>, vector<1x1x128xf32>
    %250 = vector.shape_cast %249 : vector<1x1x128xf32> to vector<1x128xf32>
    %c1_118 = arith.constant 1 : index
    %c0_119 = arith.constant 0 : index
    %c0_120 = arith.constant 0 : index
    %251 = vector.load %arg15[%c1_118, %c0_119, %c0_120] : memref<2x1x128xf32, #tpu.memory_space<vmem>>, vector<1x1x128xf32>
    %252 = vector.shape_cast %251 : vector<1x1x128xf32> to vector<1x128xf32>
    %cst_121 = arith.constant dense<0.000000e+00> : vector<16xf32>
    %253 = vector.multi_reduction <add>, %248, %cst_121 [1] : vector<16x128xf32> to vector<16xf32>
    %254 = vector.shape_cast %253 : vector<16xf32> to vector<16x1xf32>
    %cst_122 = arith.constant 1.280000e+02 : f32
    %255 = vector.broadcast %cst_122 : f32 to vector<16x1xf32>
    %256 = arith.divf %254, %255 : vector<16x1xf32>
    %257 = vector.broadcast %256 : vector<16x1xf32> to vector<16x128xf32>
    %258 = arith.subf %248, %257 : vector<16x128xf32>
    %259 = arith.mulf %258, %258 : vector<16x128xf32>
    %cst_123 = arith.constant dense<0.000000e+00> : vector<16xf32>
    %260 = vector.multi_reduction <add>, %259, %cst_123 [1] : vector<16x128xf32> to vector<16xf32>
    %261 = vector.shape_cast %260 : vector<16xf32> to vector<16x1xf32>
    %cst_124 = arith.constant 1.280000e+02 : f32
    %262 = vector.broadcast %cst_124 : f32 to vector<16x1xf32>
    %263 = arith.divf %261, %262 : vector<16x1xf32>
    %264 = vector.broadcast %256 : vector<16x1xf32> to vector<16x128xf32>
    %265 = arith.subf %248, %264 : vector<16x128xf32>
    %cst_125 = arith.constant 9.99999974E-6 : f32
    %266 = vector.broadcast %cst_125 : f32 to vector<16x1xf32>
    %267 = arith.addf %263, %266 : vector<16x1xf32>
    %268 = math.rsqrt %267 : vector<16x1xf32>
    %269 = vector.broadcast %268 : vector<16x1xf32> to vector<16x128xf32>
    %270 = arith.mulf %265, %269 : vector<16x128xf32>
    %271 = vector.broadcast %250 : vector<1x128xf32> to vector<16x128xf32>
    %272 = arith.mulf %270, %271 : vector<16x128xf32>
    %273 = vector.broadcast %252 : vector<1x128xf32> to vector<16x128xf32>
    %274 = arith.addf %272, %273 : vector<16x128xf32>
    %275 = arith.truncf %274 : vector<16x128xf32> to vector<16x128xbf16>
    %c1_126 = arith.constant 1 : index
    %c0_127 = arith.constant 0 : index
    %c0_128 = arith.constant 0 : index
    %276 = vector.load %arg8[%c1_126, %c0_127, %c0_128] : memref<2x128x512xbf16, #tpu.memory_space<vmem>>, vector<1x128x512xbf16>
    %277 = vector.shape_cast %276 : vector<1x128x512xbf16> to vector<128x512xbf16>
    %cst_129 = arith.constant dense<0.000000e+00> : vector<16x512xf32>
    %278 = tpu.matmul %275, %277, %cst_129 {dimension_numbers = #tpu.dot_dimension_numbers<[1], [0], [0], [1], [0, 0, 1, 1], [], []>} : vector<16x128xbf16>, vector<128x512xbf16>, vector<16x512xf32> -> vector<16x512xf32>
    %c1_130 = arith.constant 1 : index
    %c0_131 = arith.constant 0 : index
    %c0_132 = arith.constant 0 : index
    %279 = vector.load %arg9[%c1_130, %c0_131, %c0_132] : memref<2x1x512xf32, #tpu.memory_space<vmem>>, vector<1x1x512xf32>
    %280 = vector.shape_cast %279 : vector<1x1x512xf32> to vector<1x512xf32>
    %281 = vector.broadcast %280 : vector<1x512xf32> to vector<16x512xf32>
    %282 = arith.addf %278, %281 : vector<16x512xf32>
    %cst_133 = arith.constant 5.000000e-01 : f32
    %283 = vector.broadcast %cst_133 : f32 to vector<16x512xf32>
    %284 = arith.mulf %283, %282 : vector<16x512xf32>
    %cst_134 = arith.constant 0.707106769 : f32
    %285 = vector.broadcast %cst_134 : f32 to vector<16x512xf32>
    %286 = arith.mulf %282, %285 : vector<16x512xf32>
    %287 = math.absf %286 : vector<16x512xf32>
    %cst_135 = arith.constant 0.327591091 : f32
    %288 = vector.broadcast %cst_135 : f32 to vector<16x512xf32>
    %289 = arith.mulf %288, %287 : vector<16x512xf32>
    %cst_136 = arith.constant 1.000000e+00 : f32
    %290 = vector.broadcast %cst_136 : f32 to vector<16x512xf32>
    %291 = arith.addf %290, %289 : vector<16x512xf32>
    %cst_137 = arith.constant 1.000000e+00 : f32
    %292 = vector.broadcast %cst_137 : f32 to vector<16x512xf32>
    %293 = arith.divf %292, %291 : vector<16x512xf32>
    %cst_138 = arith.constant 1.06140542 : f32
    %294 = vector.broadcast %cst_138 : f32 to vector<16x512xf32>
    %295 = arith.mulf %294, %293 : vector<16x512xf32>
    %cst_139 = arith.constant -1.45315206 : f32
    %296 = vector.broadcast %cst_139 : f32 to vector<16x512xf32>
    %297 = arith.addf %295, %296 : vector<16x512xf32>
    %298 = arith.mulf %297, %293 : vector<16x512xf32>
    %cst_140 = arith.constant 1.42141378 : f32
    %299 = vector.broadcast %cst_140 : f32 to vector<16x512xf32>
    %300 = arith.addf %298, %299 : vector<16x512xf32>
    %301 = arith.mulf %300, %293 : vector<16x512xf32>
    %cst_141 = arith.constant -0.284496725 : f32
    %302 = vector.broadcast %cst_141 : f32 to vector<16x512xf32>
    %303 = arith.addf %301, %302 : vector<16x512xf32>
    %304 = arith.mulf %303, %293 : vector<16x512xf32>
    %cst_142 = arith.constant 0.254829586 : f32
    %305 = vector.broadcast %cst_142 : f32 to vector<16x512xf32>
    %306 = arith.addf %304, %305 : vector<16x512xf32>
    %307 = arith.mulf %306, %293 : vector<16x512xf32>
    %cst_143 = arith.constant 0.000000e+00 : f32
    %308 = vector.broadcast %cst_143 : f32 to vector<16x512xf32>
    %309 = arith.subf %308, %287 : vector<16x512xf32>
    %310 = arith.mulf %309, %287 : vector<16x512xf32>
    %311 = math.exp %310 : vector<16x512xf32>
    %312 = arith.mulf %307, %311 : vector<16x512xf32>
    %cst_144 = arith.constant 1.000000e+00 : f32
    %313 = vector.broadcast %cst_144 : f32 to vector<16x512xf32>
    %314 = arith.subf %313, %312 : vector<16x512xf32>
    %cst_145 = arith.constant 0.000000e+00 : f32
    %315 = vector.broadcast %cst_145 : f32 to vector<16x512xf32>
    %316 = arith.cmpf olt, %286, %315 : vector<16x512xf32>
    %cst_146 = arith.constant 0.000000e+00 : f32
    %317 = vector.broadcast %cst_146 : f32 to vector<16x512xf32>
    %318 = arith.subf %317, %314 : vector<16x512xf32>
    %319 = arith.select %316, %318, %314 : vector<16x512xi1>, vector<16x512xf32>
    %cst_147 = arith.constant 1.000000e+00 : f32
    %320 = vector.broadcast %cst_147 : f32 to vector<16x512xf32>
    %321 = arith.addf %320, %319 : vector<16x512xf32>
    %322 = arith.mulf %284, %321 : vector<16x512xf32>
    %323 = arith.truncf %322 : vector<16x512xf32> to vector<16x512xbf16>
    %c1_148 = arith.constant 1 : index
    %c0_149 = arith.constant 0 : index
    %c0_150 = arith.constant 0 : index
    %324 = vector.load %arg10[%c1_148, %c0_149, %c0_150] : memref<2x512x128xbf16, #tpu.memory_space<vmem>>, vector<1x512x128xbf16>
    %325 = vector.shape_cast %324 : vector<1x512x128xbf16> to vector<512x128xbf16>
    %cst_151 = arith.constant dense<0.000000e+00> : vector<16x128xf32>
    %326 = tpu.matmul %323, %325, %cst_151 {dimension_numbers = #tpu.dot_dimension_numbers<[1], [0], [0], [1], [0, 0, 1, 1], [], []>} : vector<16x512xbf16>, vector<512x128xbf16>, vector<16x128xf32> -> vector<16x128xf32>
    %327 = arith.addf %248, %326 : vector<16x128xf32>
    %c1_152 = arith.constant 1 : index
    %c0_153 = arith.constant 0 : index
    %c0_154 = arith.constant 0 : index
    %328 = vector.load %arg11[%c1_152, %c0_153, %c0_154] : memref<2x1x128xf32, #tpu.memory_space<vmem>>, vector<1x1x128xf32>
    %329 = vector.shape_cast %328 : vector<1x1x128xf32> to vector<1x128xf32>
    %330 = vector.broadcast %329 : vector<1x128xf32> to vector<16x128xf32>
    %331 = arith.addf %327, %330 : vector<16x128xf32>
    %c0_155 = arith.constant 0 : index
    %c0_156 = arith.constant 0 : index
    %332 = vector.load %arg16[%c0_155, %c0_156] : memref<1x128xf32, #tpu.memory_space<vmem>>, vector<1x128xf32>
    %c0_157 = arith.constant 0 : index
    %c0_158 = arith.constant 0 : index
    %333 = vector.load %arg17[%c0_157, %c0_158] : memref<1x128xf32, #tpu.memory_space<vmem>>, vector<1x128xf32>
    %cst_159 = arith.constant dense<0.000000e+00> : vector<16xf32>
    %334 = vector.multi_reduction <add>, %331, %cst_159 [1] : vector<16x128xf32> to vector<16xf32>
    %335 = vector.shape_cast %334 : vector<16xf32> to vector<16x1xf32>
    %cst_160 = arith.constant 1.280000e+02 : f32
    %336 = vector.broadcast %cst_160 : f32 to vector<16x1xf32>
    %337 = arith.divf %335, %336 : vector<16x1xf32>
    %338 = vector.broadcast %337 : vector<16x1xf32> to vector<16x128xf32>
    %339 = arith.subf %331, %338 : vector<16x128xf32>
    %340 = arith.mulf %339, %339 : vector<16x128xf32>
    %cst_161 = arith.constant dense<0.000000e+00> : vector<16xf32>
    %341 = vector.multi_reduction <add>, %340, %cst_161 [1] : vector<16x128xf32> to vector<16xf32>
    %342 = vector.shape_cast %341 : vector<16xf32> to vector<16x1xf32>
    %cst_162 = arith.constant 1.280000e+02 : f32
    %343 = vector.broadcast %cst_162 : f32 to vector<16x1xf32>
    %344 = arith.divf %342, %343 : vector<16x1xf32>
    %345 = vector.broadcast %337 : vector<16x1xf32> to vector<16x128xf32>
    %346 = arith.subf %331, %345 : vector<16x128xf32>
    %cst_163 = arith.constant 9.99999974E-6 : f32
    %347 = vector.broadcast %cst_163 : f32 to vector<16x1xf32>
    %348 = arith.addf %344, %347 : vector<16x1xf32>
    %349 = math.rsqrt %348 : vector<16x1xf32>
    %350 = vector.broadcast %349 : vector<16x1xf32> to vector<16x128xf32>
    %351 = arith.mulf %346, %350 : vector<16x128xf32>
    %352 = vector.broadcast %332 : vector<1x128xf32> to vector<16x128xf32>
    %353 = arith.mulf %351, %352 : vector<16x128xf32>
    %354 = vector.broadcast %333 : vector<1x128xf32> to vector<16x128xf32>
    %355 = arith.addf %353, %354 : vector<16x128xf32>
    %c0_164 = arith.constant 0 : index
    %c0_165 = arith.constant 0 : index
    %c0_166 = arith.constant 0 : index
    %356 = vector.load %arg18[%c0_164, %c0_165, %c0_166] : memref<1x16x128xf32, #tpu.memory_space<vmem>>, vector<1x16x128xf32>
    %357 = vector.shape_cast %356 : vector<1x16x128xf32> to vector<16x128xf32>
    %358 = vector.shape_cast %355 : vector<16x128xf32> to vector<1x16x128xf32>
    tpu.vector_store %arg18[%c0_164, %c0_165, %c0_166], %358 {strides = array<i32>} : memref<1x16x128xf32, #tpu.memory_space<vmem>>, vector<1x16x128xf32>,
    return
  }
  func.func @transform_0(%arg0: i32) -> (i32, i32, i32) {
    %c0_i32 = arith.constant 0 : i32
    %c0_i32_0 = arith.constant 0 : i32
    %c0_i32_1 = arith.constant 0 : i32
    return %arg0, %c0_i32, %c0_i32_0 : i32, i32, i32
  }
  func.func @transform_1(%arg0: i32) -> (i32, i32) {
    %c0_i32 = arith.constant 0 : i32
    %c0_i32_0 = arith.constant 0 : i32
    %c0_i32_1 = arith.constant 0 : i32
    return %c0_i32, %c0_i32_0 : i32, i32
  }
  func.func @transform_2(%arg0: i32) -> (i32, i32) {
    %c0_i32 = arith.constant 0 : i32
    %c0_i32_0 = arith.constant 0 : i32
    %c0_i32_1 = arith.constant 0 : i32
    return %c0_i32, %c0_i32_0 : i32, i32
  }
  func.func @transform_3(%arg0: i32) -> (i32, i32, i32) {
    %c0_i32 = arith.constant 0 : i32
    %c0_i32_0 = arith.constant 0 : i32
    %c0_i32_1 = arith.constant 0 : i32
    %c0_i32_2 = arith.constant 0 : i32
    return %c0_i32, %c0_i32_0, %c0_i32_1 : i32, i32, i32
  }
  func.func @transform_4(%arg0: i32) -> (i32, i32, i32) {
    %c0_i32 = arith.constant 0 : i32
    %c0_i32_0 = arith.constant 0 : i32
    %c0_i32_1 = arith.constant 0 : i32
    %c0_i32_2 = arith.constant 0 : i32
    return %c0_i32, %c0_i32_0, %c0_i32_1 : i32, i32, i32
  }
  func.func @transform_5(%arg0: i32) -> (i32, i32, i32) {
    %c0_i32 = arith.constant 0 : i32
    %c0_i32_0 = arith.constant 0 : i32
    %c0_i32_1 = arith.constant 0 : i32
    %c0_i32_2 = arith.constant 0 : i32
    return %c0_i32, %c0_i32_0, %c0_i32_1 : i32, i32, i32
  }
  func.func @transform_6(%arg0: i32) -> (i32, i32, i32) {
    %c0_i32 = arith.constant 0 : i32
    %c0_i32_0 = arith.constant 0 : i32
    %c0_i32_1 = arith.constant 0 : i32
    %c0_i32_2 = arith.constant 0 : i32
    return %c0_i32, %c0_i32_0, %c0_i32_1 : i32, i32, i32
  }
  func.func @transform_7(%arg0: i32) -> (i32, i32, i32) {
    %c0_i32 = arith.constant 0 : i32
    %c0_i32_0 = arith.constant 0 : i32
    %c0_i32_1 = arith.constant 0 : i32
    %c0_i32_2 = arith.constant 0 : i32
    return %c0_i32, %c0_i32_0, %c0_i32_1 : i32, i32, i32
  }
  func.func @transform_8(%arg0: i32) -> (i32, i32, i32) {
    %c0_i32 = arith.constant 0 : i32
    %c0_i32_0 = arith.constant 0 : i32
    %c0_i32_1 = arith.constant 0 : i32
    %c0_i32_2 = arith.constant 0 : i32
    return %c0_i32, %c0_i32_0, %c0_i32_1 : i32, i32, i32
  }
  func.func @transform_9(%arg0: i32) -> (i32, i32, i32) {
    %c0_i32 = arith.constant 0 : i32
    %c0_i32_0 = arith.constant 0 : i32
    %c0_i32_1 = arith.constant 0 : i32
    %c0_i32_2 = arith.constant 0 : i32
    return %c0_i32, %c0_i32_0, %c0_i32_1 : i32, i32, i32
  }
  func.func @transform_10(%arg0: i32) -> (i32, i32, i32) {
    %c0_i32 = arith.constant 0 : i32
    %c0_i32_0 = arith.constant 0 : i32
    %c0_i32_1 = arith.constant 0 : i32
    %c0_i32_2 = arith.constant 0 : i32
    return %c0_i32, %c0_i32_0, %c0_i32_1 : i32, i32, i32
  }
  func.func @transform_11(%arg0: i32) -> (i32, i32, i32) {
    %c0_i32 = arith.constant 0 : i32
    %c0_i32_0 = arith.constant 0 : i32
    %c0_i32_1 = arith.constant 0 : i32
    %c0_i32_2 = arith.constant 0 : i32
    return %c0_i32, %c0_i32_0, %c0_i32_1 : i32, i32, i32
  }
  func.func @transform_12(%arg0: i32) -> (i32, i32, i32) {
    %c0_i32 = arith.constant 0 : i32
    %c0_i32_0 = arith.constant 0 : i32
    %c0_i32_1 = arith.constant 0 : i32
    %c0_i32_2 = arith.constant 0 : i32
    return %c0_i32, %c0_i32_0, %c0_i32_1 : i32, i32, i32
  }
  func.func @transform_13(%arg0: i32) -> (i32, i32, i32) {
    %c0_i32 = arith.constant 0 : i32
    %c0_i32_0 = arith.constant 0 : i32
    %c0_i32_1 = arith.constant 0 : i32
    %c0_i32_2 = arith.constant 0 : i32
    return %c0_i32, %c0_i32_0, %c0_i32_1 : i32, i32, i32
  }
  func.func @transform_14(%arg0: i32) -> (i32, i32, i32) {
    %c0_i32 = arith.constant 0 : i32
    %c0_i32_0 = arith.constant 0 : i32
    %c0_i32_1 = arith.constant 0 : i32
    %c0_i32_2 = arith.constant 0 : i32
    return %c0_i32, %c0_i32_0, %c0_i32_1 : i32, i32, i32
  }
  func.func @transform_15(%arg0: i32) -> (i32, i32) {
    %c0_i32 = arith.constant 0 : i32
    %c0_i32_0 = arith.constant 0 : i32
    %c0_i32_1 = arith.constant 0 : i32
    return %c0_i32, %c0_i32_0 : i32, i32
  }
  func.func @transform_16(%arg0: i32) -> (i32, i32) {
    %c0_i32 = arith.constant 0 : i32
    %c0_i32_0 = arith.constant 0 : i32
    %c0_i32_1 = arith.constant 0 : i32
    return %c0_i32, %c0_i32_0 : i32, i32
  }
  func.func @transform_17(%arg0: i32) -> (i32, i32, i32) {
    %c0_i32 = arith.constant 0 : i32
    %c0_i32_0 = arith.constant 0 : i32
    %c0_i32_1 = arith.constant 0 : i32
    return %arg0, %c0_i32, %c0_i32_0 : i32, i32, i32
  }
}

</mosaic_0001>

<llo_original>
// kernel: backbone_forward.1
$region0: #{backbone_forward.1}
  #allocation0 [shape = 'u32[]', space=smem, size = 0x4, offset = 0x4, fixed_abs, tag = 'smem constant byte address 0x4 - core index']
  #allocation1 [shape = 'u32[72,128]{1,0:T(1,128)}', space=vmem, size = 0x9000, scoped, tag = 'internal scratch']
  %s0 = inlined_call_operand.vmem [shape: bf16[2,16,1024], index: 0, kind: input, shape index: {}]
  %s1 = inlined_call_operand.vmem [shape: bf16[1024,128], index: 1, kind: input, shape index: {}]
  %s2 = inlined_call_operand.vmem [shape: f32[16,128], index: 2, kind: input, shape index: {}]
  %s3 = inlined_call_operand.vmem [shape: bf16[2,128,384], index: 3, kind: input, shape index: {}]
  %s4 = inlined_call_operand.vmem [shape: f32[2,1,384], index: 4, kind: input, shape index: {}]
  %s5 = inlined_call_operand.vmem [shape: bf16[2,128,128], index: 5, kind: input, shape index: {}]
  %s6 = inlined_call_operand.vmem [shape: f32[2,1,128], index: 6, kind: input, shape index: {}]
  %s7 = inlined_call_operand.vmem [shape: bf16[2,128,512], index: 7, kind: input, shape index: {}]
  %s8 = inlined_call_operand.vmem [shape: f32[2,1,512], index: 8, kind: input, shape index: {}]
  %s9 = inlined_call_operand.vmem [shape: bf16[2,512,128], index: 9, kind: input, shape index: {}]
  %s10 = inlined_call_operand.vmem [shape: f32[2,1,128], index: 10, kind: input, shape index: {}]
  %s11 = inlined_call_operand.vmem [shape: f32[2,1,128], index: 11, kind: input, shape index: {}]
  %s12 = inlined_call_operand.vmem [shape: f32[2,1,128], index: 12, kind: input, shape index: {}]
  %s13 = inlined_call_operand.vmem [shape: f32[2,1,128], index: 13, kind: input, shape index: {}]
  %s14 = inlined_call_operand.vmem [shape: f32[2,1,128], index: 14, kind: input, shape index: {}]
  %s15 = inlined_call_operand.vmem [shape: f32[1,128], index: 15, kind: input, shape index: {}]
  %s16 = inlined_call_operand.vmem [shape: f32[1,128], index: 16, kind: input, shape index: {}]
  %s17 = inlined_call_operand.vmem [shape: f32[2,16,128], index: 17, kind: output, shape index: {}]
  %s18 = sld [smem:[#allocation0]]
  $region101: #{backbone_forward.1} parent=0
    _
  %s20 = ssub.s32 1, %s18
  %s21 = scalar_select 0, %s20, %s18
  loop: start=0, step=1, limit=4
  $region2: #{backbone_forward.1} parent=0 // loop_pre_header
    _
  $region3: #{backbone_forward.1} parent=0 // loop_header
    %s23 = sphi 0, %s27
    %p24 = scmp.ge.s32.totalorder %s23, 4
    %s33 = sphi 0, %s35
    %s36 = sphi 0, %s33
    %s37 = sphi 0, %s36
    %s53 = sphi 0, %s37
    %s57 = sphi 0, %s57
    %s59 = sphi 0, %s57
    %s60 = sphi 0, %s59
    %s74 = sphi 0, %s60
    %s78 = sphi 0, %s78
    %s80 = sphi 0, %s78
    %s81 = sphi 0, %s80
    %s95 = sphi 0, %s81
    %s99 = sphi 0, %s99
    %s101 = sphi 0, %s99
    %s102 = sphi 0, %s101
    %s116 = sphi 0, %s102
    %s120 = sphi 0, %s120
    %s122 = sphi 0, %s120
    %s123 = sphi 0, %s122
    %s137 = sphi 0, %s123
    %s141 = sphi 0, %s141
    %s143 = sphi 0, %s141
    %s144 = sphi 0, %s143
    %s158 = sphi 0, %s144
    %s162 = sphi 0, %s162
    %s164 = sphi 0, %s162
    %s165 = sphi 0, %s164
    %s179 = sphi 0, %s165
    %s183 = sphi 0, %s183
    %s185 = sphi 0, %s183
    %s186 = sphi 0, %s185
    %s200 = sphi 0, %s186
    %s204 = sphi 0, %s204
    %s206 = sphi 0, %s204
    %s207 = sphi 0, %s206
    %s221 = sphi 0, %s207
    %s225 = sphi 0, %s225
    %s227 = sphi 0, %s225
    %s228 = sphi 0, %s227
    %s242 = sphi 0, %s228
    %s246 = sphi 0, %s246
    %s248 = sphi 0, %s246
    %s249 = sphi 0, %s248
    %s263 = sphi 0, %s249
    %s267 = sphi 0, %s267
    %s269 = sphi 0, %s267
    %s270 = sphi 0, %s269
    %s284 = sphi 0, %s270
    %s288 = sphi 0, %s288
    %s290 = sphi 0, %s288
    %s291 = sphi 0, %s290
    %s305 = sphi 0, %s291
    %s309 = sphi 0, %s309
    %s311 = sphi 0, %s309
    %s312 = sphi 0, %s311
    %s326 = sphi 0, %s312
    %s330 = sphi 0, %s330
    %s332 = sphi 0, %s330
    %s333 = sphi 0, %s332
    %s347 = sphi 0, %s333
    %s351 = sphi 0, %s351
    %s353 = sphi 0, %s351
    %s354 = sphi 0, %s353
    %s368 = sphi 0, %s354
    %s372 = sphi 0, %s372
    %s374 = sphi 0, %s372
    %s375 = sphi 0, %s374
    %s389 = sphi 0, %s375
    %s395 = sphi 0, %s397
    %s398 = sphi 0, %s395
    %s399 = sphi 0, %s398
    %s415 = sphi 0, %s399
  $region4: #{backbone_forward.1} parent=0 // loop_header_branch
    %26 = sbr.rel (%p24) target = $region8
  $region5: #{backbone_forward.1} parent=0 // loop_body
    %s28 = ssub.s32 %s23, 1
    %s29 = ssub.s32 %s23, 2
    %s30 = sadd.s32 %s23, 1
    %s31 = ssub.s32 %s23, %s30
    %p32 = scmp.eq.s32.totalorder %s31, 0
    %s34 = sadd.s32 %s33, 1
    %s35 = scalar_select %p32, %s33, %s34
    %p38 = pneg %p32
    %p39 = scmp.eq.s32.totalorder %s23, 1
    %p40 = por %p38, %p39
    %p41 = scmp.ne.s32.totalorder %s33, %s36
    %p42 = scmp.eq.s32.totalorder %s23, 0
    %p43 = por %p41, %p42
    %p44 = scmp.ne.s32.totalorder %s33, %s36
    %p45 = scmp.eq.s32.totalorder %s28, 1
    %p46 = por %p44, %p45
    %p47 = scmp.ne.s32.totalorder %s36, %s37
    %p48 = scmp.eq.s32.totalorder %s28, 0
    %p49 = por %p47, %p48
    %p50 = scmp.ne.s32.totalorder %s36, %s37
    %p51 = scmp.eq.s32.totalorder %s29, 1
    %p52 = por %p50, %p51
    %p54 = scmp.ne.s32.totalorder %s37, %s53
    %p55 = scmp.eq.s32.totalorder %s29, 0
    %p56 = por %p54, %p55
    %s58 = sadd.s32 %s57, 1
    %p61 = scmp.eq.s32.totalorder %s23, 1
    %p62 = scmp.ne.s32.totalorder %s57, %s59
    %p63 = scmp.eq.s32.totalorder %s23, 0
    %p64 = por %p62, %p63
    %p65 = scmp.ne.s32.totalorder %s57, %s59
    %p66 = scmp.eq.s32.totalorder %s28, 1
    %p67 = por %p65, %p66
    %p68 = scmp.ne.s32.totalorder %s59, %s60
    %p69 = scmp.eq.s32.totalorder %s28, 0
    %p70 = por %p68, %p69
    %p71 = scmp.ne.s32.totalorder %s59, %s60
    %p72 = scmp.eq.s32.totalorder %s29, 1
    %p73 = por %p71, %p72
    %p75 = scmp.ne.s32.totalorder %s60, %s74
    %p76 = scmp.eq.s32.totalorder %s29, 0
    %p77 = por %p75, %p76
    %s79 = sadd.s32 %s78, 1
    %p82 = scmp.eq.s32.totalorder %s23, 1
    %p83 = scmp.ne.s32.totalorder %s78, %s80
    %p84 = scmp.eq.s32.totalorder %s23, 0
    %p85 = por %p83, %p84
    %p86 = scmp.ne.s32.totalorder %s78, %s80
    %p87 = scmp.eq.s32.totalorder %s28, 1
    %p88 = por %p86, %p87
    %p89 = scmp.ne.s32.totalorder %s80, %s81
    %p90 = scmp.eq.s32.totalorder %s28, 0
    %p91 = por %p89, %p90
    %p92 = scmp.ne.s32.totalorder %s80, %s81
    %p93 = scmp.eq.s32.totalorder %s29, 1
    %p94 = por %p92, %p93
    %p96 = scmp.ne.s32.totalorder %s81, %s95
    %p97 = scmp.eq.s32.totalorder %s29, 0
    %p98 = por %p96, %p97
    %s100 = sadd.s32 %s99, 1
    %p103 = scmp.eq.s32.totalorder %s23, 1
    %p104 = scmp.ne.s32.totalorder %s99, %s101
    %p105 = scmp.eq.s32.totalorder %s23, 0
    %p106 = por %p104, %p105
    %p107 = scmp.ne.s32.totalorder %s99, %s101
    %p108 = scmp.eq.s32.totalorder %s28, 1
    %p109 = por %p107, %p108
    %p110 = scmp.ne.s32.totalorder %s101, %s102
    %p111 = scmp.eq.s32.totalorder %s28, 0
    %p112 = por %p110, %p111
    %p113 = scmp.ne.s32.totalorder %s101, %s102
    %p114 = scmp.eq.s32.totalorder %s29, 1
    %p115 = por %p113, %p114
    %p117 = scmp.ne.s32.totalorder %s102, %s116
    %p118 = scmp.eq.s32.totalorder %s29, 0
    %p119 = por %p117, %p118
    %s121 = sadd.s32 %s120, 1
    %p124 = scmp.eq.s32.totalorder %s23, 1
    %p125 = scmp.ne.s32.totalorder %s120, %s122
    %p126 = scmp.eq.s32.totalorder %s23, 0
    %p127 = por %p125, %p126
    %p128 = scmp.ne.s32.totalorder %s120, %s122
    %p129 = scmp.eq.s32.totalorder %s28, 1
    %p130 = por %p128, %p129
    %p131 = scmp.ne.s32.totalorder %s122, %s123
    %p132 = scmp.eq.s32.totalorder %s28, 0
    %p133 = por %p131, %p132
    %p134 = scmp.ne.s32.totalorder %s122, %s123
    %p135 = scmp.eq.s32.totalorder %s29, 1
    %p136 = por %p134, %p135
    %p138 = scmp.ne.s32.totalorder %s123, %s137
    %p139 = scmp.eq.s32.totalorder %s29, 0
    %p140 = por %p138, %p139
    %s142 = sadd.s32 %s141, 1
    %p145 = scmp.eq.s32.totalorder %s23, 1
    %p146 = scmp.ne.s32.totalorder %s141, %s143
    %p147 = scmp.eq.s32.totalorder %s23, 0
    %p148 = por %p146, %p147
    %p149 = scmp.ne.s32.totalorder %s141, %s143
    %p150 = scmp.eq.s32.totalorder %s28, 1
    %p151 = por %p149, %p150
    %p152 = scmp.ne.s32.totalorder %s143, %s144
    %p153 = scmp.eq.s32.totalorder %s28, 0
    %p154 = por %p152, %p153
    %p155 = scmp.ne.s32.totalorder %s143, %s144
    %p156 = scmp.eq.s32.totalorder %s29, 1
    %p157 = por %p155, %p156
    %p159 = scmp.ne.s32.totalorder %s144, %s158
    %p160 = scmp.eq.s32.totalorder %s29, 0
    %p161 = por %p159, %p160
    %s163 = sadd.s32 %s162, 1
    %p166 = scmp.eq.s32.totalorder %s23, 1
    %p167 = scmp.ne.s32.totalorder %s162, %s164
    %p168 = scmp.eq.s32.totalorder %s23, 0
    %p169 = por %p167, %p168
    %p170 = scmp.ne.s32.totalorder %s162, %s164
    %p171 = scmp.eq.s32.totalorder %s28, 1
    %p172 = por %p170, %p171
    %p173 = scmp.ne.s32.totalorder %s164, %s165
    %p174 = scmp.eq.s32.totalorder %s28, 0
    %p175 = por %p173, %p174
    %p176 = scmp.ne.s32.totalorder %s164, %s165
    %p177 = scmp.eq.s32.totalorder %s29, 1
    %p178 = por %p176, %p177
    %p180 = scmp.ne.s32.totalorder %s165, %s179
    %p181 = scmp.eq.s32.totalorder %s29, 0
    %p182 = por %p180, %p181
    %s184 = sadd.s32 %s183, 1
    %p187 = scmp.eq.s32.totalorder %s23, 1
    %p188 = scmp.ne.s32.totalorder %s183, %s185
    %p189 = scmp.eq.s32.totalorder %s23, 0
    %p190 = por %p188, %p189
    %p191 = scmp.ne.s32.totalorder %s183, %s185
    %p192 = scmp.eq.s32.totalorder %s28, 1
    %p193 = por %p191, %p192
    %p194 = scmp.ne.s32.totalorder %s185, %s186
    %p195 = scmp.eq.s32.totalorder %s28, 0
    %p196 = por %p194, %p195
    %p197 = scmp.ne.s32.totalorder %s185, %s186
    %p198 = scmp.eq.s32.totalorder %s29, 1
    %p199 = por %p197, %p198
    %p201 = scmp.ne.s32.totalorder %s186, %s200
    %p202 = scmp.eq.s32.totalorder %s29, 0
    %p203 = por %p201, %p202
    %s205 = sadd.s32 %s204, 1
    %p208 = scmp.eq.s32.totalorder %s23, 1
    %p209 = scmp.ne.s32.totalorder %s204, %s206
    %p210 = scmp.eq.s32.totalorder %s23, 0
    %p211 = por %p209, %p210
    %p212 = scmp.ne.s32.totalorder %s204, %s206
    %p213 = scmp.eq.s32.totalorder %s28, 1
    %p214 = por %p212, %p213
    %p215 = scmp.ne.s32.totalorder %s206, %s207
    %p216 = scmp.eq.s32.totalorder %s28, 0
    %p217 = por %p215, %p216
    %p218 = scmp.ne.s32.totalorder %s206, %s207
    %p219 = scmp.eq.s32.totalorder %s29, 1
    %p220 = por %p218, %p219
    %p222 = scmp.ne.s32.totalorder %s207, %s221
    %p223 = scmp.eq.s32.totalorder %s29, 0
    %p224 = por %p222, %p223
    %s226 = sadd.s32 %s225, 1
    %p229 = scmp.eq.s32.totalorder %s23, 1
    %p230 = scmp.ne.s32.totalorder %s225, %s227
    %p231 = scmp.eq.s32.totalorder %s23, 0
    %p232 = por %p230, %p231
    %p233 = scmp.ne.s32.totalorder %s225, %s227
    %p234 = scmp.eq.s32.totalorder %s28, 1
    %p235 = por %p233, %p234
    %p236 = scmp.ne.s32.totalorder %s227, %s228
    %p237 = scmp.eq.s32.totalorder %s28, 0
    %p238 = por %p236, %p237
    %p239 = scmp.ne.s32.totalorder %s227, %s228
    %p240 = scmp.eq.s32.totalorder %s29, 1
    %p241 = por %p239, %p240
    %p243 = scmp.ne.s32.totalorder %s228, %s242
    %p244 = scmp.eq.s32.totalorder %s29, 0
    %p245 = por %p243, %p244
    %s247 = sadd.s32 %s246, 1
    %p250 = scmp.eq.s32.totalorder %s23, 1
    %p251 = scmp.ne.s32.totalorder %s246, %s248
    %p252 = scmp.eq.s32.totalorder %s23, 0
    %p253 = por %p251, %p252
    %p254 = scmp.ne.s32.totalorder %s246, %s248
    %p255 = scmp.eq.s32.totalorder %s28, 1
    %p256 = por %p254, %p255
    %p257 = scmp.ne.s32.totalorder %s248, %s249
    %p258 = scmp.eq.s32.totalorder %s28, 0
    %p259 = por %p257, %p258
    %p260 = scmp.ne.s32.totalorder %s248, %s249
    %p261 = scmp.eq.s32.totalorder %s29, 1
    %p262 = por %p260, %p261
    %p264 = scmp.ne.s32.totalorder %s249, %s263
    %p265 = scmp.eq.s32.totalorder %s29, 0
    %p266 = por %p264, %p265
    %s268 = sadd.s32 %s267, 1
    %p271 = scmp.eq.s32.totalorder %s23, 1
    %p272 = scmp.ne.s32.totalorder %s267, %s269
    %p273 = scmp.eq.s32.totalorder %s23, 0
    %p274 = por %p272, %p273
    %p275 = scmp.ne.s32.totalorder %s267, %s269
    %p276 = scmp.eq.s32.totalorder %s28, 1
    %p277 = por %p275, %p276
    %p278 = scmp.ne.s32.totalorder %s269, %s270
    %p279 = scmp.eq.s32.totalorder %s28, 0
    %p280 = por %p278, %p279
    %p281 = scmp.ne.s32.totalorder %s269, %s270
    %p282 = scmp.eq.s32.totalorder %s29, 1
    %p283 = por %p281, %p282
    %p285 = scmp.ne.s32.totalorder %s270, %s284
    %p286 = scmp.eq.s32.totalorder %s29, 0
    %p287 = por %p285, %p286
    %s289 = sadd.s32 %s288, 1
    %p292 = scmp.eq.s32.totalorder %s23, 1
    %p293 = scmp.ne.s32.totalorder %s288, %s290
    %p294 = scmp.eq.s32.totalorder %s23, 0
    %p295 = por %p293, %p294
    %p296 = scmp.ne.s32.totalorder %s288, %s290
    %p297 = scmp.eq.s32.totalorder %s28, 1
    %p298 = por %p296, %p297
    %p299 = scmp.ne.s32.totalorder %s290, %s291
    %p300 = scmp.eq.s32.totalorder %s28, 0
    %p301 = por %p299, %p300
    %p302 = scmp.ne.s32.totalorder %s290, %s291
    %p303 = scmp.eq.s32.totalorder %s29, 1
    %p304 = por %p302, %p303
    %p306 = scmp.ne.s32.totalorder %s291, %s305
    %p307 = scmp.eq.s32.totalorder %s29, 0
    %p308 = por %p306, %p307
    %s310 = sadd.s32 %s309, 1
    %p313 = scmp.eq.s32.totalorder %s23, 1
    %p314 = scmp.ne.s32.totalorder %s309, %s311
    %p315 = scmp.eq.s32.totalorder %s23, 0
    %p316 = por %p314, %p315
    %p317 = scmp.ne.s32.totalorder %s309, %s311
    %p318 = scmp.eq.s32.totalorder %s28, 1
    %p319 = por %p317, %p318
    %p320 = scmp.ne.s32.totalorder %s311, %s312
    %p321 = scmp.eq.s32.totalorder %s28, 0
    %p322 = por %p320, %p321
    %p323 = scmp.ne.s32.totalorder %s311, %s312
    %p324 = scmp.eq.s32.totalorder %s29, 1
    %p325 = por %p323, %p324
    %p327 = scmp.ne.s32.totalorder %s312, %s326
    %p328 = scmp.eq.s32.totalorder %s29, 0
    %p329 = por %p327, %p328
    %s331 = sadd.s32 %s330, 1
    %p334 = scmp.eq.s32.totalorder %s23, 1
    %p335 = scmp.ne.s32.totalorder %s330, %s332
    %p336 = scmp.eq.s32.totalorder %s23, 0
    %p337 = por %p335, %p336
    %p338 = scmp.ne.s32.totalorder %s330, %s332
    %p339 = scmp.eq.s32.totalorder %s28, 1
    %p340 = por %p338, %p339
    %p341 = scmp.ne.s32.totalorder %s332, %s333
    %p342 = scmp.eq.s32.totalorder %s28, 0
    %p343 = por %p341, %p342
    %p344 = scmp.ne.s32.totalorder %s332, %s333
    %p345 = scmp.eq.s32.totalorder %s29, 1
    %p346 = por %p344, %p345
    %p348 = scmp.ne.s32.totalorder %s333, %s347
    %p349 = scmp.eq.s32.totalorder %s29, 0
    %p350 = por %p348, %p349
    %s352 = sadd.s32 %s351, 1
    %p355 = scmp.eq.s32.totalorder %s23, 1
    %p356 = scmp.ne.s32.totalorder %s351, %s353
    %p357 = scmp.eq.s32.totalorder %s23, 0
    %p358 = por %p356, %p357
    %p359 = scmp.ne.s32.totalorder %s351, %s353
    %p360 = scmp.eq.s32.totalorder %s28, 1
    %p361 = por %p359, %p360
    %p362 = scmp.ne.s32.totalorder %s353, %s354
    %p363 = scmp.eq.s32.totalorder %s28, 0
    %p364 = por %p362, %p363
    %p365 = scmp.ne.s32.totalorder %s353, %s354
    %p366 = scmp.eq.s32.totalorder %s29, 1
    %p367 = por %p365, %p366
    %p369 = scmp.ne.s32.totalorder %s354, %s368
    %p370 = scmp.eq.s32.totalorder %s29, 0
    %p371 = por %p369, %p370
    %s373 = sadd.s32 %s372, 1
    %p376 = scmp.eq.s32.totalorder %s23, 1
    %p377 = scmp.ne.s32.totalorder %s372, %s374
    %p378 = scmp.eq.s32.totalorder %s23, 0
    %p379 = por %p377, %p378
    %p380 = scmp.ne.s32.totalorder %s372, %s374
    %p381 = scmp.eq.s32.totalorder %s28, 1
    %p382 = por %p380, %p381
    %p383 = scmp.ne.s32.totalorder %s374, %s375
    %p384 = scmp.eq.s32.totalorder %s28, 0
    %p385 = por %p383, %p384
    %p386 = scmp.ne.s32.totalorder %s374, %s375
    %p387 = scmp.eq.s32.totalorder %s29, 1
    %p388 = por %p386, %p387
    %p390 = scmp.ne.s32.totalorder %s375, %s389
    %p391 = scmp.eq.s32.totalorder %s29, 0
    %p392 = por %p390, %p391
    %s393 = ssub.s32 %s23, %s30
    %p394 = scmp.eq.s32.totalorder %s393, 0
    %s396 = sadd.s32 %s395, 1
    %s397 = scalar_select %p394, %s395, %s396
    %p400 = pneg %p394
    %p401 = scmp.eq.s32.totalorder %s23, 1
    %p402 = por %p400, %p401
    %p403 = scmp.ne.s32.totalorder %s395, %s398
    %p404 = scmp.eq.s32.totalorder %s23, 0
    %p405 = por %p403, %p404
    %p406 = scmp.ne.s32.totalorder %s395, %s398
    %p407 = scmp.eq.s32.totalorder %s28, 1
    %p408 = por %p406, %p407
    %p409 = scmp.ne.s32.totalorder %s398, %s399
    %p410 = scmp.eq.s32.totalorder %s28, 0
    %p411 = por %p409, %p410
    %p412 = scmp.ne.s32.totalorder %s398, %s399
    %p413 = scmp.eq.s32.totalorder %s29, 1
    %p414 = por %p412, %p413
    %p416 = scmp.ne.s32.totalorder %s399, %s415
    %p417 = scmp.eq.s32.totalorder %s29, 0
    %p418 = por %p416, %p417
    %p419 = scmp.le.s32.totalorder 1, %s23
    %p420 = scmp.lt.s32.totalorder %s23, 3
    %p421 = pnand %p419, %p420
    %p422 = pneg %p421
    // Predicated region
    $region9: #{backbone_forward.1} parent=5 // pred_check
      _
    $region10: #{backbone_forward.1} parent=5 // pred_check_branch
      %424 = sbr.rel (%p421) target = $region12
    $region11: #{backbone_forward.1} parent=5 // pred_region
      %s425 = ssub.s32 %s23, 1
      // Predicated region
      $region13: #{backbone_forward.1} parent=11 // pred_check
        %p426 = pneg %p70
      $region14: #{backbone_forward.1} parent=11 // pred_check_branch
        %428 = sbr.rel (%p426) target = $region16
      $region15: #{backbone_forward.1} parent=11 // pred_region
        _
      $region16: #{backbone_forward.1} parent=11 // pred_fallthru
        _
      // Predicated region
      $region17: #{backbone_forward.1} parent=11 // pred_check
        %p429 = pneg %p91
      $region18: #{backbone_forward.1} parent=11 // pred_check_branch
        %431 = sbr.rel (%p429) target = $region20
      $region19: #{backbone_forward.1} parent=11 // pred_region
        _
      $region20: #{backbone_forward.1} parent=11 // pred_fallthru
        _
      // Predicated region
      $region21: #{backbone_forward.1} parent=11 // pred_check
        %p432 = pneg %p112
      $region22: #{backbone_forward.1} parent=11 // pred_check_branch
        %434 = sbr.rel (%p432) target = $region24
      $region23: #{backbone_forward.1} parent=11 // pred_region
        _
      $region24: #{backbone_forward.1} parent=11 // pred_fallthru
        _
      // Predicated region
      $region25: #{backbone_forward.1} parent=11 // pred_check
        %p435 = pneg %p133
      $region26: #{backbone_forward.1} parent=11 // pred_check_branch
        %437 = sbr.rel (%p435) target = $region28
      $region27: #{backbone_forward.1} parent=11 // pred_region
        _
      $region28: #{backbone_forward.1} parent=11 // pred_fallthru
        _
      // Predicated region
      $region29: #{backbone_forward.1} parent=11 // pred_check
        %p438 = pneg %p154
      $region30: #{backbone_forward.1} parent=11 // pred_check_branch
        %440 = sbr.rel (%p438) target = $region32
      $region31: #{backbone_forward.1} parent=11 // pred_region
        _
      $region32: #{backbone_forward.1} parent=11 // pred_fallthru
        _
      // Predicated region
      $region33: #{backbone_forward.1} parent=11 // pred_check
        %p441 = pneg %p175
      $region34: #{backbone_forward.1} parent=11 // pred_check_branch
        %443 = sbr.rel (%p441) target = $region36
      $region35: #{backbone_forward.1} parent=11 // pred_region
        _
      $region36: #{backbone_forward.1} parent=11 // pred_fallthru
        _
      // Predicated region
      $region37: #{backbone_forward.1} parent=11 // pred_check
        %p444 = pneg %p196
      $region38: #{backbone_forward.1} parent=11 // pred_check_branch
        %446 = sbr.rel (%p444) target = $region40
      $region39: #{backbone_forward.1} parent=11 // pred_region
        _
      $region40: #{backbone_forward.1} parent=11 // pred_fallthru
        _
      // Predicated region
      $region41: #{backbone_forward.1} parent=11 // pred_check
        %p447 = pneg %p217
      $region42: #{backbone_forward.1} parent=11 // pred_check_branch
        %449 = sbr.rel (%p447) target = $region44
      $region43: #{backbone_forward.1} parent=11 // pred_region
        _
      $region44: #{backbone_forward.1} parent=11 // pred_fallthru
        _
      // Predicated region
      $region45: #{backbone_forward.1} parent=11 // pred_check
        %p450 = pneg %p238
      $region46: #{backbone_forward.1} parent=11 // pred_check_branch
        %452 = sbr.rel (%p450) target = $region48
      $region47: #{backbone_forward.1} parent=11 // pred_region
        _
      $region48: #{backbone_forward.1} parent=11 // pred_fallthru
        _
      // Predicated region
      $region49: #{backbone_forward.1} parent=11 // pred_check
        %p453 = pneg %p259
      $region50: #{backbone_forward.1} parent=11 // pred_check_branch
        %455 = sbr.rel (%p453) target = $region52
      $region51: #{backbone_forward.1} parent=11 // pred_region
        _
      $region52: #{backbone_forward.1} parent=11 // pred_fallthru
        _
      // Predicated region
      $region53: #{backbone_forward.1} parent=11 // pred_check
        %p456 = pneg %p280
      $region54: #{backbone_forward.1} parent=11 // pred_check_branch
        %458 = sbr.rel (%p456) target = $region56
      $region55: #{backbone_forward.1} parent=11 // pred_region
        _
      $region56: #{backbone_forward.1} parent=11 // pred_fallthru
        _
      // Predicated region
      $region57: #{backbone_forward.1} parent=11 // pred_check
        %p459 = pneg %p301
      $region58: #{backbone_forward.1} parent=11 // pred_check_branch
        %461 = sbr.rel (%p459) target = $region60
      $region59: #{backbone_forward.1} parent=11 // pred_region
        _
      $region60: #{backbone_forward.1} parent=11 // pred_fallthru
        _
      // Predicated region
      $region61: #{backbone_forward.1} parent=11 // pred_check
        %p462 = pneg %p322
      $region62: #{backbone_forward.1} parent=11 // pred_check_branch
        %464 = sbr.rel (%p462) target = $region64
      $region63: #{backbone_forward.1} parent=11 // pred_region
        _
      $region64: #{backbone_forward.1} parent=11 // pred_fallthru
        _
      // Predicated region
      $region65: #{backbone_forward.1} parent=11 // pred_check
        %p465 = pneg %p343
      $region66: #{backbone_forward.1} parent=11 // pred_check_branch
        %467 = sbr.rel (%p465) target = $region68
      $region67: #{backbone_forward.1} parent=11 // pred_region
        _
      $region68: #{backbone_forward.1} parent=11 // pred_fallthru
        _
      // Predicated region
      $region69: #{backbone_forward.1} parent=11 // pred_check
        %p468 = pneg %p364
      $region70: #{backbone_forward.1} parent=11 // pred_check_branch
        %470 = sbr.rel (%p468) target = $region72
      $region71: #{backbone_forward.1} parent=11 // pred_region
        _
      $region72: #{backbone_forward.1} parent=11 // pred_fallthru
        _
      // Predicated region
      $region73: #{backbone_forward.1} parent=11 // pred_check
        %p471 = pneg %p385
      $region74: #{backbone_forward.1} parent=11 // pred_check_branch
        %473 = sbr.rel (%p471) target = $region76
      $region75: #{backbone_forward.1} parent=11 // pred_region
        _
      $region76: #{backbone_forward.1} parent=11 // pred_fallthru
        _
    $region12: #{backbone_forward.1} parent=5 // pred_fallthru
      _
    %p474 = scmp.lt.s32.totalorder %s23, 2
    // Predicated region
    $region77: #{backbone_forward.1} parent=5 // pred_check
      %p475 = pneg %p474
    $region78: #{backbone_forward.1} parent=5 // pred_check_branch
      %477 = sbr.rel (%p475) target = $region80
    $region79: #{backbone_forward.1} parent=5 // pred_region
      // Predicated region
      $region81: #{backbone_forward.1} parent=79 // pred_check
        %p478 = pneg %p43
      $region82: #{backbone_forward.1} parent=79 // pred_check_branch
        %480 = sbr.rel (%p478) target = $region84
      $region83: #{backbone_forward.1} parent=79 // pred_region
        %p481 = scmp.lt.s32.totalorder %s23, 1
        %s482 = scalar_select %p481, %s23, 1
        %s483 = smul.addr %s482, 16
        %s484 = smul.addr %s483, 4
        %s485 = scalar_lea.vmem %s0, %s484
      $region84: #{backbone_forward.1} parent=79 // pred_fallthru
        _
    $region80: #{backbone_forward.1} parent=5 // pred_fallthru
      _
    %p486 = scmp.le.s32.totalorder 1, %s23
    %p487 = scmp.lt.s32.totalorder %s23, 3
    %p488 = pnand %p486, %p487
    %p489 = pneg %p488
    // Predicated region
    $region85: #{backbone_forward.1} parent=5 // pred_check
      _
    $region86: #{backbone_forward.1} parent=5 // pred_check_branch
      %491 = sbr.rel (%p488) target = $region88
    $region87: #{backbone_forward.1} parent=5 // pred_region
      %s492 = ssub.s32 %s23, 1
      %p493 = scmp.lt.s32.totalorder %s28, 1
      %s494 = scalar_select %p493, %s28, 1
      %s495 = smul.addr %s494, 16
      %s496 = smul.addr %s495, 4
      %s497 = scalar_lea.vmem %s0, %s496
      %p498 = pneg %p49
      %p499 = pneg %p46
      %p500 = pneg %p70
      %p501 = pneg %p67
      %p502 = pneg %p91
      %p503 = pneg %p88
      %p504 = pneg %p112
      %p505 = pneg %p109
      %p506 = pneg %p133
      %p507 = pneg %p130
      %p508 = pneg %p154
      %p509 = pneg %p151
      %p510 = pneg %p175
      %p511 = pneg %p172
      %p512 = pneg %p196
      %p513 = pneg %p193
      %p514 = pneg %p217
      %p515 = pneg %p214
      %p516 = pneg %p238
      %p517 = pneg %p235
      %p518 = pneg %p259
      %p519 = pneg %p256
      %p520 = pneg %p280
      %p521 = pneg %p277
      %p522 = pneg %p301
      %p523 = pneg %p298
      %p524 = pneg %p322
      %p525 = pneg %p319
      %p526 = pneg %p343
      %p527 = pneg %p340
      %p528 = pneg %p364
      %p529 = pneg %p361
      %p530 = pneg %p385
      %p531 = pneg %p382
      %p532 = pneg %p411
      %p533 = pneg %p408
      %p534 = scmp.lt.s32.totalorder %s28, 1
      %s535 = scalar_select %p534, %s28, 1
      %s536 = smul.addr %s535, 2
      %s537 = smul.addr %s536, 8
      %s538 = scalar_lea.vmem %s17, %s537
      %p539 = scmp.lt.s32.totalorder %s28, 1
      %s540 = scalar_select %p539, %s28, 1
      %s541 = smul.addr %s540, 16
      %s542 = smul.addr %s541, 4
      %s543 = scalar_lea.vmem %s0, %s542
      %p544 = scmp.lt.s32.totalorder %s28, 1
      %s545 = scalar_select %p544, %s28, 1
      %s546 = smul.addr %s545, 2
      %s547 = smul.addr %s546, 8
      %s548 = scalar_lea.vmem %s17, %s547
      %v550 = vld [vmem:[%s543] sm:$0xff]
      %v551 = vld [vmem:[%s543 + $0x8] sm:$0xff]
      %v552 = vld [vmem:[%s543 + $0x10] sm:$0xff]
      %v553 = vld [vmem:[%s543 + $0x18] sm:$0xff]
      %v554 = vld [vmem:[%s543 + $0x20] sm:$0xff]
      %v555 = vld [vmem:[%s543 + $0x28] sm:$0xff]
      %v556 = vld [vmem:[%s543 + $0x30] sm:$0xff]
      %v557 = vld [vmem:[%s543 + $0x38] sm:$0xff]
      %v558 = vld [vmem:[%s1] sm:$0xf]
      %v559 = vld [vmem:[%s1 + $0x4] sm:$0xf]
      %v560 = vld [vmem:[%s1 + $0x8] sm:$0xf]
      %v561 = vld [vmem:[%s1 + $0xc] sm:$0xf]
      %v562 = vld [vmem:[%s1 + $0x10] sm:$0xf]
      %v563 = vld [vmem:[%s1 + $0x14] sm:$0xf]
      %v564 = vld [vmem:[%s1 + $0x18] sm:$0xf]
      %v565 = vld [vmem:[%s1 + $0x1c] sm:$0xf]
      %v566 = vld [vmem:[%s1 + $0x20] sm:$0xf]
      %v567 = vld [vmem:[%s1 + $0x24] sm:$0xf]
      %v568 = vld [vmem:[%s1 + $0x28] sm:$0xf]
      %v569 = vld [vmem:[%s1 + $0x2c] sm:$0xf]
      %v570 = vld [vmem:[%s1 + $0x30] sm:$0xf]
      %v571 = vld [vmem:[%s1 + $0x34] sm:$0xf]
      %v572 = vld [vmem:[%s1 + $0x38] sm:$0xf]
      %v573 = vld [vmem:[%s1 + $0x3c] sm:$0xf]
      %v574 = vld [vmem:[%s1 + $0x40] sm:$0xf]
      %v575 = vld [vmem:[%s1 + $0x44] sm:$0xf]
      %v576 = vld [vmem:[%s1 + $0x48] sm:$0xf]
      %v577 = vld [vmem:[%s1 + $0x4c] sm:$0xf]
      %v578 = vld [vmem:[%s1 + $0x50] sm:$0xf]
      %v579 = vld [vmem:[%s1 + $0x54] sm:$0xf]
      %v580 = vld [vmem:[%s1 + $0x58] sm:$0xf]
      %v581 = vld [vmem:[%s1 + $0x5c] sm:$0xf]
      %v582 = vld [vmem:[%s1 + $0x60] sm:$0xf]
      %v583 = vld [vmem:[%s1 + $0x64] sm:$0xf]
      %v584 = vld [vmem:[%s1 + $0x68] sm:$0xf]
      %v585 = vld [vmem:[%s1 + $0x6c] sm:$0xf]
      %v586 = vld [vmem:[%s1 + $0x70] sm:$0xf]
      %v587 = vld [vmem:[%s1 + $0x74] sm:$0xf]
      %v588 = vld [vmem:[%s1 + $0x78] sm:$0xf]
      %v589 = vld [vmem:[%s1 + $0x7c] sm:$0xf]
      %v590 = vld [vmem:[%s1 + $0x80] sm:$0xf]
      %v591 = vld [vmem:[%s1 + $0x84] sm:$0xf]
      %v592 = vld [vmem:[%s1 + $0x88] sm:$0xf]
      %v593 = vld [vmem:[%s1 + $0x8c] sm:$0xf]
      %v594 = vld [vmem:[%s1 + $0x90] sm:$0xf]
      %v595 = vld [vmem:[%s1 + $0x94] sm:$0xf]
      %v596 = vld [vmem:[%s1 + $0x98] sm:$0xf]
      %v597 = vld [vmem:[%s1 + $0x9c] sm:$0xf]
      %v598 = vld [vmem:[%s1 + $0xa0] sm:$0xf]
      %v599 = vld [vmem:[%s1 + $0xa4] sm:$0xf]
      %v600 = vld [vmem:[%s1 + $0xa8] sm:$0xf]
      %v601 = vld [vmem:[%s1 + $0xac] sm:$0xf]
      %v602 = vld [vmem:[%s1 + $0xb0] sm:$0xf]
      %v603 = vld [vmem:[%s1 + $0xb4] sm:$0xf]
      %v604 = vld [vmem:[%s1 + $0xb8] sm:$0xf]
      %v605 = vld [vmem:[%s1 + $0xbc] sm:$0xf]
      %v606 = vld [vmem:[%s1 + $0xc0] sm:$0xf]
      %v607 = vld [vmem:[%s1 + $0xc4] sm:$0xf]
      %v608 = vld [vmem:[%s1 + $0xc8] sm:$0xf]
      %v609 = vld [vmem:[%s1 + $0xcc] sm:$0xf]
      %v610 = vld [vmem:[%s1 + $0xd0] sm:$0xf]
      %v611 = vld [vmem:[%s1 + $0xd4] sm:$0xf]
      %v612 = vld [vmem:[%s1 + $0xd8] sm:$0xf]
      %v613 = vld [vmem:[%s1 + $0xdc] sm:$0xf]
      %v614 = vld [vmem:[%s1 + $0xe0] sm:$0xf]
      %v615 = vld [vmem:[%s1 + $0xe4] sm:$0xf]
      %v616 = vld [vmem:[%s1 + $0xe8] sm:$0xf]
      %v617 = vld [vmem:[%s1 + $0xec] sm:$0xf]
      %v618 = vld [vmem:[%s1 + $0xf0] sm:$0xf]
      %v619 = vld [vmem:[%s1 + $0xf4] sm:$0xf]
      %v620 = vld [vmem:[%s1 + $0xf8] sm:$0xf]
      %v621 = vld [vmem:[%s1 + $0xfc] sm:$0xf]
      %v622 = vld [vmem:[%s1 + $0x100] sm:$0xf]
      %v623 = vld [vmem:[%s1 + $0x104] sm:$0xf]
      %v624 = vld [vmem:[%s1 + $0x108] sm:$0xf]
      %v625 = vld [vmem:[%s1 + $0x10c] sm:$0xf]
      %v626 = vld [vmem:[%s1 + $0x110] sm:$0xf]
      %v627 = vld [vmem:[%s1 + $0x114] sm:$0xf]
      %v628 = vld [vmem:[%s1 + $0x118] sm:$0xf]
      %v629 = vld [vmem:[%s1 + $0x11c] sm:$0xf]
      %v630 = vld [vmem:[%s1 + $0x120] sm:$0xf]
      %v631 = vld [vmem:[%s1 + $0x124] sm:$0xf]
      %v632 = vld [vmem:[%s1 + $0x128] sm:$0xf]
      %v633 = vld [vmem:[%s1 + $0x12c] sm:$0xf]
      %v634 = vld [vmem:[%s1 + $0x130] sm:$0xf]
      %v635 = vld [vmem:[%s1 + $0x134] sm:$0xf]
      %v636 = vld [vmem:[%s1 + $0x138] sm:$0xf]
      %v637 = vld [vmem:[%s1 + $0x13c] sm:$0xf]
      %v638 = vld [vmem:[%s1 + $0x140] sm:$0xf]
      %v639 = vld [vmem:[%s1 + $0x144] sm:$0xf]
      %v640 = vld [vmem:[%s1 + $0x148] sm:$0xf]
      %v641 = vld [vmem:[%s1 + $0x14c] sm:$0xf]
      %v642 = vld [vmem:[%s1 + $0x150] sm:$0xf]
      %v643 = vld [vmem:[%s1 + $0x154] sm:$0xf]
      %v644 = vld [vmem:[%s1 + $0x158] sm:$0xf]
      %v645 = vld [vmem:[%s1 + $0x15c] sm:$0xf]
      %v646 = vld [vmem:[%s1 + $0x160] sm:$0xf]
      %v647 = vld [vmem:[%s1 + $0x164] sm:$0xf]
      %v648 = vld [vmem:[%s1 + $0x168] sm:$0xf]
      %v649 = vld [vmem:[%s1 + $0x16c] sm:$0xf]
      %v650 = vld [vmem:[%s1 + $0x170] sm:$0xf]
      %v651 = vld [vmem:[%s1 + $0x174] sm:$0xf]
      %v652 = vld [vmem:[%s1 + $0x178] sm:$0xf]
      %v653 = vld [vmem:[%s1 + $0x17c] sm:$0xf]
      %v654 = vld [vmem:[%s1 + $0x180] sm:$0xf]
      %v655 = vld [vmem:[%s1 + $0x184] sm:$0xf]
      %v656 = vld [vmem:[%s1 + $0x188] sm:$0xf]
      %v657 = vld [vmem:[%s1 + $0x18c] sm:$0xf]
      %v658 = vld [vmem:[%s1 + $0x190] sm:$0xf]
      %v659 = vld [vmem:[%s1 + $0x194] sm:$0xf]
      %v660 = vld [vmem:[%s1 + $0x198] sm:$0xf]
      %v661 = vld [vmem:[%s1 + $0x19c] sm:$0xf]
      %v662 = vld [vmem:[%s1 + $0x1a0] sm:$0xf]
      %v663 = vld [vmem:[%s1 + $0x1a4] sm:$0xf]
      %v664 = vld [vmem:[%s1 + $0x1a8] sm:$0xf]
      %v665 = vld [vmem:[%s1 + $0x1ac] sm:$0xf]
      %v666 = vld [vmem:[%s1 + $0x1b0] sm:$0xf]
      %v667 = vld [vmem:[%s1 + $0x1b4] sm:$0xf]
      %v668 = vld [vmem:[%s1 + $0x1b8] sm:$0xf]
      %v669 = vld [vmem:[%s1 + $0x1bc] sm:$0xf]
      %v670 = vld [vmem:[%s1 + $0x1c0] sm:$0xf]
      %v671 = vld [vmem:[%s1 + $0x1c4] sm:$0xf]
      %v672 = vld [vmem:[%s1 + $0x1c8] sm:$0xf]
      %v673 = vld [vmem:[%s1 + $0x1cc] sm:$0xf]
      %v674 = vld [vmem:[%s1 + $0x1d0] sm:$0xf]
      %v675 = vld [vmem:[%s1 + $0x1d4] sm:$0xf]
      %v676 = vld [vmem:[%s1 + $0x1d8] sm:$0xf]
      %v677 = vld [vmem:[%s1 + $0x1dc] sm:$0xf]
      %v678 = vld [vmem:[%s1 + $0x1e0] sm:$0xf]
      %v679 = vld [vmem:[%s1 + $0x1e4] sm:$0xf]
      %v680 = vld [vmem:[%s1 + $0x1e8] sm:$0xf]
      %v681 = vld [vmem:[%s1 + $0x1ec] sm:$0xf]
      %v682 = vld [vmem:[%s1 + $0x1f0] sm:$0xf]
      %v683 = vld [vmem:[%s1 + $0x1f4] sm:$0xf]
      %v684 = vld [vmem:[%s1 + $0x1f8] sm:$0xf]
      %v685 = vld [vmem:[%s1 + $0x1fc] sm:$0xf]
      %v686 = vld [vmem:[%s2] sm:$0xff]
      %v687 = vld [vmem:[%s2 + $0x8] sm:$0xff]
      %v696 = vunpack.c.l.b16 %v550
      %v697 = vunpack.c.h.b16 %v550
      %v698 = vunpack.c.l.b16 %v551
      %v699 = vunpack.c.h.b16 %v551
      %v700 = vunpack.c.l.b16 %v552
      %v701 = vunpack.c.h.b16 %v552
      %v702 = vunpack.c.l.b16 %v553
      %v703 = vunpack.c.h.b16 %v553
      %v704 = vunpack.c.l.b16 %v554
      %v705 = vunpack.c.h.b16 %v554
      %v706 = vunpack.c.l.b16 %v555
      %v707 = vunpack.c.h.b16 %v555
      %v708 = vunpack.c.l.b16 %v556
      %v709 = vunpack.c.h.b16 %v556
      %v710 = vunpack.c.l.b16 %v557
      %v711 = vunpack.c.h.b16 %v557
      %v712 = vpack.c.b16 %v704, %v696
      %v713 = vpack.c.b16 %v705, %v697
      %v714 = vpack.c.b16 %v706, %v698
      %v715 = vpack.c.b16 %v707, %v699
      %v716 = vpack.c.b16 %v708, %v700
      %v717 = vpack.c.b16 %v709, %v701
      %v718 = vpack.c.b16 %v710, %v702
      %v719 = vpack.c.b16 %v711, %v703
      %v856 = vunpack.c.l.b16 %v558
      %v857 = vunpack.c.l.b16 %v559
      %v858 = vunpack.c.l.b16 %v560
      %v859 = vunpack.c.l.b16 %v561
      %v860 = vunpack.c.l.b16 %v562
      %v861 = vunpack.c.l.b16 %v563
      %v862 = vunpack.c.l.b16 %v564
      %v863 = vunpack.c.l.b16 %v565
      %v864 = vunpack.c.l.b16 %v566
      %v865 = vunpack.c.l.b16 %v567
      %v866 = vunpack.c.l.b16 %v568
      %v867 = vunpack.c.l.b16 %v569
      %v868 = vunpack.c.l.b16 %v570
      %v869 = vunpack.c.l.b16 %v571
      %v870 = vunpack.c.l.b16 %v572
      %v871 = vunpack.c.l.b16 %v573
      %v872 = vunpack.c.l.b16 %v574
      %v873 = vunpack.c.l.b16 %v575
      %v874 = vunpack.c.l.b16 %v576
      %v875 = vunpack.c.l.b16 %v577
      %v876 = vunpack.c.l.b16 %v578
      %v877 = vunpack.c.l.b16 %v579
      %v878 = vunpack.c.l.b16 %v580
      %v879 = vunpack.c.l.b16 %v581
      %v880 = vunpack.c.l.b16 %v582
      %v881 = vunpack.c.l.b16 %v583
      %v882 = vunpack.c.l.b16 %v584
      %v883 = vunpack.c.l.b16 %v585
      %v884 = vunpack.c.l.b16 %v586
      %v885 = vunpack.c.l.b16 %v587
      %v886 = vunpack.c.l.b16 %v588
      %v887 = vunpack.c.l.b16 %v589
      %v888 = vunpack.c.l.b16 %v590
      %v889 = vunpack.c.l.b16 %v591
      %v890 = vunpack.c.l.b16 %v592
      %v891 = vunpack.c.l.b16 %v593
      %v892 = vunpack.c.l.b16 %v594
      %v893 = vunpack.c.l.b16 %v595
      %v894 = vunpack.c.l.b16 %v596
      %v895 = vunpack.c.l.b16 %v597
      %v896 = vunpack.c.l.b16 %v598
      %v897 = vunpack.c.l.b16 %v599
      %v898 = vunpack.c.l.b16 %v600
      %v899 = vunpack.c.l.b16 %v601
      %v900 = vunpack.c.l.b16 %v602
      %v901 = vunpack.c.l.b16 %v603
      %v902 = vunpack.c.l.b16 %v604
      %v903 = vunpack.c.l.b16 %v605
      %v904 = vunpack.c.l.b16 %v606
      %v905 = vunpack.c.l.b16 %v607
      %v906 = vunpack.c.l.b16 %v608
      %v907 = vunpack.c.l.b16 %v609
      %v908 = vunpack.c.l.b16 %v610
      %v909 = vunpack.c.l.b16 %v611
      %v910 = vunpack.c.l.b16 %v612
      %v911 = vunpack.c.l.b16 %v613
      %v912 = vunpack.c.l.b16 %v614
      %v913 = vunpack.c.l.b16 %v615
      %v914 = vunpack.c.l.b16 %v616
      %v915 = vunpack.c.l.b16 %v617
      %v916 = vunpack.c.l.b16 %v618
      %v917 = vunpack.c.l.b16 %v619
      %v918 = vunpack.c.l.b16 %v620
      %v919 = vunpack.c.l.b16 %v621
      %v920 = vunpack.c.l.b16 %v622
      %v921 = vunpack.c.l.b16 %v623
      %v922 = vunpack.c.l.b16 %v624
      %v923 = vunpack.c.l.b16 %v625
      %v924 = vunpack.c.l.b16 %v626
      %v925 = vunpack.c.l.b16 %v627
      %v926 = vunpack.c.l.b16 %v628
      %v927 = vunpack.c.l.b16 %v629
      %v928 = vunpack.c.l.b16 %v630
      %v929 = vunpack.c.l.b16 %v631
      %v930 = vunpack.c.l.b16 %v632
      %v931 = vunpack.c.l.b16 %v633
      %v932 = vunpack.c.l.b16 %v634
      %v933 = vunpack.c.l.b16 %v635
      %v934 = vunpack.c.l.b16 %v636
      %v935 = vunpack.c.l.b16 %v637
      %v936 = vunpack.c.l.b16 %v638
      %v937 = vunpack.c.l.b16 %v639
      %v938 = vunpack.c.l.b16 %v640
      %v939 = vunpack.c.l.b16 %v641
      %v940 = vunpack.c.l.b16 %v642
      %v941 = vunpack.c.l.b16 %v643
      %v942 = vunpack.c.l.b16 %v644
      %v943 = vunpack.c.l.b16 %v645
      %v944 = vunpack.c.l.b16 %v646
      %v945 = vunpack.c.l.b16 %v647
      %v946 = vunpack.c.l.b16 %v648
      %v947 = vunpack.c.l.b16 %v649
      %v948 = vunpack.c.l.b16 %v650
      %v949 = vunpack.c.l.b16 %v651
      %v950 = vunpack.c.l.b16 %v652
      %v951 = vunpack.c.l.b16 %v653
      %v952 = vunpack.c.l.b16 %v654
      %v953 = vunpack.c.l.b16 %v655
      %v954 = vunpack.c.l.b16 %v656
      %v955 = vunpack.c.l.b16 %v657
      %v956 = vunpack.c.l.b16 %v658
      %v957 = vunpack.c.l.b16 %v659
      %v958 = vunpack.c.l.b16 %v660
      %v959 = vunpack.c.l.b16 %v661
      %v960 = vunpack.c.l.b16 %v662
      %v961 = vunpack.c.l.b16 %v663
      %v962 = vunpack.c.l.b16 %v664
      %v963 = vunpack.c.l.b16 %v665
      %v964 = vunpack.c.l.b16 %v666
      %v965 = vunpack.c.l.b16 %v667
      %v966 = vunpack.c.l.b16 %v668
      %v967 = vunpack.c.l.b16 %v669
      %v968 = vunpack.c.l.b16 %v670
      %v969 = vunpack.c.l.b16 %v671
      %v970 = vunpack.c.l.b16 %v672
      %v971 = vunpack.c.l.b16 %v673
      %v972 = vunpack.c.l.b16 %v674
      %v973 = vunpack.c.l.b16 %v675
      %v974 = vunpack.c.l.b16 %v676
      %v975 = vunpack.c.l.b16 %v677
      %v976 = vunpack.c.l.b16 %v678
      %v977 = vunpack.c.l.b16 %v679
      %v978 = vunpack.c.l.b16 %v680
      %v979 = vunpack.c.l.b16 %v681
      %v980 = vunpack.c.l.b16 %v682
      %v981 = vunpack.c.l.b16 %v683
      %v982 = vunpack.c.l.b16 %v684
      %v983 = vunpack.c.l.b16 %v685
      %v984 = vpack.c.b16 %v857, %v856
      %v985 = vpack.c.b16 %v859, %v858
      %v986 = vpack.c.b16 %v861, %v860
      %v987 = vpack.c.b16 %v863, %v862
      %v988 = vpack.c.b16 %v865, %v864
      %v989 = vpack.c.b16 %v867, %v866
      %v990 = vpack.c.b16 %v869, %v868
      %v991 = vpack.c.b16 %v871, %v870
      %v992 = vpack.c.b16 %v873, %v872
      %v993 = vpack.c.b16 %v875, %v874
      %v994 = vpack.c.b16 %v877, %v876
      %v995 = vpack.c.b16 %v879, %v878
      %v996 = vpack.c.b16 %v881, %v880
      %v997 = vpack.c.b16 %v883, %v882
      %v998 = vpack.c.b16 %v885, %v884
      %v999 = vpack.c.b16 %v887, %v886
      %v1000 = vpack.c.b16 %v889, %v888
      %v1001 = vpack.c.b16 %v891, %v890
      %v1002 = vpack.c.b16 %v893, %v892
      %v1003 = vpack.c.b16 %v895, %v894
      %v1004 = vpack.c.b16 %v897, %v896
      %v1005 = vpack.c.b16 %v899, %v898
      %v1006 = vpack.c.b16 %v901, %v900
      %v1007 = vpack.c.b16 %v903, %v902
      %v1008 = vpack.c.b16 %v905, %v904
      %v1009 = vpack.c.b16 %v907, %v906
      %v1010 = vpack.c.b16 %v909, %v908
      %v1011 = vpack.c.b16 %v911, %v910
      %v1012 = vpack.c.b16 %v913, %v912
      %v1013 = vpack.c.b16 %v915, %v914
      %v1014 = vpack.c.b16 %v917, %v916
      %v1015 = vpack.c.b16 %v919, %v918
      %v1016 = vpack.c.b16 %v921, %v920
      %v1017 = vpack.c.b16 %v923, %v922
      %v1018 = vpack.c.b16 %v925, %v924
      %v1019 = vpack.c.b16 %v927, %v926
      %v1020 = vpack.c.b16 %v929, %v928
      %v1021 = vpack.c.b16 %v931, %v930
      %v1022 = vpack.c.b16 %v933, %v932
      %v1023 = vpack.c.b16 %v935, %v934
      %v1024 = vpack.c.b16 %v937, %v936
      %v1025 = vpack.c.b16 %v939, %v938
      %v1026 = vpack.c.b16 %v941, %v940
      %v1027 = vpack.c.b16 %v943, %v942
      %v1028 = vpack.c.b16 %v945, %v944
      %v1029 = vpack.c.b16 %v947, %v946
      %v1030 = vpack.c.b16 %v949, %v948
      %v1031 = vpack.c.b16 %v951, %v950
      %v1032 = vpack.c.b16 %v953, %v952
      %v1033 = vpack.c.b16 %v955, %v954
      %v1034 = vpack.c.b16 %v957, %v956
      %v1035 = vpack.c.b16 %v959, %v958
      %v1036 = vpack.c.b16 %v961, %v960
      %v1037 = vpack.c.b16 %v963, %v962
      %v1038 = vpack.c.b16 %v965, %v964
      %v1039 = vpack.c.b16 %v967, %v966
      %v1040 = vpack.c.b16 %v969, %v968
      %v1041 = vpack.c.b16 %v971, %v970
      %v1042 = vpack.c.b16 %v973, %v972
      %v1043 = vpack.c.b16 %v975, %v974
      %v1044 = vpack.c.b16 %v977, %v976
      %v1045 = vpack.c.b16 %v979, %v978
      %v1046 = vpack.c.b16 %v981, %v980
      %v1047 = vpack.c.b16 %v983, %v982
      %1112 = vmatpush.bf16.msra.mxu0 %v991
      %1113 = vmatpush.bf16.msra.mxu0 %v990
      %1114 = vmatpush.bf16.msra.mxu0 %v989
      %1115 = vmatpush.bf16.msra.mxu0 %v988
      %1116 = vmatpush.bf16.msra.mxu0 %v987
      %1117 = vmatpush.bf16.msra.mxu0 %v986
      %1118 = vmatpush.bf16.msra.mxu0 %v985
      %1119 = vmatpush.bf16.msra.mxu0 %v984
      %1120 = vmatmul.bf16.gmra.mxu0 %v712
      %v1121 = vpop.f32.mrf.mxu0
      %v1122 = vadd.f32 %v686, %v1121
      %v1123 = vpop.f32.mrf.mxu0
      %v1124 = vadd.f32 %v687, %v1123
      %1125 = vdwg.mxu0
      %1126 = vmatpush.bf16.msra.mxu0 %v999
      %1127 = vmatpush.bf16.msra.mxu0 %v998
      %1128 = vmatpush.bf16.msra.mxu0 %v997
      %1129 = vmatpush.bf16.msra.mxu0 %v996
      %1130 = vmatpush.bf16.msra.mxu0 %v995
      %1131 = vmatpush.bf16.msra.mxu0 %v994
      %1132 = vmatpush.bf16.msra.mxu0 %v993
      %1133 = vmatpush.bf16.msra.mxu0 %v992
      %1134 = vmatmul.bf16.gmra.mxu0 %v713
      %v1135 = vpop.f32.mrf.mxu0
      %v1136 = vadd.f32 %v1122, %v1135
      %v1137 = vpop.f32.mrf.mxu0
      %v1138 = vadd.f32 %v1124, %v1137
      %1139 = vdwg.mxu0
      %1140 = vmatpush.bf16.msra.mxu0 %v1007
      %1141 = vmatpush.bf16.msra.mxu0 %v1006
      %1142 = vmatpush.bf16.msra.mxu0 %v1005
      %1143 = vmatpush.bf16.msra.mxu0 %v1004
      %1144 = vmatpush.bf16.msra.mxu0 %v1003
      %1145 = vmatpush.bf16.msra.mxu0 %v1002
      %1146 = vmatpush.bf16.msra.mxu0 %v1001
      %1147 = vmatpush.bf16.msra.mxu0 %v1000
      %1148 = vmatmul.bf16.gmra.mxu0 %v714
      %v1149 = vpop.f32.mrf.mxu0
      %v1150 = vadd.f32 %v1136, %v1149
      %v1151 = vpop.f32.mrf.mxu0
      %v1152 = vadd.f32 %v1138, %v1151
      %1153 = vdwg.mxu0
      %1154 = vmatpush.bf16.msra.mxu0 %v1015
      %1155 = vmatpush.bf16.msra.mxu0 %v1014
      %1156 = vmatpush.bf16.msra.mxu0 %v1013
      %1157 = vmatpush.bf16.msra.mxu0 %v1012
      %1158 = vmatpush.bf16.msra.mxu0 %v1011
      %1159 = vmatpush.bf16.msra.mxu0 %v1010
      %1160 = vmatpush.bf16.msra.mxu0 %v1009
      %1161 = vmatpush.bf16.msra.mxu0 %v1008
      %1162 = vmatmul.bf16.gmra.mxu0 %v715
      %v1163 = vpop.f32.mrf.mxu0
      %v1164 = vadd.f32 %v1150, %v1163
      %v1165 = vpop.f32.mrf.mxu0
      %v1166 = vadd.f32 %v1152, %v1165
      %1167 = vdwg.mxu0
      %1168 = vmatpush.bf16.msra.mxu0 %v1023
      %1169 = vmatpush.bf16.msra.mxu0 %v1022
      %1170 = vmatpush.bf16.msra.mxu0 %v1021
      %1171 = vmatpush.bf16.msra.mxu0 %v1020
      %1172 = vmatpush.bf16.msra.mxu0 %v1019
      %1173 = vmatpush.bf16.msra.mxu0 %v1018
      %1174 = vmatpush.bf16.msra.mxu0 %v1017
      %1175 = vmatpush.bf16.msra.mxu0 %v1016
      %1176 = vmatmul.bf16.gmra.mxu0 %v716
      %v1177 = vpop.f32.mrf.mxu0
      %v1178 = vadd.f32 %v1164, %v1177
      %v1179 = vpop.f32.mrf.mxu0
      %v1180 = vadd.f32 %v1166, %v1179
      %1181 = vdwg.mxu0
      %1182 = vmatpush.bf16.msra.mxu0 %v1031
      %1183 = vmatpush.bf16.msra.mxu0 %v1030
      %1184 = vmatpush.bf16.msra.mxu0 %v1029
      %1185 = vmatpush.bf16.msra.mxu0 %v1028
      %1186 = vmatpush.bf16.msra.mxu0 %v1027
      %1187 = vmatpush.bf16.msra.mxu0 %v1026
      %1188 = vmatpush.bf16.msra.mxu0 %v1025
      %1189 = vmatpush.bf16.msra.mxu0 %v1024
      %1190 = vmatmul.bf16.gmra.mxu0 %v717
      %v1191 = vpop.f32.mrf.mxu0
      %v1192 = vadd.f32 %v1178, %v1191
      %v1193 = vpop.f32.mrf.mxu0
      %v1194 = vadd.f32 %v1180, %v1193
      %1195 = vdwg.mxu0
      %1196 = vmatpush.bf16.msra.mxu0 %v1039
      %1197 = vmatpush.bf16.msra.mxu0 %v1038
      %1198 = vmatpush.bf16.msra.mxu0 %v1037
      %1199 = vmatpush.bf16.msra.mxu0 %v1036
      %1200 = vmatpush.bf16.msra.mxu0 %v1035
      %1201 = vmatpush.bf16.msra.mxu0 %v1034
      %1202 = vmatpush.bf16.msra.mxu0 %v1033
      %1203 = vmatpush.bf16.msra.mxu0 %v1032
      %1204 = vmatmul.bf16.gmra.mxu0 %v718
      %v1205 = vpop.f32.mrf.mxu0
      %v1206 = vadd.f32 %v1192, %v1205
      %v1207 = vpop.f32.mrf.mxu0
      %v1208 = vadd.f32 %v1194, %v1207
      %1209 = vdwg.mxu0
      %1210 = vmatpush.bf16.msra.mxu0 %v1047
      %1211 = vmatpush.bf16.msra.mxu0 %v1046
      %1212 = vmatpush.bf16.msra.mxu0 %v1045
      %1213 = vmatpush.bf16.msra.mxu0 %v1044
      %1214 = vmatpush.bf16.msra.mxu0 %v1043
      %1215 = vmatpush.bf16.msra.mxu0 %v1042
      %1216 = vmatpush.bf16.msra.mxu0 %v1041
      %1217 = vmatpush.bf16.msra.mxu0 %v1040
      %1218 = vmatmul.bf16.gmra.mxu0 %v719
      %v1219 = vpop.f32.mrf.mxu0
      %v1220 = vadd.f32 %v1206, %v1219
      %v1221 = vpop.f32.mrf.mxu0
      %v1222 = vadd.f32 %v1208, %v1221
      %1223 = vdwg.mxu0
      %v1224 = vld [vmem:[%s11] sm:$0x1]
      %v1225 = vld [vmem:[%s12] sm:$0x1]
      %1226 = vadd.xlane.f32.xlu0 %v1220
      %v1227 = vpop.xlane.xlu0 %1226
      %1228 = vadd.xlane.f32.xlu0 %v1222
      %v1229 = vpop.xlane.xlu0 %1228
      %v1230 = vrcp.pop 128.0
      %v1231 = vmul.f32 128.0, %v1230
      %v1232 = vsub.f32 1.0, %v1231
      %v1233 = vmul.f32 %v1230, %v1232
      %v1234 = vadd.f32 %v1230, %v1233
      %vm1235 = vweird.f32 %v1230
      %v1236 = vsel %vm1235, %v1230, %v1234
      %v1237 = vmul.f32 %v1227, %v1236
      %v1238 = vmul.f32 %v1229, %v1236
      %v1239 = vsub.f32 %v1220, %v1237
      %v1240 = vsub.f32 %v1222, %v1238
      %v1241 = vmul.f32 %v1239, %v1239
      %v1242 = vmul.f32 %v1240, %v1240
      %1243 = vadd.xlane.f32.xlu0 %v1241
      %v1244 = vpop.xlane.xlu0 %1243
      %1245 = vadd.xlane.f32.xlu0 %v1242
      %v1246 = vpop.xlane.xlu0 %1245
      %v1247 = vmul.f32 %v1244, %v1236
      %v1248 = vmul.f32 %v1246, %v1236
      %v1249 = vadd.f32 %v1247, 1e-05
      %v1250 = vadd.f32 %v1248, 1e-05
      %v1251 = vrsqrt.pop %v1249
      %v1252 = vmul.f32 %v1251, %v1249
      %v1253 = vmul.f32 %v1252, %v1251
      %v1254 = vmul.f32 0.5, %v1253
      %v1255 = vsub.f32 1.5, %v1254
      %v1256 = vmul.f32 %v1251, %v1255
      %vm1257 = vweird.f32 %v1249
      %vm1258 = vweird.f32 %v1251
      %vm1259 = vmor %vm1257, %vm1258
      %v1260 = vsel %vm1259, %v1251, %v1256
      %v1261 = vrsqrt.pop %v1250
      %v1262 = vmul.f32 %v1261, %v1250
      %v1263 = vmul.f32 %v1262, %v1261
      %v1264 = vmul.f32 0.5, %v1263
      %v1265 = vsub.f32 1.5, %v1264
      %v1266 = vmul.f32 %v1261, %v1265
      %vm1267 = vweird.f32 %v1250
      %vm1268 = vweird.f32 %v1261
      %vm1269 = vmor %vm1267, %vm1268
      %v1270 = vsel %vm1269, %v1261, %v1266
      %v1271 = vmul.f32 %v1239, %v1260
      %v1272 = vmul.f32 %v1240, %v1270
      %v1274 = vperm.slane %v1224, 0
      %v1276 = vmul.f32 %v1271, %v1274
      %v1277 = vmul.f32 %v1272, %v1274
      %v1279 = vperm.slane %v1225, 0
      %v1281 = vadd.f32 %v1276, %v1279
      %v1282 = vadd.f32 %v1277, %v1279
      %v1283 = vpack.c.bf16 %v1282, %v1281
      %v1284 = vld [vmem:[%s3] sm:$0xff]
      %v1285 = vld [vmem:[%s3 + $0x8] sm:$0xf]
      %v1286 = vld [vmem:[%s3 + $0xc] sm:$0xff]
      %v1287 = vld [vmem:[%s3 + $0x14] sm:$0xf]
      %v1288 = vld [vmem:[%s3 + $0x18] sm:$0xff]
      %v1289 = vld [vmem:[%s3 + $0x20] sm:$0xf]
      %v1290 = vld [vmem:[%s3 + $0x24] sm:$0xff]
      %v1291 = vld [vmem:[%s3 + $0x2c] sm:$0xf]
      %v1292 = vld [vmem:[%s3 + $0x30] sm:$0xff]
      %v1293 = vld [vmem:[%s3 + $0x38] sm:$0xf]
      %v1294 = vld [vmem:[%s3 + $0x3c] sm:$0xff]
      %v1295 = vld [vmem:[%s3 + $0x44] sm:$0xf]
      %v1296 = vld [vmem:[%s3 + $0x48] sm:$0xff]
      %v1297 = vld [vmem:[%s3 + $0x50] sm:$0xf]
      %v1298 = vld [vmem:[%s3 + $0x54] sm:$0xff]
      %v1299 = vld [vmem:[%s3 + $0x5c] sm:$0xf]
      %v1300 = vld [vmem:[%s3 + $0x60] sm:$0xff]
      %v1301 = vld [vmem:[%s3 + $0x68] sm:$0xf]
      %v1302 = vld [vmem:[%s3 + $0x6c] sm:$0xff]
      %v1303 = vld [vmem:[%s3 + $0x74] sm:$0xf]
      %v1304 = vld [vmem:[%s3 + $0x78] sm:$0xff]
      %v1305 = vld [vmem:[%s3 + $0x80] sm:$0xf]
      %v1306 = vld [vmem:[%s3 + $0x84] sm:$0xff]
      %v1307 = vld [vmem:[%s3 + $0x8c] sm:$0xf]
      %v1308 = vld [vmem:[%s3 + $0x90] sm:$0xff]
      %v1309 = vld [vmem:[%s3 + $0x98] sm:$0xf]
      %v1310 = vld [vmem:[%s3 + $0x9c] sm:$0xff]
      %v1311 = vld [vmem:[%s3 + $0xa4] sm:$0xf]
      %v1312 = vld [vmem:[%s3 + $0xa8] sm:$0xff]
      %v1313 = vld [vmem:[%s3 + $0xb0] sm:$0xf]
      %v1314 = vld [vmem:[%s3 + $0xb4] sm:$0xff]
      %v1315 = vld [vmem:[%s3 + $0xbc] sm:$0xf]
      %v1316 = vld [vmem:[%s4] sm:$0x7]
      %v1318 = vperm.slane %v1316, 0
      %v1319 = vperm.slane %v1316, 1
      %v1320 = vperm.slane %v1316, 2
      %v1356 = vunpack.c.l.b16 %v1284
      %v1357 = vunpack.c.h.b16 %v1284
      %v1358 = vunpack.c.l.b16 %v1285
      %v1359 = vunpack.c.l.b16 %v1286
      %v1360 = vunpack.c.h.b16 %v1286
      %v1361 = vunpack.c.l.b16 %v1287
      %v1362 = vunpack.c.l.b16 %v1288
      %v1363 = vunpack.c.h.b16 %v1288
      %v1364 = vunpack.c.l.b16 %v1289
      %v1365 = vunpack.c.l.b16 %v1290
      %v1366 = vunpack.c.h.b16 %v1290
      %v1367 = vunpack.c.l.b16 %v1291
      %v1368 = vunpack.c.l.b16 %v1292
      %v1369 = vunpack.c.h.b16 %v1292
      %v1370 = vunpack.c.l.b16 %v1293
      %v1371 = vunpack.c.l.b16 %v1294
      %v1372 = vunpack.c.h.b16 %v1294
      %v1373 = vunpack.c.l.b16 %v1295
      %v1374 = vunpack.c.l.b16 %v1296
      %v1375 = vunpack.c.h.b16 %v1296
      %v1376 = vunpack.c.l.b16 %v1297
      %v1377 = vunpack.c.l.b16 %v1298
      %v1378 = vunpack.c.h.b16 %v1298
      %v1379 = vunpack.c.l.b16 %v1299
      %v1380 = vunpack.c.l.b16 %v1300
      %v1381 = vunpack.c.h.b16 %v1300
      %v1382 = vunpack.c.l.b16 %v1301
      %v1383 = vunpack.c.l.b16 %v1302
      %v1384 = vunpack.c.h.b16 %v1302
      %v1385 = vunpack.c.l.b16 %v1303
      %v1386 = vunpack.c.l.b16 %v1304
      %v1387 = vunpack.c.h.b16 %v1304
      %v1388 = vunpack.c.l.b16 %v1305
      %v1389 = vunpack.c.l.b16 %v1306
      %v1390 = vunpack.c.h.b16 %v1306
      %v1391 = vunpack.c.l.b16 %v1307
      %v1392 = vunpack.c.l.b16 %v1308
      %v1393 = vunpack.c.h.b16 %v1308
      %v1394 = vunpack.c.l.b16 %v1309
      %v1395 = vunpack.c.l.b16 %v1310
      %v1396 = vunpack.c.h.b16 %v1310
      %v1397 = vunpack.c.l.b16 %v1311
      %v1398 = vunpack.c.l.b16 %v1312
      %v1399 = vunpack.c.h.b16 %v1312
      %v1400 = vunpack.c.l.b16 %v1313
      %v1401 = vunpack.c.l.b16 %v1314
      %v1402 = vunpack.c.h.b16 %v1314
      %v1403 = vunpack.c.l.b16 %v1315
      %v1404 = vpack.c.b16 %v1359, %v1356
      %v1405 = vpack.c.b16 %v1360, %v1357
      %v1406 = vpack.c.b16 %v1361, %v1358
      %v1407 = vpack.c.b16 %v1365, %v1362
      %v1408 = vpack.c.b16 %v1366, %v1363
      %v1409 = vpack.c.b16 %v1367, %v1364
      %v1410 = vpack.c.b16 %v1371, %v1368
      %v1411 = vpack.c.b16 %v1372, %v1369
      %v1412 = vpack.c.b16 %v1373, %v1370
      %v1413 = vpack.c.b16 %v1377, %v1374
      %v1414 = vpack.c.b16 %v1378, %v1375
      %v1415 = vpack.c.b16 %v1379, %v1376
      %v1416 = vpack.c.b16 %v1383, %v1380
      %v1417 = vpack.c.b16 %v1384, %v1381
      %v1418 = vpack.c.b16 %v1385, %v1382
      %v1419 = vpack.c.b16 %v1389, %v1386
      %v1420 = vpack.c.b16 %v1390, %v1387
      %v1421 = vpack.c.b16 %v1391, %v1388
      %v1422 = vpack.c.b16 %v1395, %v1392
      %v1423 = vpack.c.b16 %v1396, %v1393
      %v1424 = vpack.c.b16 %v1397, %v1394
      %v1425 = vpack.c.b16 %v1401, %v1398
      %v1426 = vpack.c.b16 %v1402, %v1399
      %v1427 = vpack.c.b16 %v1403, %v1400
      %1452 = vmatpush.bf16.msra.mxu0 %v1425
      %1453 = vmatpush.bf16.msra.mxu0 %v1422
      %1454 = vmatpush.bf16.msra.mxu0 %v1419
      %1455 = vmatpush.bf16.msra.mxu0 %v1416
      %1456 = vmatpush.bf16.msra.mxu0 %v1413
      %1457 = vmatpush.bf16.msra.mxu0 %v1410
      %1458 = vmatpush.bf16.msra.mxu0 %v1407
      %1459 = vmatpush.bf16.msra.mxu0 %v1404
      %1460 = vmatmul.bf16.gmra.mxu0 %v1283
      %v1461 = vpop.f32.mrf.mxu0
      %v1462 = vadd.f32 %v1318, %v1461
      %v1463 = vpop.f32.mrf.mxu0
      %v1464 = vadd.f32 %v1318, %v1463
      %1465 = vdwg.mxu0
      %1466 = vmatpush.bf16.msra.mxu0 %v1426
      %1467 = vmatpush.bf16.msra.mxu0 %v1423
      %1468 = vmatpush.bf16.msra.mxu0 %v1420
      %1469 = vmatpush.bf16.msra.mxu0 %v1417
      %1470 = vmatpush.bf16.msra.mxu0 %v1414
      %1471 = vmatpush.bf16.msra.mxu0 %v1411
      %1472 = vmatpush.bf16.msra.mxu0 %v1408
      %1473 = vmatpush.bf16.msra.mxu0 %v1405
      %1474 = vmatmul.bf16.gmra.mxu0 %v1283
      %v1475 = vpop.f32.mrf.mxu0
      %v1476 = vadd.f32 %v1319, %v1475
      %v1477 = vpop.f32.mrf.mxu0
      %v1478 = vadd.f32 %v1319, %v1477
      %1479 = vdwg.mxu0
      %1480 = vmatpush.bf16.msra.mxu0 %v1427
      %1481 = vmatpush.bf16.msra.mxu0 %v1424
      %1482 = vmatpush.bf16.msra.mxu0 %v1421
      %1483 = vmatpush.bf16.msra.mxu0 %v1418
      %1484 = vmatpush.bf16.msra.mxu0 %v1415
      %1485 = vmatpush.bf16.msra.mxu0 %v1412
      %1486 = vmatpush.bf16.msra.mxu0 %v1409
      %1487 = vmatpush.bf16.msra.mxu0 %v1406
      %1488 = vmatmul.bf16.gmra.mxu0 %v1283
      %v1489 = vpop.f32.mrf.mxu0
      %v1490 = vadd.f32 %v1320, %v1489
      %v1491 = vpop.f32.mrf.mxu0
      %v1492 = vadd.f32 %v1320, %v1491
      %1493 = vdwg.mxu0
      %v1494 = vpack.c.bf16 %v1476, %v1462
      %v1495 = vpack.c.bf16 %v1490, %v1490
      %v1496 = vpack.c.bf16 %v1478, %v1464
      %v1497 = vpack.c.bf16 %v1492, %v1492
      %v1500 = vunpack.c.l.b16 %v1494
      %v1501 = vunpack.c.l.b16 %v1496
      %v1502 = vpack.c.b16 %v1501, %v1500
      %v1503 = vunpack.c.h.b16 %v1494
      %v1504 = vunpack.c.h.b16 %v1496
      %v1505 = vpack.c.b16 %v1504, %v1503
      %vm1506 = vcmask 261120
      %v1508 = vsel %vm1506, %v1502, 0
      %v1511 = vsel %vm1506, %v1505, 0
      %1513 = vmatpush.bf16.xpose.msra.mxu0 0
      %1514 = vmatpush.bf16.xpose.msra.mxu0 0
      %1515 = vmatpush.bf16.xpose.msra.mxu0 0
      %1516 = vmatpush.bf16.xpose.msra.mxu0 0
      %1517 = vmatpush.bf16.xpose.msra.mxu0 0
      %1518 = vmatpush.bf16.xpose.msra.mxu0 0
      %1519 = vmatpush.bf16.xpose.msra.mxu0 0
      %1520 = vmatpush.bf16.xpose.msra.mxu0 %v1511
      %1521 = vmatmul.bf16.gmra.mxu0 %v1508
      %v1522 = vpop.f32.mrf.mxu0
      %v1523 = vadd.f32 0.0, %v1522
      %v1524 = vpop.f32.mrf.mxu0
      %v1525 = vadd.f32 0.0, %v1524
      %1526 = vdwg.mxu0
      %1527 = vrot.lane.b32.xlu0 %v1502, 96
      %v1528 = vpop.permute.xlu0 %1527
      %1529 = vrot.lane.b32.xlu0 %v1505, 96
      %v1530 = vpop.permute.xlu0 %1529
      %v1532 = vsel %vm1506, %v1528, 0
      %v1535 = vsel %vm1506, %v1530, 0
      %1537 = vmatpush.bf16.xpose.msra.mxu0 0
      %1538 = vmatpush.bf16.xpose.msra.mxu0 0
      %1539 = vmatpush.bf16.xpose.msra.mxu0 0
      %1540 = vmatpush.bf16.xpose.msra.mxu0 0
      %1541 = vmatpush.bf16.xpose.msra.mxu0 0
      %1542 = vmatpush.bf16.xpose.msra.mxu0 0
      %1543 = vmatpush.bf16.xpose.msra.mxu0 0
      %1544 = vmatpush.bf16.xpose.msra.mxu0 %v1535
      %1545 = vmatmul.bf16.gmra.mxu0 %v1532
      %v1546 = vpop.f32.mrf.mxu0
      %v1547 = vadd.f32 0.0, %v1546
      %v1548 = vpop.f32.mrf.mxu0
      %v1549 = vadd.f32 0.0, %v1548
      %1550 = vdwg.mxu0
      %1551 = vrot.lane.b32.xlu0 %v1502, 64
      %v1552 = vpop.permute.xlu0 %1551
      %1553 = vrot.lane.b32.xlu0 %v1505, 64
      %v1554 = vpop.permute.xlu0 %1553
      %v1556 = vsel %vm1506, %v1552, 0
      %v1559 = vsel %vm1506, %v1554, 0
      %1561 = vmatpush.bf16.xpose.msra.mxu0 0
      %1562 = vmatpush.bf16.xpose.msra.mxu0 0
      %1563 = vmatpush.bf16.xpose.msra.mxu0 0
      %1564 = vmatpush.bf16.xpose.msra.mxu0 0
      %1565 = vmatpush.bf16.xpose.msra.mxu0 0
      %1566 = vmatpush.bf16.xpose.msra.mxu0 0
      %1567 = vmatpush.bf16.xpose.msra.mxu0 0
      %1568 = vmatpush.bf16.xpose.msra.mxu0 %v1559
      %1569 = vmatmul.bf16.gmra.mxu0 %v1556
      %v1570 = vpop.f32.mrf.mxu0
      %v1571 = vadd.f32 0.0, %v1570
      %v1572 = vpop.f32.mrf.mxu0
      %v1573 = vadd.f32 0.0, %v1572
      %1574 = vdwg.mxu0
      %1575 = vrot.lane.b32.xlu0 %v1502, 32
      %v1576 = vpop.permute.xlu0 %1575
      %1577 = vrot.lane.b32.xlu0 %v1505, 32
      %v1578 = vpop.permute.xlu0 %1577
      %v1580 = vsel %vm1506, %v1576, 0
      %v1583 = vsel %vm1506, %v1578, 0
      %1585 = vmatpush.bf16.xpose.msra.mxu0 0
      %1586 = vmatpush.bf16.xpose.msra.mxu0 0
      %1587 = vmatpush.bf16.xpose.msra.mxu0 0
      %1588 = vmatpush.bf16.xpose.msra.mxu0 0
      %1589 = vmatpush.bf16.xpose.msra.mxu0 0
      %1590 = vmatpush.bf16.xpose.msra.mxu0 0
      %1591 = vmatpush.bf16.xpose.msra.mxu0 0
      %1592 = vmatpush.bf16.xpose.msra.mxu0 %v1583
      %1593 = vmatmul.bf16.gmra.mxu0 %v1580
      %v1594 = vpop.f32.mrf.mxu0
      %v1595 = vadd.f32 0.0, %v1594
      %v1596 = vpop.f32.mrf.mxu0
      %v1597 = vadd.f32 0.0, %v1596
      %1598 = vdwg.mxu0
      %vm1599 = vcmask 130048
      %v1600 = vsel %vm1599, %v1523, -inf
      %1601 = vmax.xlane.f32.xlu0 %v1600
      %v1602 = vpop.xlane.xlu0 %1601
      %v1603 = vsel %vm1599, %v1525, -inf
      %1604 = vmax.xlane.f32.xlu0 %v1603
      %v1605 = vpop.xlane.xlu0 %1604
      %v1606 = vsel %vm1599, %v1547, -inf
      %1607 = vmax.xlane.f32.xlu0 %v1606
      %v1608 = vpop.xlane.xlu0 %1607
      %v1609 = vsel %vm1599, %v1549, -inf
      %1610 = vmax.xlane.f32.xlu0 %v1609
      %v1611 = vpop.xlane.xlu0 %1610
      %v1612 = vsel %vm1599, %v1571, -inf
      %1613 = vmax.xlane.f32.xlu0 %v1612
      %v1614 = vpop.xlane.xlu0 %1613
      %v1615 = vsel %vm1599, %v1573, -inf
      %1616 = vmax.xlane.f32.xlu0 %v1615
      %v1617 = vpop.xlane.xlu0 %1616
      %v1618 = vsel %vm1599, %v1595, -inf
      %1619 = vmax.xlane.f32.xlu0 %v1618
      %v1620 = vpop.xlane.xlu0 %1619
      %v1621 = vsel %vm1599, %v1597, -inf
      %1622 = vmax.xlane.f32.xlu0 %v1621
      %v1623 = vpop.xlane.xlu0 %1622
      %v1624 = vsub.f32 %v1523, %v1602
      %v1625 = vsub.f32 %v1525, %v1605
      %v1626 = vsub.f32 %v1547, %v1608
      %v1627 = vsub.f32 %v1549, %v1611
      %v1628 = vsub.f32 %v1571, %v1614
      %v1629 = vsub.f32 %v1573, %v1617
      %v1630 = vsub.f32 %v1595, %v1620
      %v1631 = vsub.f32 %v1597, %v1623
      %v1632 = vmul.f32 %v1624, 1.442695
      %v1633 = vpow.pop %v1632
      %v1634 = vmul.f32 %v1625, 1.442695
      %v1635 = vpow.pop %v1634
      %v1636 = vmul.f32 %v1626, 1.442695
      %v1637 = vpow.pop %v1636
      %v1638 = vmul.f32 %v1627, 1.442695
      %v1639 = vpow.pop %v1638
      %v1640 = vmul.f32 %v1628, 1.442695
      %v1641 = vpow.pop %v1640
      %v1642 = vmul.f32 %v1629, 1.442695
      %v1643 = vpow.pop %v1642
      %v1644 = vmul.f32 %v1630, 1.442695
      %v1645 = vpow.pop %v1644
      %v1646 = vmul.f32 %v1631, 1.442695
      %v1647 = vpow.pop %v1646
      %v1648 = vsel %vm1599, %v1633, 0.0
      %1649 = vadd.xlane.f32.xlu0 %v1648
      %v1650 = vpop.xlane.xlu0 %1649
      %v1651 = vsel %vm1599, %v1635, 0.0
      %1652 = vadd.xlane.f32.xlu0 %v1651
      %v1653 = vpop.xlane.xlu0 %1652
      %v1654 = vsel %vm1599, %v1637, 0.0
      %1655 = vadd.xlane.f32.xlu0 %v1654
      %v1656 = vpop.xlane.xlu0 %1655
      %v1657 = vsel %vm1599, %v1639, 0.0
      %1658 = vadd.xlane.f32.xlu0 %v1657
      %v1659 = vpop.xlane.xlu0 %1658
      %v1660 = vsel %vm1599, %v1641, 0.0
      %1661 = vadd.xlane.f32.xlu0 %v1660
      %v1662 = vpop.xlane.xlu0 %1661
      %v1663 = vsel %vm1599, %v1643, 0.0
      %1664 = vadd.xlane.f32.xlu0 %v1663
      %v1665 = vpop.xlane.xlu0 %1664
      %v1666 = vsel %vm1599, %v1645, 0.0
      %1667 = vadd.xlane.f32.xlu0 %v1666
      %v1668 = vpop.xlane.xlu0 %1667
      %v1669 = vsel %vm1599, %v1647, 0.0
      %1670 = vadd.xlane.f32.xlu0 %v1669
      %v1671 = vpop.xlane.xlu0 %1670
      %v1672 = vrcp.pop %v1650
      %v1673 = vmul.f32 %v1650, %v1672
      %v1674 = vsub.f32 1.0, %v1673
      %v1675 = vmul.f32 %v1672, %v1674
      %v1676 = vadd.f32 %v1672, %v1675
      %vm1677 = vweird.f32 %v1650
      %vm1678 = vweird.f32 %v1672
      %vm1679 = vmor %vm1677, %vm1678
      %v1680 = vsel %vm1679, %v1672, %v1676
      %v1681 = vand.u32 2147483647, %v1650
      %vm1682 = vcmp.eq.f32.partialorder %v1681, 8.507059e+37
      %v1683 = vand.u32 %v1650, 2147483648
      %v1684 = vor.u32 1.1754944e-38, %v1683
      %v1685 = vsel %vm1682, %v1684, %v1680
      %v1686 = vmul.f32 %v1633, %v1685
      %v1687 = vrcp.pop %v1653
      %v1688 = vmul.f32 %v1653, %v1687
      %v1689 = vsub.f32 1.0, %v1688
      %v1690 = vmul.f32 %v1687, %v1689
      %v1691 = vadd.f32 %v1687, %v1690
      %vm1692 = vweird.f32 %v1653
      %vm1693 = vweird.f32 %v1687
      %vm1694 = vmor %vm1692, %vm1693
      %v1695 = vsel %vm1694, %v1687, %v1691
      %v1696 = vand.u32 2147483647, %v1653
      %vm1697 = vcmp.eq.f32.partialorder %v1696, 8.507059e+37
      %v1698 = vand.u32 %v1653, 2147483648
      %v1699 = vor.u32 1.1754944e-38, %v1698
      %v1700 = vsel %vm1697, %v1699, %v1695
      %v1701 = vmul.f32 %v1635, %v1700
      %v1702 = vrcp.pop %v1656
      %v1703 = vmul.f32 %v1656, %v1702
      %v1704 = vsub.f32 1.0, %v1703
      %v1705 = vmul.f32 %v1702, %v1704
      %v1706 = vadd.f32 %v1702, %v1705
      %vm1707 = vweird.f32 %v1656
      %vm1708 = vweird.f32 %v1702
      %vm1709 = vmor %vm1707, %vm1708
      %v1710 = vsel %vm1709, %v1702, %v1706
      %v1711 = vand.u32 2147483647, %v1656
      %vm1712 = vcmp.eq.f32.partialorder %v1711, 8.507059e+37
      %v1713 = vand.u32 %v1656, 2147483648
      %v1714 = vor.u32 1.1754944e-38, %v1713
      %v1715 = vsel %vm1712, %v1714, %v1710
      %v1716 = vmul.f32 %v1637, %v1715
      %v1717 = vrcp.pop %v1659
      %v1718 = vmul.f32 %v1659, %v1717
      %v1719 = vsub.f32 1.0, %v1718
      %v1720 = vmul.f32 %v1717, %v1719
      %v1721 = vadd.f32 %v1717, %v1720
      %vm1722 = vweird.f32 %v1659
      %vm1723 = vweird.f32 %v1717
      %vm1724 = vmor %vm1722, %vm1723
      %v1725 = vsel %vm1724, %v1717, %v1721
      %v1726 = vand.u32 2147483647, %v1659
      %vm1727 = vcmp.eq.f32.partialorder %v1726, 8.507059e+37
      %v1728 = vand.u32 %v1659, 2147483648
      %v1729 = vor.u32 1.1754944e-38, %v1728
      %v1730 = vsel %vm1727, %v1729, %v1725
      %v1731 = vmul.f32 %v1639, %v1730
      %v1732 = vrcp.pop %v1662
      %v1733 = vmul.f32 %v1662, %v1732
      %v1734 = vsub.f32 1.0, %v1733
      %v1735 = vmul.f32 %v1732, %v1734
      %v1736 = vadd.f32 %v1732, %v1735
      %vm1737 = vweird.f32 %v1662
      %vm1738 = vweird.f32 %v1732
      %vm1739 = vmor %vm1737, %vm1738
      %v1740 = vsel %vm1739, %v1732, %v1736
      %v1741 = vand.u32 2147483647, %v1662
      %vm1742 = vcmp.eq.f32.partialorder %v1741, 8.507059e+37
      %v1743 = vand.u32 %v1662, 2147483648
      %v1744 = vor.u32 1.1754944e-38, %v1743
      %v1745 = vsel %vm1742, %v1744, %v1740
      %v1746 = vmul.f32 %v1641, %v1745
      %v1747 = vrcp.pop %v1665
      %v1748 = vmul.f32 %v1665, %v1747
      %v1749 = vsub.f32 1.0, %v1748
      %v1750 = vmul.f32 %v1747, %v1749
      %v1751 = vadd.f32 %v1747, %v1750
      %vm1752 = vweird.f32 %v1665
      %vm1753 = vweird.f32 %v1747
      %vm1754 = vmor %vm1752, %vm1753
      %v1755 = vsel %vm1754, %v1747, %v1751
      %v1756 = vand.u32 2147483647, %v1665
      %vm1757 = vcmp.eq.f32.partialorder %v1756, 8.507059e+37
      %v1758 = vand.u32 %v1665, 2147483648
      %v1759 = vor.u32 1.1754944e-38, %v1758
      %v1760 = vsel %vm1757, %v1759, %v1755
      %v1761 = vmul.f32 %v1643, %v1760
      %v1762 = vrcp.pop %v1668
      %v1763 = vmul.f32 %v1668, %v1762
      %v1764 = vsub.f32 1.0, %v1763
      %v1765 = vmul.f32 %v1762, %v1764
      %v1766 = vadd.f32 %v1762, %v1765
      %vm1767 = vweird.f32 %v1668
      %vm1768 = vweird.f32 %v1762
      %vm1769 = vmor %vm1767, %vm1768
      %v1770 = vsel %vm1769, %v1762, %v1766
      %v1771 = vand.u32 2147483647, %v1668
      %vm1772 = vcmp.eq.f32.partialorder %v1771, 8.507059e+37
      %v1773 = vand.u32 %v1668, 2147483648
      %v1774 = vor.u32 1.1754944e-38, %v1773
      %v1775 = vsel %vm1772, %v1774, %v1770
      %v1776 = vmul.f32 %v1645, %v1775
      %v1777 = vrcp.pop %v1671
      %v1778 = vmul.f32 %v1671, %v1777
      %v1779 = vsub.f32 1.0, %v1778
      %v1780 = vmul.f32 %v1777, %v1779
      %v1781 = vadd.f32 %v1777, %v1780
      %vm1782 = vweird.f32 %v1671
      %vm1783 = vweird.f32 %v1777
      %vm1784 = vmor %vm1782, %vm1783
      %v1785 = vsel %vm1784, %v1777, %v1781
      %v1786 = vand.u32 2147483647, %v1671
      %vm1787 = vcmp.eq.f32.partialorder %v1786, 8.507059e+37
      %v1788 = vand.u32 %v1671, 2147483648
      %v1789 = vor.u32 1.1754944e-38, %v1788
      %v1790 = vsel %vm1787, %v1789, %v1785
      %v1791 = vmul.f32 %v1647, %v1790
      %v1792 = vpack.c.bf16 %v1686, %v1686
      %v1793 = vpack.c.bf16 %v1701, %v1701
      %v1794 = vpack.c.bf16 %v1716, %v1716
      %v1795 = vpack.c.bf16 %v1731, %v1731
      %v1796 = vpack.c.bf16 %v1746, %v1746
      %v1797 = vpack.c.bf16 %v1761, %v1761
      %v1798 = vpack.c.bf16 %v1776, %v1776
      %v1799 = vpack.c.bf16 %v1791, %v1791
      %v1802 = vunpack.c.l.b16 %v1792
      %v1803 = vunpack.c.l.b16 %v1793
      %v1804 = vpack.c.b16 %v1803, %v1802
      %v1807 = vunpack.c.l.b16 %v1495
      %v1808 = vunpack.c.l.b16 %v1497
      %v1809 = vpack.c.b16 %v1808, %v1807
      %v1812 = vsel %vm1599, %v1804, 0
      %1814 = vmatpush.bf16.msra.mxu0 0
      %1815 = vmatpush.bf16.msra.mxu0 0
      %1816 = vmatpush.bf16.msra.mxu0 0
      %1817 = vmatpush.bf16.msra.mxu0 0
      %1818 = vmatpush.bf16.msra.mxu0 0
      %1819 = vmatpush.bf16.msra.mxu0 0
      %1820 = vmatpush.bf16.msra.mxu0 0
      %1821 = vmatpush.bf16.msra.mxu0 %v1809
      %1822 = vmatmul.bf16.gmra.mxu0 %v1812
      %v1823 = vpop.f32.mrf.mxu0
      %v1824 = vadd.f32 0.0, %v1823
      %v1825 = vpop.f32.mrf.mxu0
      %v1826 = vadd.f32 0.0, %v1825
      %1827 = vdwg.mxu0
      %v1830 = vunpack.c.l.b16 %v1794
      %v1831 = vunpack.c.l.b16 %v1795
      %v1832 = vpack.c.b16 %v1831, %v1830
      %1833 = vrot.lane.b32.xlu0 %v1809, 96
      %v1834 = vpop.permute.xlu0 %1833
      %v1837 = vsel %vm1599, %v1832, 0
      %1839 = vmatpush.bf16.msra.mxu0 0
      %1840 = vmatpush.bf16.msra.mxu0 0
      %1841 = vmatpush.bf16.msra.mxu0 0
      %1842 = vmatpush.bf16.msra.mxu0 0
      %1843 = vmatpush.bf16.msra.mxu0 0
      %1844 = vmatpush.bf16.msra.mxu0 0
      %1845 = vmatpush.bf16.msra.mxu0 0
      %1846 = vmatpush.bf16.msra.mxu0 %v1834
      %1847 = vmatmul.bf16.gmra.mxu0 %v1837
      %v1848 = vpop.f32.mrf.mxu0
      %v1849 = vadd.f32 0.0, %v1848
      %v1850 = vpop.f32.mrf.mxu0
      %v1851 = vadd.f32 0.0, %v1850
      %1852 = vdwg.mxu0
      %v1855 = vunpack.c.l.b16 %v1796
      %v1856 = vunpack.c.l.b16 %v1797
      %v1857 = vpack.c.b16 %v1856, %v1855
      %1858 = vrot.lane.b32.xlu0 %v1809, 64
      %v1859 = vpop.permute.xlu0 %1858
      %v1862 = vsel %vm1599, %v1857, 0
      %1864 = vmatpush.bf16.msra.mxu0 0
      %1865 = vmatpush.bf16.msra.mxu0 0
      %1866 = vmatpush.bf16.msra.mxu0 0
      %1867 = vmatpush.bf16.msra.mxu0 0
      %1868 = vmatpush.bf16.msra.mxu0 0
      %1869 = vmatpush.bf16.msra.mxu0 0
      %1870 = vmatpush.bf16.msra.mxu0 0
      %1871 = vmatpush.bf16.msra.mxu0 %v1859
      %1872 = vmatmul.bf16.gmra.mxu0 %v1862
      %v1873 = vpop.f32.mrf.mxu0
      %v1874 = vadd.f32 0.0, %v1873
      %v1875 = vpop.f32.mrf.mxu0
      %v1876 = vadd.f32 0.0, %v1875
      %1877 = vdwg.mxu0
      %v1880 = vunpack.c.l.b16 %v1798
      %v1881 = vunpack.c.l.b16 %v1799
      %v1882 = vpack.c.b16 %v1881, %v1880
      %1883 = vrot.lane.b32.xlu0 %v1809, 32
      %v1884 = vpop.permute.xlu0 %1883
      %v1887 = vsel %vm1599, %v1882, 0
      %1889 = vmatpush.bf16.msra.mxu0 0
      %1890 = vmatpush.bf16.msra.mxu0 0
      %1891 = vmatpush.bf16.msra.mxu0 0
      %1892 = vmatpush.bf16.msra.mxu0 0
      %1893 = vmatpush.bf16.msra.mxu0 0
      %1894 = vmatpush.bf16.msra.mxu0 0
      %1895 = vmatpush.bf16.msra.mxu0 0
      %1896 = vmatpush.bf16.msra.mxu0 %v1884
      %1897 = vmatmul.bf16.gmra.mxu0 %v1887
      %v1898 = vpop.f32.mrf.mxu0
      %v1899 = vadd.f32 0.0, %v1898
      %v1900 = vpop.f32.mrf.mxu0
      %v1901 = vadd.f32 0.0, %v1900
      %1902 = vdwg.mxu0
      %1905 = vrot.lane.b32.xlu0 %v1849, 32
      %v1906 = vpop.permute.xlu0 %1905
      %1907 = vrot.lane.b32.xlu0 %v1851, 32
      %v1908 = vpop.permute.xlu0 %1907
      %1913 = vrot.lane.b32.xlu0 %v1874, 64
      %v1914 = vpop.permute.xlu0 %1913
      %1915 = vrot.lane.b32.xlu0 %v1876, 64
      %v1916 = vpop.permute.xlu0 %1915
      %1921 = vrot.lane.b32.xlu0 %v1899, 96
      %v1922 = vpop.permute.xlu0 %1921
      %1923 = vrot.lane.b32.xlu0 %v1901, 96
      %v1924 = vpop.permute.xlu0 %1923
      %v1927 = vsel %vm1506, %v1824, %v1906
      %v1928 = vsel %vm1506, %v1826, %v1908
      %vm1929 = vcmask 523264
      %v1930 = vsel %vm1929, %v1927, %v1914
      %v1931 = vsel %vm1929, %v1928, %v1916
      %vm1932 = vcmask 785408
      %v1933 = vsel %vm1932, %v1930, %v1922
      %v1934 = vsel %vm1932, %v1931, %v1924
      %v1935 = vpack.c.bf16 %v1934, %v1933
      %v1936 = vld [vmem:[%s5] sm:$0xf]
      %v1937 = vld [vmem:[%s5 + $0x4] sm:$0xf]
      %v1938 = vld [vmem:[%s5 + $0x8] sm:$0xf]
      %v1939 = vld [vmem:[%s5 + $0xc] sm:$0xf]
      %v1940 = vld [vmem:[%s5 + $0x10] sm:$0xf]
      %v1941 = vld [vmem:[%s5 + $0x14] sm:$0xf]
      %v1942 = vld [vmem:[%s5 + $0x18] sm:$0xf]
      %v1943 = vld [vmem:[%s5 + $0x1c] sm:$0xf]
      %v1944 = vld [vmem:[%s5 + $0x20] sm:$0xf]
      %v1945 = vld [vmem:[%s5 + $0x24] sm:$0xf]
      %v1946 = vld [vmem:[%s5 + $0x28] sm:$0xf]
      %v1947 = vld [vmem:[%s5 + $0x2c] sm:$0xf]
      %v1948 = vld [vmem:[%s5 + $0x30] sm:$0xf]
      %v1949 = vld [vmem:[%s5 + $0x34] sm:$0xf]
      %v1950 = vld [vmem:[%s5 + $0x38] sm:$0xf]
      %v1951 = vld [vmem:[%s5 + $0x3c] sm:$0xf]
      %v1968 = vunpack.c.l.b16 %v1936
      %v1969 = vunpack.c.l.b16 %v1937
      %v1970 = vunpack.c.l.b16 %v1938
      %v1971 = vunpack.c.l.b16 %v1939
      %v1972 = vunpack.c.l.b16 %v1940
      %v1973 = vunpack.c.l.b16 %v1941
      %v1974 = vunpack.c.l.b16 %v1942
      %v1975 = vunpack.c.l.b16 %v1943
      %v1976 = vunpack.c.l.b16 %v1944
      %v1977 = vunpack.c.l.b16 %v1945
      %v1978 = vunpack.c.l.b16 %v1946
      %v1979 = vunpack.c.l.b16 %v1947
      %v1980 = vunpack.c.l.b16 %v1948
      %v1981 = vunpack.c.l.b16 %v1949
      %v1982 = vunpack.c.l.b16 %v1950
      %v1983 = vunpack.c.l.b16 %v1951
      %v1984 = vpack.c.b16 %v1969, %v1968
      %v1985 = vpack.c.b16 %v1971, %v1970
      %v1986 = vpack.c.b16 %v1973, %v1972
      %v1987 = vpack.c.b16 %v1975, %v1974
      %v1988 = vpack.c.b16 %v1977, %v1976
      %v1989 = vpack.c.b16 %v1979, %v1978
      %v1990 = vpack.c.b16 %v1981, %v1980
      %v1991 = vpack.c.b16 %v1983, %v1982
      %2000 = vmatpush.bf16.msra.mxu0 %v1991
      %2001 = vmatpush.bf16.msra.mxu0 %v1990
      %2002 = vmatpush.bf16.msra.mxu0 %v1989
      %2003 = vmatpush.bf16.msra.mxu0 %v1988
      %2004 = vmatpush.bf16.msra.mxu0 %v1987
      %2005 = vmatpush.bf16.msra.mxu0 %v1986
      %2006 = vmatpush.bf16.msra.mxu0 %v1985
      %2007 = vmatpush.bf16.msra.mxu0 %v1984
      %2008 = vmatmul.bf16.gmra.mxu0 %v1935
      %v2009 = vpop.f32.mrf.mxu0
      %v2010 = vadd.f32 0.0, %v2009
      %v2011 = vpop.f32.mrf.mxu0
      %v2012 = vadd.f32 0.0, %v2011
      %2013 = vdwg.mxu0
      %v2014 = vadd.f32 %v1220, %v2010
      %v2015 = vadd.f32 %v1222, %v2012
      %v2016 = vld [vmem:[%s6] sm:$0x1]
      %v2018 = vperm.slane %v2016, 0
      %v2020 = vadd.f32 %v2014, %v2018
      %v2021 = vadd.f32 %v2015, %v2018
      %v2022 = vld [vmem:[%s13] sm:$0x1]
      %v2023 = vld [vmem:[%s14] sm:$0x1]
      %2024 = vadd.xlane.f32.xlu0 %v2020
      %v2025 = vpop.xlane.xlu0 %2024
      %2026 = vadd.xlane.f32.xlu0 %v2021
      %v2027 = vpop.xlane.xlu0 %2026
      %v2028 = vmul.f32 %v2025, %v1236
      %v2029 = vmul.f32 %v2027, %v1236
      %v2030 = vsub.f32 %v2020, %v2028
      %v2031 = vsub.f32 %v2021, %v2029
      %v2032 = vmul.f32 %v2030, %v2030
      %v2033 = vmul.f32 %v2031, %v2031
      %2034 = vadd.xlane.f32.xlu0 %v2032
      %v2035 = vpop.xlane.xlu0 %2034
      %2036 = vadd.xlane.f32.xlu0 %v2033
      %v2037 = vpop.xlane.xlu0 %2036
      %v2038 = vmul.f32 %v2035, %v1236
      %v2039 = vmul.f32 %v2037, %v1236
      %v2040 = vadd.f32 %v2038, 1e-05
      %v2041 = vadd.f32 %v2039, 1e-05
      %v2042 = vrsqrt.pop %v2040
      %v2043 = vmul.f32 %v2042, %v2040
      %v2044 = vmul.f32 %v2043, %v2042
      %v2045 = vmul.f32 0.5, %v2044
      %v2046 = vsub.f32 1.5, %v2045
      %v2047 = vmul.f32 %v2042, %v2046
      %vm2048 = vweird.f32 %v2040
      %vm2049 = vweird.f32 %v2042
      %vm2050 = vmor %vm2048, %vm2049
      %v2051 = vsel %vm2050, %v2042, %v2047
      %v2052 = vrsqrt.pop %v2041
      %v2053 = vmul.f32 %v2052, %v2041
      %v2054 = vmul.f32 %v2053, %v2052
      %v2055 = vmul.f32 0.5, %v2054
      %v2056 = vsub.f32 1.5, %v2055
      %v2057 = vmul.f32 %v2052, %v2056
      %vm2058 = vweird.f32 %v2041
      %vm2059 = vweird.f32 %v2052
      %vm2060 = vmor %vm2058, %vm2059
      %v2061 = vsel %vm2060, %v2052, %v2057
      %v2062 = vmul.f32 %v2030, %v2051
      %v2063 = vmul.f32 %v2031, %v2061
      %v2065 = vperm.slane %v2022, 0
      %v2067 = vmul.f32 %v2062, %v2065
      %v2068 = vmul.f32 %v2063, %v2065
      %v2070 = vperm.slane %v2023, 0
      %v2072 = vadd.f32 %v2067, %v2070
      %v2073 = vadd.f32 %v2068, %v2070
      %v2074 = vpack.c.bf16 %v2073, %v2072
      %v2075 = vld [vmem:[%s7] sm:$0xff]
      %v2076 = vld [vmem:[%s7 + $0x8] sm:$0xff]
      %v2077 = vld [vmem:[%s7 + $0x10] sm:$0xff]
      %v2078 = vld [vmem:[%s7 + $0x18] sm:$0xff]
      %v2079 = vld [vmem:[%s7 + $0x20] sm:$0xff]
      %v2080 = vld [vmem:[%s7 + $0x28] sm:$0xff]
      %v2081 = vld [vmem:[%s7 + $0x30] sm:$0xff]
      %v2082 = vld [vmem:[%s7 + $0x38] sm:$0xff]
      %v2083 = vld [vmem:[%s7 + $0x40] sm:$0xff]
      %v2084 = vld [vmem:[%s7 + $0x48] sm:$0xff]
      %v2085 = vld [vmem:[%s7 + $0x50] sm:$0xff]
      %v2086 = vld [vmem:[%s7 + $0x58] sm:$0xff]
      %v2087 = vld [vmem:[%s7 + $0x60] sm:$0xff]
      %v2088 = vld [vmem:[%s7 + $0x68] sm:$0xff]
      %v2089 = vld [vmem:[%s7 + $0x70] sm:$0xff]
      %v2090 = vld [vmem:[%s7 + $0x78] sm:$0xff]
      %v2091 = vld [vmem:[%s7 + $0x80] sm:$0xff]
      %v2092 = vld [vmem:[%s7 + $0x88] sm:$0xff]
      %v2093 = vld [vmem:[%s7 + $0x90] sm:$0xff]
      %v2094 = vld [vmem:[%s7 + $0x98] sm:$0xff]
      %v2095 = vld [vmem:[%s7 + $0xa0] sm:$0xff]
      %v2096 = vld [vmem:[%s7 + $0xa8] sm:$0xff]
      %v2097 = vld [vmem:[%s7 + $0xb0] sm:$0xff]
      %v2098 = vld [vmem:[%s7 + $0xb8] sm:$0xff]
      %v2099 = vld [vmem:[%s7 + $0xc0] sm:$0xff]
      %v2100 = vld [vmem:[%s7 + $0xc8] sm:$0xff]
      %v2101 = vld [vmem:[%s7 + $0xd0] sm:$0xff]
      %v2102 = vld [vmem:[%s7 + $0xd8] sm:$0xff]
      %v2103 = vld [vmem:[%s7 + $0xe0] sm:$0xff]
      %v2104 = vld [vmem:[%s7 + $0xe8] sm:$0xff]
      %v2105 = vld [vmem:[%s7 + $0xf0] sm:$0xff]
      %v2106 = vld [vmem:[%s7 + $0xf8] sm:$0xff]
      %v2107 = vld [vmem:[%s8] sm:$0xf]
      %v2109 = vperm.slane %v2107, 0
      %v2110 = vperm.slane %v2107, 1
      %v2111 = vperm.slane %v2107, 2
      %v2112 = vperm.slane %v2107, 3
      %v2149 = vunpack.c.l.b16 %v2075
      %v2150 = vunpack.c.h.b16 %v2075
      %v2151 = vunpack.c.l.b16 %v2076
      %v2152 = vunpack.c.h.b16 %v2076
      %v2153 = vunpack.c.l.b16 %v2077
      %v2154 = vunpack.c.h.b16 %v2077
      %v2155 = vunpack.c.l.b16 %v2078
      %v2156 = vunpack.c.h.b16 %v2078
      %v2157 = vunpack.c.l.b16 %v2079
      %v2158 = vunpack.c.h.b16 %v2079
      %v2159 = vunpack.c.l.b16 %v2080
      %v2160 = vunpack.c.h.b16 %v2080
      %v2161 = vunpack.c.l.b16 %v2081
      %v2162 = vunpack.c.h.b16 %v2081
      %v2163 = vunpack.c.l.b16 %v2082
      %v2164 = vunpack.c.h.b16 %v2082
      %v2165 = vunpack.c.l.b16 %v2083
      %v2166 = vunpack.c.h.b16 %v2083
      %v2167 = vunpack.c.l.b16 %v2084
      %v2168 = vunpack.c.h.b16 %v2084
      %v2169 = vunpack.c.l.b16 %v2085
      %v2170 = vunpack.c.h.b16 %v2085
      %v2171 = vunpack.c.l.b16 %v2086
      %v2172 = vunpack.c.h.b16 %v2086
      %v2173 = vunpack.c.l.b16 %v2087
      %v2174 = vunpack.c.h.b16 %v2087
      %v2175 = vunpack.c.l.b16 %v2088
      %v2176 = vunpack.c.h.b16 %v2088
      %v2177 = vunpack.c.l.b16 %v2089
      %v2178 = vunpack.c.h.b16 %v2089
      %v2179 = vunpack.c.l.b16 %v2090
      %v2180 = vunpack.c.h.b16 %v2090
      %v2181 = vunpack.c.l.b16 %v2091
      %v2182 = vunpack.c.h.b16 %v2091
      %v2183 = vunpack.c.l.b16 %v2092
      %v2184 = vunpack.c.h.b16 %v2092
      %v2185 = vunpack.c.l.b16 %v2093
      %v2186 = vunpack.c.h.b16 %v2093
      %v2187 = vunpack.c.l.b16 %v2094
      %v2188 = vunpack.c.h.b16 %v2094
      %v2189 = vunpack.c.l.b16 %v2095
      %v2190 = vunpack.c.h.b16 %v2095
      %v2191 = vunpack.c.l.b16 %v2096
      %v2192 = vunpack.c.h.b16 %v2096
      %v2193 = vunpack.c.l.b16 %v2097
      %v2194 = vunpack.c.h.b16 %v2097
      %v2195 = vunpack.c.l.b16 %v2098
      %v2196 = vunpack.c.h.b16 %v2098
      %v2197 = vunpack.c.l.b16 %v2099
      %v2198 = vunpack.c.h.b16 %v2099
      %v2199 = vunpack.c.l.b16 %v2100
      %v2200 = vunpack.c.h.b16 %v2100
      %v2201 = vunpack.c.l.b16 %v2101
      %v2202 = vunpack.c.h.b16 %v2101
      %v2203 = vunpack.c.l.b16 %v2102
      %v2204 = vunpack.c.h.b16 %v2102
      %v2205 = vunpack.c.l.b16 %v2103
      %v2206 = vunpack.c.h.b16 %v2103
      %v2207 = vunpack.c.l.b16 %v2104
      %v2208 = vunpack.c.h.b16 %v2104
      %v2209 = vunpack.c.l.b16 %v2105
      %v2210 = vunpack.c.h.b16 %v2105
      %v2211 = vunpack.c.l.b16 %v2106
      %v2212 = vunpack.c.h.b16 %v2106
      %v2213 = vpack.c.b16 %v2153, %v2149
      %v2214 = vpack.c.b16 %v2154, %v2150
      %v2215 = vpack.c.b16 %v2155, %v2151
      %v2216 = vpack.c.b16 %v2156, %v2152
      %v2217 = vpack.c.b16 %v2161, %v2157
      %v2218 = vpack.c.b16 %v2162, %v2158
      %v2219 = vpack.c.b16 %v2163, %v2159
      %v2220 = vpack.c.b16 %v2164, %v2160
      %v2221 = vpack.c.b16 %v2169, %v2165
      %v2222 = vpack.c.b16 %v2170, %v2166
      %v2223 = vpack.c.b16 %v2171, %v2167
      %v2224 = vpack.c.b16 %v2172, %v2168
      %v2225 = vpack.c.b16 %v2177, %v2173
      %v2226 = vpack.c.b16 %v2178, %v2174
      %v2227 = vpack.c.b16 %v2179, %v2175
      %v2228 = vpack.c.b16 %v2180, %v2176
      %v2229 = vpack.c.b16 %v2185, %v2181
      %v2230 = vpack.c.b16 %v2186, %v2182
      %v2231 = vpack.c.b16 %v2187, %v2183
      %v2232 = vpack.c.b16 %v2188, %v2184
      %v2233 = vpack.c.b16 %v2193, %v2189
      %v2234 = vpack.c.b16 %v2194, %v2190
      %v2235 = vpack.c.b16 %v2195, %v2191
      %v2236 = vpack.c.b16 %v2196, %v2192
      %v2237 = vpack.c.b16 %v2201, %v2197
      %v2238 = vpack.c.b16 %v2202, %v2198
      %v2239 = vpack.c.b16 %v2203, %v2199
      %v2240 = vpack.c.b16 %v2204, %v2200
      %v2241 = vpack.c.b16 %v2209, %v2205
      %v2242 = vpack.c.b16 %v2210, %v2206
      %v2243 = vpack.c.b16 %v2211, %v2207
      %v2244 = vpack.c.b16 %v2212, %v2208
      %2277 = vmatpush.bf16.msra.mxu0 %v2241
      %2278 = vmatpush.bf16.msra.mxu0 %v2237
      %2279 = vmatpush.bf16.msra.mxu0 %v2233
      %2280 = vmatpush.bf16.msra.mxu0 %v2229
      %2281 = vmatpush.bf16.msra.mxu0 %v2225
      %2282 = vmatpush.bf16.msra.mxu0 %v2221
      %2283 = vmatpush.bf16.msra.mxu0 %v2217
      %2284 = vmatpush.bf16.msra.mxu0 %v2213
      %2285 = vmatmul.bf16.gmra.mxu0 %v2074
      %v2286 = vpop.f32.mrf.mxu0
      %v2287 = vadd.f32 %v2109, %v2286
      %v2288 = vpop.f32.mrf.mxu0
      %v2289 = vadd.f32 %v2109, %v2288
      %2290 = vdwg.mxu0
      %2291 = vmatpush.bf16.msra.mxu0 %v2242
      %2292 = vmatpush.bf16.msra.mxu0 %v2238
      %2293 = vmatpush.bf16.msra.mxu0 %v2234
      %2294 = vmatpush.bf16.msra.mxu0 %v2230
      %2295 = vmatpush.bf16.msra.mxu0 %v2226
      %2296 = vmatpush.bf16.msra.mxu0 %v2222
      %2297 = vmatpush.bf16.msra.mxu0 %v2218
      %2298 = vmatpush.bf16.msra.mxu0 %v2214
      %2299 = vmatmul.bf16.gmra.mxu0 %v2074
      %v2300 = vpop.f32.mrf.mxu0
      %v2301 = vadd.f32 %v2110, %v2300
      %v2302 = vpop.f32.mrf.mxu0
      %v2303 = vadd.f32 %v2110, %v2302
      %2304 = vdwg.mxu0
      %2305 = vmatpush.bf16.msra.mxu0 %v2243
      %2306 = vmatpush.bf16.msra.mxu0 %v2239
      %2307 = vmatpush.bf16.msra.mxu0 %v2235
      %2308 = vmatpush.bf16.msra.mxu0 %v2231
      %2309 = vmatpush.bf16.msra.mxu0 %v2227
      %2310 = vmatpush.bf16.msra.mxu0 %v2223
      %2311 = vmatpush.bf16.msra.mxu0 %v2219
      %2312 = vmatpush.bf16.msra.mxu0 %v2215
      %2313 = vmatmul.bf16.gmra.mxu0 %v2074
      %v2314 = vpop.f32.mrf.mxu0
      %v2315 = vadd.f32 %v2111, %v2314
      %v2316 = vpop.f32.mrf.mxu0
      %v2317 = vadd.f32 %v2111, %v2316
      %2318 = vdwg.mxu0
      %2319 = vmatpush.bf16.msra.mxu0 %v2244
      %2320 = vmatpush.bf16.msra.mxu0 %v2240
      %2321 = vmatpush.bf16.msra.mxu0 %v2236
      %2322 = vmatpush.bf16.msra.mxu0 %v2232
      %2323 = vmatpush.bf16.msra.mxu0 %v2228
      %2324 = vmatpush.bf16.msra.mxu0 %v2224
      %2325 = vmatpush.bf16.msra.mxu0 %v2220
      %2326 = vmatpush.bf16.msra.mxu0 %v2216
      %2327 = vmatmul.bf16.gmra.mxu0 %v2074
      %v2328 = vpop.f32.mrf.mxu0
      %v2329 = vadd.f32 %v2112, %v2328
      %v2330 = vpop.f32.mrf.mxu0
      %v2331 = vadd.f32 %v2112, %v2330
      %2332 = vdwg.mxu0
      %v2333 = vmul.f32 %v2287, 0.5
      %v2334 = vmul.f32 %v2301, 0.5
      %v2335 = vmul.f32 %v2315, 0.5
      %v2336 = vmul.f32 %v2329, 0.5
      %v2337 = vmul.f32 %v2289, 0.5
      %v2338 = vmul.f32 %v2303, 0.5
      %v2339 = vmul.f32 %v2317, 0.5
      %v2340 = vmul.f32 %v2331, 0.5
      %v2341 = vmul.f32 %v2287, 0.70710677
      %v2342 = vmul.f32 %v2301, 0.70710677
      %v2343 = vmul.f32 %v2315, 0.70710677
      %v2344 = vmul.f32 %v2329, 0.70710677
      %v2345 = vmul.f32 %v2289, 0.70710677
      %v2346 = vmul.f32 %v2303, 0.70710677
      %v2347 = vmul.f32 %v2317, 0.70710677
      %v2348 = vmul.f32 %v2331, 0.70710677
      %v2349 = vand.u32 2147483647, %v2341
      %v2350 = vand.u32 2147483647, %v2342
      %v2351 = vand.u32 2147483647, %v2343
      %v2352 = vand.u32 2147483647, %v2344
      %v2353 = vand.u32 2147483647, %v2345
      %v2354 = vand.u32 2147483647, %v2346
      %v2355 = vand.u32 2147483647, %v2347
      %v2356 = vand.u32 2147483647, %v2348
      %v2357 = vmul.f32 %v2349, 0.3275911
      %v2358 = vmul.f32 %v2350, 0.3275911
      %v2359 = vmul.f32 %v2351, 0.3275911
      %v2360 = vmul.f32 %v2352, 0.3275911
      %v2361 = vmul.f32 %v2353, 0.3275911
      %v2362 = vmul.f32 %v2354, 0.3275911
      %v2363 = vmul.f32 %v2355, 0.3275911
      %v2364 = vmul.f32 %v2356, 0.3275911
      %v2365 = vadd.f32 %v2357, 1.0
      %v2366 = vadd.f32 %v2358, 1.0
      %v2367 = vadd.f32 %v2359, 1.0
      %v2368 = vadd.f32 %v2360, 1.0
      %v2369 = vadd.f32 %v2361, 1.0
      %v2370 = vadd.f32 %v2362, 1.0
      %v2371 = vadd.f32 %v2363, 1.0
      %v2372 = vadd.f32 %v2364, 1.0
      %v2373 = vrcp.pop %v2365
      %v2374 = vmul.f32 %v2365, %v2373
      %v2375 = vsub.f32 1.0, %v2374
      %v2376 = vmul.f32 %v2373, %v2375
      %v2377 = vadd.f32 %v2373, %v2376
      %vm2378 = vweird.f32 %v2365
      %vm2379 = vweird.f32 %v2373
      %vm2380 = vmor %vm2378, %vm2379
      %v2381 = vsel %vm2380, %v2373, %v2377
      %v2382 = vand.u32 2147483647, %v2365
      %vm2383 = vcmp.eq.f32.partialorder %v2382, 8.507059e+37
      %v2384 = vand.u32 %v2365, 2147483648
      %v2385 = vor.u32 1.1754944e-38, %v2384
      %v2386 = vsel %vm2383, %v2385, %v2381
      %v2387 = vmul.f32 1.0, %v2386
      %v2388 = vrcp.pop %v2366
      %v2389 = vmul.f32 %v2366, %v2388
      %v2390 = vsub.f32 1.0, %v2389
      %v2391 = vmul.f32 %v2388, %v2390
      %v2392 = vadd.f32 %v2388, %v2391
      %vm2393 = vweird.f32 %v2366
      %vm2394 = vweird.f32 %v2388
      %vm2395 = vmor %vm2393, %vm2394
      %v2396 = vsel %vm2395, %v2388, %v2392
      %v2397 = vand.u32 2147483647, %v2366
      %vm2398 = vcmp.eq.f32.partialorder %v2397, 8.507059e+37
      %v2399 = vand.u32 %v2366, 2147483648
      %v2400 = vor.u32 1.1754944e-38, %v2399
      %v2401 = vsel %vm2398, %v2400, %v2396
      %v2402 = vmul.f32 1.0, %v2401
      %v2403 = vrcp.pop %v2367
      %v2404 = vmul.f32 %v2367, %v2403
      %v2405 = vsub.f32 1.0, %v2404
      %v2406 = vmul.f32 %v2403, %v2405
      %v2407 = vadd.f32 %v2403, %v2406
      %vm2408 = vweird.f32 %v2367
      %vm2409 = vweird.f32 %v2403
      %vm2410 = vmor %vm2408, %vm2409
      %v2411 = vsel %vm2410, %v2403, %v2407
      %v2412 = vand.u32 2147483647, %v2367
      %vm2413 = vcmp.eq.f32.partialorder %v2412, 8.507059e+37
      %v2414 = vand.u32 %v2367, 2147483648
      %v2415 = vor.u32 1.1754944e-38, %v2414
      %v2416 = vsel %vm2413, %v2415, %v2411
      %v2417 = vmul.f32 1.0, %v2416
      %v2418 = vrcp.pop %v2368
      %v2419 = vmul.f32 %v2368, %v2418
      %v2420 = vsub.f32 1.0, %v2419
      %v2421 = vmul.f32 %v2418, %v2420
      %v2422 = vadd.f32 %v2418, %v2421
      %vm2423 = vweird.f32 %v2368
      %vm2424 = vweird.f32 %v2418
      %vm2425 = vmor %vm2423, %vm2424
      %v2426 = vsel %vm2425, %v2418, %v2422
      %v2427 = vand.u32 2147483647, %v2368
      %vm2428 = vcmp.eq.f32.partialorder %v2427, 8.507059e+37
      %v2429 = vand.u32 %v2368, 2147483648
      %v2430 = vor.u32 1.1754944e-38, %v2429
      %v2431 = vsel %vm2428, %v2430, %v2426
      %v2432 = vmul.f32 1.0, %v2431
      %v2433 = vrcp.pop %v2369
      %v2434 = vmul.f32 %v2369, %v2433
      %v2435 = vsub.f32 1.0, %v2434
      %v2436 = vmul.f32 %v2433, %v2435
      %v2437 = vadd.f32 %v2433, %v2436
      %vm2438 = vweird.f32 %v2369
      %vm2439 = vweird.f32 %v2433
      %vm2440 = vmor %vm2438, %vm2439
      %v2441 = vsel %vm2440, %v2433, %v2437
      %v2442 = vand.u32 2147483647, %v2369
      %vm2443 = vcmp.eq.f32.partialorder %v2442, 8.507059e+37
      %v2444 = vand.u32 %v2369, 2147483648
      %v2445 = vor.u32 1.1754944e-38, %v2444
      %v2446 = vsel %vm2443, %v2445, %v2441
      %v2447 = vmul.f32 1.0, %v2446
      %v2448 = vrcp.pop %v2370
      %v2449 = vmul.f32 %v2370, %v2448
      %v2450 = vsub.f32 1.0, %v2449
      %v2451 = vmul.f32 %v2448, %v2450
      %v2452 = vadd.f32 %v2448, %v2451
      %vm2453 = vweird.f32 %v2370
      %vm2454 = vweird.f32 %v2448
      %vm2455 = vmor %vm2453, %vm2454
      %v2456 = vsel %vm2455, %v2448, %v2452
      %v2457 = vand.u32 2147483647, %v2370
      %vm2458 = vcmp.eq.f32.partialorder %v2457, 8.507059e+37
      %v2459 = vand.u32 %v2370, 2147483648
      %v2460 = vor.u32 1.1754944e-38, %v2459
      %v2461 = vsel %vm2458, %v2460, %v2456
      %v2462 = vmul.f32 1.0, %v2461
      %v2463 = vrcp.pop %v2371
      %v2464 = vmul.f32 %v2371, %v2463
      %v2465 = vsub.f32 1.0, %v2464
      %v2466 = vmul.f32 %v2463, %v2465
      %v2467 = vadd.f32 %v2463, %v2466
      %vm2468 = vweird.f32 %v2371
      %vm2469 = vweird.f32 %v2463
      %vm2470 = vmor %vm2468, %vm2469
      %v2471 = vsel %vm2470, %v2463, %v2467
      %v2472 = vand.u32 2147483647, %v2371
      %vm2473 = vcmp.eq.f32.partialorder %v2472, 8.507059e+37
      %v2474 = vand.u32 %v2371, 2147483648
      %v2475 = vor.u32 1.1754944e-38, %v2474
      %v2476 = vsel %vm2473, %v2475, %v2471
      %v2477 = vmul.f32 1.0, %v2476
      %v2478 = vrcp.pop %v2372
      %v2479 = vmul.f32 %v2372, %v2478
      %v2480 = vsub.f32 1.0, %v2479
      %v2481 = vmul.f32 %v2478, %v2480
      %v2482 = vadd.f32 %v2478, %v2481
      %vm2483 = vweird.f32 %v2372
      %vm2484 = vweird.f32 %v2478
      %vm2485 = vmor %vm2483, %vm2484
      %v2486 = vsel %vm2485, %v2478, %v2482
      %v2487 = vand.u32 2147483647, %v2372
      %vm2488 = vcmp.eq.f32.partialorder %v2487, 8.507059e+37
      %v2489 = vand.u32 %v2372, 2147483648
      %v2490 = vor.u32 1.1754944e-38, %v2489
      %v2491 = vsel %vm2488, %v2490, %v2486
      %v2492 = vmul.f32 1.0, %v2491
      %v2493 = vmul.f32 %v2387, 1.0614054
      %v2494 = vmul.f32 %v2402, 1.0614054
      %v2495 = vmul.f32 %v2417, 1.0614054
      %v2496 = vmul.f32 %v2432, 1.0614054
      %v2497 = vmul.f32 %v2447, 1.0614054
      %v2498 = vmul.f32 %v2462, 1.0614054
      %v2499 = vmul.f32 %v2477, 1.0614054
      %v2500 = vmul.f32 %v2492, 1.0614054
      %v2501 = vadd.f32 %v2493, -1.4531521
      %v2502 = vadd.f32 %v2494, -1.4531521
      %v2503 = vadd.f32 %v2495, -1.4531521
      %v2504 = vadd.f32 %v2496, -1.4531521
      %v2505 = vadd.f32 %v2497, -1.4531521
      %v2506 = vadd.f32 %v2498, -1.4531521
      %v2507 = vadd.f32 %v2499, -1.4531521
      %v2508 = vadd.f32 %v2500, -1.4531521
      %v2509 = vmul.f32 %v2501, %v2387
      %v2510 = vmul.f32 %v2502, %v2402
      %v2511 = vmul.f32 %v2503, %v2417
      %v2512 = vmul.f32 %v2504, %v2432
      %v2513 = vmul.f32 %v2505, %v2447
      %v2514 = vmul.f32 %v2506, %v2462
      %v2515 = vmul.f32 %v2507, %v2477
      %v2516 = vmul.f32 %v2508, %v2492
      %v2517 = vadd.f32 %v2509, 1.4214138
      %v2518 = vadd.f32 %v2510, 1.4214138
      %v2519 = vadd.f32 %v2511, 1.4214138
      %v2520 = vadd.f32 %v2512, 1.4214138
      %v2521 = vadd.f32 %v2513, 1.4214138
      %v2522 = vadd.f32 %v2514, 1.4214138
      %v2523 = vadd.f32 %v2515, 1.4214138
      %v2524 = vadd.f32 %v2516, 1.4214138
      %v2525 = vmul.f32 %v2517, %v2387
      %v2526 = vmul.f32 %v2518, %v2402
      %v2527 = vmul.f32 %v2519, %v2417
      %v2528 = vmul.f32 %v2520, %v2432
      %v2529 = vmul.f32 %v2521, %v2447
      %v2530 = vmul.f32 %v2522, %v2462
      %v2531 = vmul.f32 %v2523, %v2477
      %v2532 = vmul.f32 %v2524, %v2492
      %v2533 = vadd.f32 %v2525, -0.28449672
      %v2534 = vadd.f32 %v2526, -0.28449672
      %v2535 = vadd.f32 %v2527, -0.28449672
      %v2536 = vadd.f32 %v2528, -0.28449672
      %v2537 = vadd.f32 %v2529, -0.28449672
      %v2538 = vadd.f32 %v2530, -0.28449672
      %v2539 = vadd.f32 %v2531, -0.28449672
      %v2540 = vadd.f32 %v2532, -0.28449672
      %v2541 = vmul.f32 %v2533, %v2387
      %v2542 = vmul.f32 %v2534, %v2402
      %v2543 = vmul.f32 %v2535, %v2417
      %v2544 = vmul.f32 %v2536, %v2432
      %v2545 = vmul.f32 %v2537, %v2447
      %v2546 = vmul.f32 %v2538, %v2462
      %v2547 = vmul.f32 %v2539, %v2477
      %v2548 = vmul.f32 %v2540, %v2492
      %v2549 = vadd.f32 %v2541, 0.2548296
      %v2550 = vadd.f32 %v2542, 0.2548296
      %v2551 = vadd.f32 %v2543, 0.2548296
      %v2552 = vadd.f32 %v2544, 0.2548296
      %v2553 = vadd.f32 %v2545, 0.2548296
      %v2554 = vadd.f32 %v2546, 0.2548296
      %v2555 = vadd.f32 %v2547, 0.2548296
      %v2556 = vadd.f32 %v2548, 0.2548296
      %v2557 = vmul.f32 %v2549, %v2387
      %v2558 = vmul.f32 %v2550, %v2402
      %v2559 = vmul.f32 %v2551, %v2417
      %v2560 = vmul.f32 %v2552, %v2432
      %v2561 = vmul.f32 %v2553, %v2447
      %v2562 = vmul.f32 %v2554, %v2462
      %v2563 = vmul.f32 %v2555, %v2477
      %v2564 = vmul.f32 %v2556, %v2492
      %v2565 = vsub.f32 0.0, %v2349
      %v2566 = vsub.f32 0.0, %v2350
      %v2567 = vsub.f32 0.0, %v2351
      %v2568 = vsub.f32 0.0, %v2352
      %v2569 = vsub.f32 0.0, %v2353
      %v2570 = vsub.f32 0.0, %v2354
      %v2571 = vsub.f32 0.0, %v2355
      %v2572 = vsub.f32 0.0, %v2356
      %v2573 = vmul.f32 %v2565, %v2349
      %v2574 = vmul.f32 %v2566, %v2350
      %v2575 = vmul.f32 %v2567, %v2351
      %v2576 = vmul.f32 %v2568, %v2352
      %v2577 = vmul.f32 %v2569, %v2353
      %v2578 = vmul.f32 %v2570, %v2354
      %v2579 = vmul.f32 %v2571, %v2355
      %v2580 = vmul.f32 %v2572, %v2356
      %v2581 = vmul.f32 %v2573, 1.442695
      %v2582 = vpow.pop %v2581
      %v2583 = vmul.f32 %v2574, 1.442695
      %v2584 = vpow.pop %v2583
      %v2585 = vmul.f32 %v2575, 1.442695
      %v2586 = vpow.pop %v2585
      %v2587 = vmul.f32 %v2576, 1.442695
      %v2588 = vpow.pop %v2587
      %v2589 = vmul.f32 %v2577, 1.442695
      %v2590 = vpow.pop %v2589
      %v2591 = vmul.f32 %v2578, 1.442695
      %v2592 = vpow.pop %v2591
      %v2593 = vmul.f32 %v2579, 1.442695
      %v2594 = vpow.pop %v2593
      %v2595 = vmul.f32 %v2580, 1.442695
      %v2596 = vpow.pop %v2595
      %v2597 = vmul.f32 %v2557, %v2582
      %v2598 = vmul.f32 %v2558, %v2584
      %v2599 = vmul.f32 %v2559, %v2586
      %v2600 = vmul.f32 %v2560, %v2588
      %v2601 = vmul.f32 %v2561, %v2590
      %v2602 = vmul.f32 %v2562, %v2592
      %v2603 = vmul.f32 %v2563, %v2594
      %v2604 = vmul.f32 %v2564, %v2596
      %v2605 = vsub.f32 1.0, %v2597
      %v2606 = vsub.f32 1.0, %v2598
      %v2607 = vsub.f32 1.0, %v2599
      %v2608 = vsub.f32 1.0, %v2600
      %v2609 = vsub.f32 1.0, %v2601
      %v2610 = vsub.f32 1.0, %v2602
      %v2611 = vsub.f32 1.0, %v2603
      %v2612 = vsub.f32 1.0, %v2604
      %vm2613 = vcmp.lt.f32.partialorder %v2341, 0.0
      %vm2614 = vcmp.lt.f32.partialorder %v2342, 0.0
      %vm2615 = vcmp.lt.f32.partialorder %v2343, 0.0
      %vm2616 = vcmp.lt.f32.partialorder %v2344, 0.0
      %vm2617 = vcmp.lt.f32.partialorder %v2345, 0.0
      %vm2618 = vcmp.lt.f32.partialorder %v2346, 0.0
      %vm2619 = vcmp.lt.f32.partialorder %v2347, 0.0
      %vm2620 = vcmp.lt.f32.partialorder %v2348, 0.0
      %v2621 = vsub.f32 0.0, %v2605
      %v2622 = vsub.f32 0.0, %v2606
      %v2623 = vsub.f32 0.0, %v2607
      %v2624 = vsub.f32 0.0, %v2608
      %v2625 = vsub.f32 0.0, %v2609
      %v2626 = vsub.f32 0.0, %v2610
      %v2627 = vsub.f32 0.0, %v2611
      %v2628 = vsub.f32 0.0, %v2612
      %v2629 = vsel %vm2613, %v2621, %v2605
      %v2630 = vsel %vm2614, %v2622, %v2606
      %v2631 = vsel %vm2615, %v2623, %v2607
      %v2632 = vsel %vm2616, %v2624, %v2608
      %v2633 = vsel %vm2617, %v2625, %v2609
      %v2634 = vsel %vm2618, %v2626, %v2610
      %v2635 = vsel %vm2619, %v2627, %v2611
      %v2636 = vsel %vm2620, %v2628, %v2612
      %v2637 = vadd.f32 %v2629, 1.0
      %v2638 = vadd.f32 %v2630, 1.0
      %v2639 = vadd.f32 %v2631, 1.0
      %v2640 = vadd.f32 %v2632, 1.0
      %v2641 = vadd.f32 %v2633, 1.0
      %v2642 = vadd.f32 %v2634, 1.0
      %v2643 = vadd.f32 %v2635, 1.0
      %v2644 = vadd.f32 %v2636, 1.0
      %v2645 = vmul.f32 %v2333, %v2637
      %v2646 = vmul.f32 %v2334, %v2638
      %v2647 = vmul.f32 %v2335, %v2639
      %v2648 = vmul.f32 %v2336, %v2640
      %v2649 = vmul.f32 %v2337, %v2641
      %v2650 = vmul.f32 %v2338, %v2642
      %v2651 = vmul.f32 %v2339, %v2643
      %v2652 = vmul.f32 %v2340, %v2644
      %v2653 = vpack.c.bf16 %v2649, %v2645
      %v2654 = vpack.c.bf16 %v2650, %v2646
      %v2655 = vpack.c.bf16 %v2651, %v2647
      %v2656 = vpack.c.bf16 %v2652, %v2648
      %v2657 = vld [vmem:[%s9] sm:$0xf]
      %v2658 = vld [vmem:[%s9 + $0x4] sm:$0xf]
      %v2659 = vld [vmem:[%s9 + $0x8] sm:$0xf]
      %v2660 = vld [vmem:[%s9 + $0xc] sm:$0xf]
      %v2661 = vld [vmem:[%s9 + $0x10] sm:$0xf]
      %v2662 = vld [vmem:[%s9 + $0x14] sm:$0xf]
      %v2663 = vld [vmem:[%s9 + $0x18] sm:$0xf]
      %v2664 = vld [vmem:[%s9 + $0x1c] sm:$0xf]
      %v2665 = vld [vmem:[%s9 + $0x20] sm:$0xf]
      %v2666 = vld [vmem:[%s9 + $0x24] sm:$0xf]
      %v2667 = vld [vmem:[%s9 + $0x28] sm:$0xf]
      %v2668 = vld [vmem:[%s9 + $0x2c] sm:$0xf]
      %v2669 = vld [vmem:[%s9 + $0x30] sm:$0xf]
      %v2670 = vld [vmem:[%s9 + $0x34] sm:$0xf]
      %v2671 = vld [vmem:[%s9 + $0x38] sm:$0xf]
      %v2672 = vld [vmem:[%s9 + $0x3c] sm:$0xf]
      %v2673 = vld [vmem:[%s9 + $0x40] sm:$0xf]
      %v2674 = vld [vmem:[%s9 + $0x44] sm:$0xf]
      %v2675 = vld [vmem:[%s9 + $0x48] sm:$0xf]
      %v2676 = vld [vmem:[%s9 + $0x4c] sm:$0xf]
      %v2677 = vld [vmem:[%s9 + $0x50] sm:$0xf]
      %v2678 = vld [vmem:[%s9 + $0x54] sm:$0xf]
      %v2679 = vld [vmem:[%s9 + $0x58] sm:$0xf]
      %v2680 = vld [vmem:[%s9 + $0x5c] sm:$0xf]
      %v2681 = vld [vmem:[%s9 + $0x60] sm:$0xf]
      %v2682 = vld [vmem:[%s9 + $0x64] sm:$0xf]
      %v2683 = vld [vmem:[%s9 + $0x68] sm:$0xf]
      %v2684 = vld [vmem:[%s9 + $0x6c] sm:$0xf]
      %v2685 = vld [vmem:[%s9 + $0x70] sm:$0xf]
      %v2686 = vld [vmem:[%s9 + $0x74] sm:$0xf]
      %v2687 = vld [vmem:[%s9 + $0x78] sm:$0xf]
      %v2688 = vld [vmem:[%s9 + $0x7c] sm:$0xf]
      %v2689 = vld [vmem:[%s9 + $0x80] sm:$0xf]
      %v2690 = vld [vmem:[%s9 + $0x84] sm:$0xf]
      %v2691 = vld [vmem:[%s9 + $0x88] sm:$0xf]
      %v2692 = vld [vmem:[%s9 + $0x8c] sm:$0xf]
      %v2693 = vld [vmem:[%s9 + $0x90] sm:$0xf]
      %v2694 = vld [vmem:[%s9 + $0x94] sm:$0xf]
      %v2695 = vld [vmem:[%s9 + $0x98] sm:$0xf]
      %v2696 = vld [vmem:[%s9 + $0x9c] sm:$0xf]
      %v2697 = vld [vmem:[%s9 + $0xa0] sm:$0xf]
      %v2698 = vld [vmem:[%s9 + $0xa4] sm:$0xf]
      %v2699 = vld [vmem:[%s9 + $0xa8] sm:$0xf]
      %v2700 = vld [vmem:[%s9 + $0xac] sm:$0xf]
      %v2701 = vld [vmem:[%s9 + $0xb0] sm:$0xf]
      %v2702 = vld [vmem:[%s9 + $0xb4] sm:$0xf]
      %v2703 = vld [vmem:[%s9 + $0xb8] sm:$0xf]
      %v2704 = vld [vmem:[%s9 + $0xbc] sm:$0xf]
      %v2705 = vld [vmem:[%s9 + $0xc0] sm:$0xf]
      %v2706 = vld [vmem:[%s9 + $0xc4] sm:$0xf]
      %v2707 = vld [vmem:[%s9 + $0xc8] sm:$0xf]
      %v2708 = vld [vmem:[%s9 + $0xcc] sm:$0xf]
      %v2709 = vld [vmem:[%s9 + $0xd0] sm:$0xf]
      %v2710 = vld [vmem:[%s9 + $0xd4] sm:$0xf]
      %v2711 = vld [vmem:[%s9 + $0xd8] sm:$0xf]
      %v2712 = vld [vmem:[%s9 + $0xdc] sm:$0xf]
      %v2713 = vld [vmem:[%s9 + $0xe0] sm:$0xf]
      %v2714 = vld [vmem:[%s9 + $0xe4] sm:$0xf]
      %v2715 = vld [vmem:[%s9 + $0xe8] sm:$0xf]
      %v2716 = vld [vmem:[%s9 + $0xec] sm:$0xf]
      %v2717 = vld [vmem:[%s9 + $0xf0] sm:$0xf]
      %v2718 = vld [vmem:[%s9 + $0xf4] sm:$0xf]
      %v2719 = vld [vmem:[%s9 + $0xf8] sm:$0xf]
      %v2720 = vld [vmem:[%s9 + $0xfc] sm:$0xf]
      %v2785 = vunpack.c.l.b16 %v2657
      %v2786 = vunpack.c.l.b16 %v2658
      %v2787 = vunpack.c.l.b16 %v2659
      %v2788 = vunpack.c.l.b16 %v2660
      %v2789 = vunpack.c.l.b16 %v2661
      %v2790 = vunpack.c.l.b16 %v2662
      %v2791 = vunpack.c.l.b16 %v2663
      %v2792 = vunpack.c.l.b16 %v2664
      %v2793 = vunpack.c.l.b16 %v2665
      %v2794 = vunpack.c.l.b16 %v2666
      %v2795 = vunpack.c.l.b16 %v2667
      %v2796 = vunpack.c.l.b16 %v2668
      %v2797 = vunpack.c.l.b16 %v2669
      %v2798 = vunpack.c.l.b16 %v2670
      %v2799 = vunpack.c.l.b16 %v2671
      %v2800 = vunpack.c.l.b16 %v2672
      %v2801 = vunpack.c.l.b16 %v2673
      %v2802 = vunpack.c.l.b16 %v2674
      %v2803 = vunpack.c.l.b16 %v2675
      %v2804 = vunpack.c.l.b16 %v2676
      %v2805 = vunpack.c.l.b16 %v2677
      %v2806 = vunpack.c.l.b16 %v2678
      %v2807 = vunpack.c.l.b16 %v2679
      %v2808 = vunpack.c.l.b16 %v2680
      %v2809 = vunpack.c.l.b16 %v2681
      %v2810 = vunpack.c.l.b16 %v2682
      %v2811 = vunpack.c.l.b16 %v2683
      %v2812 = vunpack.c.l.b16 %v2684
      %v2813 = vunpack.c.l.b16 %v2685
      %v2814 = vunpack.c.l.b16 %v2686
      %v2815 = vunpack.c.l.b16 %v2687
      %v2816 = vunpack.c.l.b16 %v2688
      %v2817 = vunpack.c.l.b16 %v2689
      %v2818 = vunpack.c.l.b16 %v2690
      %v2819 = vunpack.c.l.b16 %v2691
      %v2820 = vunpack.c.l.b16 %v2692
      %v2821 = vunpack.c.l.b16 %v2693
      %v2822 = vunpack.c.l.b16 %v2694
      %v2823 = vunpack.c.l.b16 %v2695
      %v2824 = vunpack.c.l.b16 %v2696
      %v2825 = vunpack.c.l.b16 %v2697
      %v2826 = vunpack.c.l.b16 %v2698
      %v2827 = vunpack.c.l.b16 %v2699
      %v2828 = vunpack.c.l.b16 %v2700
      %v2829 = vunpack.c.l.b16 %v2701
      %v2830 = vunpack.c.l.b16 %v2702
      %v2831 = vunpack.c.l.b16 %v2703
      %v2832 = vunpack.c.l.b16 %v2704
      %v2833 = vunpack.c.l.b16 %v2705
      %v2834 = vunpack.c.l.b16 %v2706
      %v2835 = vunpack.c.l.b16 %v2707
      %v2836 = vunpack.c.l.b16 %v2708
      %v2837 = vunpack.c.l.b16 %v2709
      %v2838 = vunpack.c.l.b16 %v2710
      %v2839 = vunpack.c.l.b16 %v2711
      %v2840 = vunpack.c.l.b16 %v2712
      %v2841 = vunpack.c.l.b16 %v2713
      %v2842 = vunpack.c.l.b16 %v2714
      %v2843 = vunpack.c.l.b16 %v2715
      %v2844 = vunpack.c.l.b16 %v2716
      %v2845 = vunpack.c.l.b16 %v2717
      %v2846 = vunpack.c.l.b16 %v2718
      %v2847 = vunpack.c.l.b16 %v2719
      %v2848 = vunpack.c.l.b16 %v2720
      %v2849 = vpack.c.b16 %v2786, %v2785
      %v2850 = vpack.c.b16 %v2788, %v2787
      %v2851 = vpack.c.b16 %v2790, %v2789
      %v2852 = vpack.c.b16 %v2792, %v2791
      %v2853 = vpack.c.b16 %v2794, %v2793
      %v2854 = vpack.c.b16 %v2796, %v2795
      %v2855 = vpack.c.b16 %v2798, %v2797
      %v2856 = vpack.c.b16 %v2800, %v2799
      %v2857 = vpack.c.b16 %v2802, %v2801
      %v2858 = vpack.c.b16 %v2804, %v2803
      %v2859 = vpack.c.b16 %v2806, %v2805
      %v2860 = vpack.c.b16 %v2808, %v2807
      %v2861 = vpack.c.b16 %v2810, %v2809
      %v2862 = vpack.c.b16 %v2812, %v2811
      %v2863 = vpack.c.b16 %v2814, %v2813
      %v2864 = vpack.c.b16 %v2816, %v2815
      %v2865 = vpack.c.b16 %v2818, %v2817
      %v2866 = vpack.c.b16 %v2820, %v2819
      %v2867 = vpack.c.b16 %v2822, %v2821
      %v2868 = vpack.c.b16 %v2824, %v2823
      %v2869 = vpack.c.b16 %v2826, %v2825
      %v2870 = vpack.c.b16 %v2828, %v2827
      %v2871 = vpack.c.b16 %v2830, %v2829
      %v2872 = vpack.c.b16 %v2832, %v2831
      %v2873 = vpack.c.b16 %v2834, %v2833
      %v2874 = vpack.c.b16 %v2836, %v2835
      %v2875 = vpack.c.b16 %v2838, %v2837
      %v2876 = vpack.c.b16 %v2840, %v2839
      %v2877 = vpack.c.b16 %v2842, %v2841
      %v2878 = vpack.c.b16 %v2844, %v2843
      %v2879 = vpack.c.b16 %v2846, %v2845
      %v2880 = vpack.c.b16 %v2848, %v2847
      %2913 = vmatpush.bf16.msra.mxu0 %v2856
      %2914 = vmatpush.bf16.msra.mxu0 %v2855
      %2915 = vmatpush.bf16.msra.mxu0 %v2854
      %2916 = vmatpush.bf16.msra.mxu0 %v2853
      %2917 = vmatpush.bf16.msra.mxu0 %v2852
      %2918 = vmatpush.bf16.msra.mxu0 %v2851
      %2919 = vmatpush.bf16.msra.mxu0 %v2850
      %2920 = vmatpush.bf16.msra.mxu0 %v2849
      %2921 = vmatmul.bf16.gmra.mxu0 %v2653
      %v2922 = vpop.f32.mrf.mxu0
      %v2923 = vadd.f32 0.0, %v2922
      %v2924 = vpop.f32.mrf.mxu0
      %v2925 = vadd.f32 0.0, %v2924
      %2926 = vdwg.mxu0
      %2927 = vmatpush.bf16.msra.mxu0 %v2864
      %2928 = vmatpush.bf16.msra.mxu0 %v2863
      %2929 = vmatpush.bf16.msra.mxu0 %v2862
      %2930 = vmatpush.bf16.msra.mxu0 %v2861
      %2931 = vmatpush.bf16.msra.mxu0 %v2860
      %2932 = vmatpush.bf16.msra.mxu0 %v2859
      %2933 = vmatpush.bf16.msra.mxu0 %v2858
      %2934 = vmatpush.bf16.msra.mxu0 %v2857
      %2935 = vmatmul.bf16.gmra.mxu0 %v2654
      %v2936 = vpop.f32.mrf.mxu0
      %v2937 = vadd.f32 %v2923, %v2936
      %v2938 = vpop.f32.mrf.mxu0
      %v2939 = vadd.f32 %v2925, %v2938
      %2940 = vdwg.mxu0
      %2941 = vmatpush.bf16.msra.mxu0 %v2872
      %2942 = vmatpush.bf16.msra.mxu0 %v2871
      %2943 = vmatpush.bf16.msra.mxu0 %v2870
      %2944 = vmatpush.bf16.msra.mxu0 %v2869
      %2945 = vmatpush.bf16.msra.mxu0 %v2868
      %2946 = vmatpush.bf16.msra.mxu0 %v2867
      %2947 = vmatpush.bf16.msra.mxu0 %v2866
      %2948 = vmatpush.bf16.msra.mxu0 %v2865
      %2949 = vmatmul.bf16.gmra.mxu0 %v2655
      %v2950 = vpop.f32.mrf.mxu0
      %v2951 = vadd.f32 %v2937, %v2950
      %v2952 = vpop.f32.mrf.mxu0
      %v2953 = vadd.f32 %v2939, %v2952
      %2954 = vdwg.mxu0
      %2955 = vmatpush.bf16.msra.mxu0 %v2880
      %2956 = vmatpush.bf16.msra.mxu0 %v2879
      %2957 = vmatpush.bf16.msra.mxu0 %v2878
      %2958 = vmatpush.bf16.msra.mxu0 %v2877
      %2959 = vmatpush.bf16.msra.mxu0 %v2876
      %2960 = vmatpush.bf16.msra.mxu0 %v2875
      %2961 = vmatpush.bf16.msra.mxu0 %v2874
      %2962 = vmatpush.bf16.msra.mxu0 %v2873
      %2963 = vmatmul.bf16.gmra.mxu0 %v2656
      %v2964 = vpop.f32.mrf.mxu0
      %v2965 = vadd.f32 %v2951, %v2964
      %v2966 = vpop.f32.mrf.mxu0
      %v2967 = vadd.f32 %v2953, %v2966
      %2968 = vdwg.mxu0
      %v2969 = vadd.f32 %v2020, %v2965
      %v2970 = vadd.f32 %v2021, %v2967
      %v2971 = vld [vmem:[%s10] sm:$0x1]
      %v2973 = vperm.slane %v2971, 0
      %v2975 = vadd.f32 %v2969, %v2973
      %v2976 = vadd.f32 %v2970, %v2973
      %s2977 = scalar_lea.vmem %s11, 1
      %v2978 = vld [vmem:[%s2977] sm:$0x1]
      %s2979 = scalar_lea.vmem %s12, 1
      %v2980 = vld [vmem:[%s2979] sm:$0x1]
      %2981 = vadd.xlane.f32.xlu0 %v2975
      %v2982 = vpop.xlane.xlu0 %2981
      %2983 = vadd.xlane.f32.xlu0 %v2976
      %v2984 = vpop.xlane.xlu0 %2983
      %v2985 = vmul.f32 %v2982, %v1236
      %v2986 = vmul.f32 %v2984, %v1236
      %v2987 = vsub.f32 %v2975, %v2985
      %v2988 = vsub.f32 %v2976, %v2986
      %v2989 = vmul.f32 %v2987, %v2987
      %v2990 = vmul.f32 %v2988, %v2988
      %2991 = vadd.xlane.f32.xlu0 %v2989
      %v2992 = vpop.xlane.xlu0 %2991
      %2993 = vadd.xlane.f32.xlu0 %v2990
      %v2994 = vpop.xlane.xlu0 %2993
      %v2995 = vmul.f32 %v2992, %v1236
      %v2996 = vmul.f32 %v2994, %v1236
      %v2997 = vadd.f32 %v2995, 1e-05
      %v2998 = vadd.f32 %v2996, 1e-05
      %v2999 = vrsqrt.pop %v2997
      %v3000 = vmul.f32 %v2999, %v2997
      %v3001 = vmul.f32 %v3000, %v2999
      %v3002 = vmul.f32 0.5, %v3001
      %v3003 = vsub.f32 1.5, %v3002
      %v3004 = vmul.f32 %v2999, %v3003
      %vm3005 = vweird.f32 %v2997
      %vm3006 = vweird.f32 %v2999
      %vm3007 = vmor %vm3005, %vm3006
      %v3008 = vsel %vm3007, %v2999, %v3004
      %v3009 = vrsqrt.pop %v2998
      %v3010 = vmul.f32 %v3009, %v2998
      %v3011 = vmul.f32 %v3010, %v3009
      %v3012 = vmul.f32 0.5, %v3011
      %v3013 = vsub.f32 1.5, %v3012
      %v3014 = vmul.f32 %v3009, %v3013
      %vm3015 = vweird.f32 %v2998
      %vm3016 = vweird.f32 %v3009
      %vm3017 = vmor %vm3015, %vm3016
      %v3018 = vsel %vm3017, %v3009, %v3014
      %v3019 = vmul.f32 %v2987, %v3008
      %v3020 = vmul.f32 %v2988, %v3018
      %v3022 = vperm.slane %v2978, 0
      %v3024 = vmul.f32 %v3019, %v3022
      %v3025 = vmul.f32 %v3020, %v3022
      %v3027 = vperm.slane %v2980, 0
      %v3029 = vadd.f32 %v3024, %v3027
      %v3030 = vadd.f32 %v3025, %v3027
      %v3031 = vpack.c.bf16 %v3030, %v3029
      %s3032 = scalar_lea.vmem %s3, 192
      %v3033 = vld [vmem:[%s3032] sm:$0xff]
      %v3034 = vld [vmem:[%s3032 + $0x8] sm:$0xf]
      %v3035 = vld [vmem:[%s3032 + $0xc] sm:$0xff]
      %v3036 = vld [vmem:[%s3032 + $0x14] sm:$0xf]
      %v3037 = vld [vmem:[%s3032 + $0x18] sm:$0xff]
      %v3038 = vld [vmem:[%s3032 + $0x20] sm:$0xf]
      %v3039 = vld [vmem:[%s3032 + $0x24] sm:$0xff]
      %v3040 = vld [vmem:[%s3032 + $0x2c] sm:$0xf]
      %v3041 = vld [vmem:[%s3032 + $0x30] sm:$0xff]
      %v3042 = vld [vmem:[%s3032 + $0x38] sm:$0xf]
      %v3043 = vld [vmem:[%s3032 + $0x3c] sm:$0xff]
      %v3044 = vld [vmem:[%s3032 + $0x44] sm:$0xf]
      %v3045 = vld [vmem:[%s3032 + $0x48] sm:$0xff]
      %v3046 = vld [vmem:[%s3032 + $0x50] sm:$0xf]
      %v3047 = vld [vmem:[%s3032 + $0x54] sm:$0xff]
      %v3048 = vld [vmem:[%s3032 + $0x5c] sm:$0xf]
      %v3049 = vld [vmem:[%s3032 + $0x60] sm:$0xff]
      %v3050 = vld [vmem:[%s3032 + $0x68] sm:$0xf]
      %v3051 = vld [vmem:[%s3032 + $0x6c] sm:$0xff]
      %v3052 = vld [vmem:[%s3032 + $0x74] sm:$0xf]
      %v3053 = vld [vmem:[%s3032 + $0x78] sm:$0xff]
      %v3054 = vld [vmem:[%s3032 + $0x80] sm:$0xf]
      %v3055 = vld [vmem:[%s3032 + $0x84] sm:$0xff]
      %v3056 = vld [vmem:[%s3032 + $0x8c] sm:$0xf]
      %v3057 = vld [vmem:[%s3032 + $0x90] sm:$0xff]
      %v3058 = vld [vmem:[%s3032 + $0x98] sm:$0xf]
      %v3059 = vld [vmem:[%s3032 + $0x9c] sm:$0xff]
      %v3060 = vld [vmem:[%s3032 + $0xa4] sm:$0xf]
      %v3061 = vld [vmem:[%s3032 + $0xa8] sm:$0xff]
      %v3062 = vld [vmem:[%s3032 + $0xb0] sm:$0xf]
      %v3063 = vld [vmem:[%s3032 + $0xb4] sm:$0xff]
      %v3064 = vld [vmem:[%s3032 + $0xbc] sm:$0xf]
      %s3065 = scalar_lea.vmem %s4, 3
      %v3066 = vld [vmem:[%s3065] sm:$0x7]
      %v3068 = vperm.slane %v3066, 0
      %v3069 = vperm.slane %v3066, 1
      %v3070 = vperm.slane %v3066, 2
      %v3106 = vunpack.c.l.b16 %v3033
      %v3107 = vunpack.c.h.b16 %v3033
      %v3108 = vunpack.c.l.b16 %v3034
      %v3109 = vunpack.c.l.b16 %v3035
      %v3110 = vunpack.c.h.b16 %v3035
      %v3111 = vunpack.c.l.b16 %v3036
      %v3112 = vunpack.c.l.b16 %v3037
      %v3113 = vunpack.c.h.b16 %v3037
      %v3114 = vunpack.c.l.b16 %v3038
      %v3115 = vunpack.c.l.b16 %v3039
      %v3116 = vunpack.c.h.b16 %v3039
      %v3117 = vunpack.c.l.b16 %v3040
      %v3118 = vunpack.c.l.b16 %v3041
      %v3119 = vunpack.c.h.b16 %v3041
      %v3120 = vunpack.c.l.b16 %v3042
      %v3121 = vunpack.c.l.b16 %v3043
      %v3122 = vunpack.c.h.b16 %v3043
      %v3123 = vunpack.c.l.b16 %v3044
      %v3124 = vunpack.c.l.b16 %v3045
      %v3125 = vunpack.c.h.b16 %v3045
      %v3126 = vunpack.c.l.b16 %v3046
      %v3127 = vunpack.c.l.b16 %v3047
      %v3128 = vunpack.c.h.b16 %v3047
      %v3129 = vunpack.c.l.b16 %v3048
      %v3130 = vunpack.c.l.b16 %v3049
      %v3131 = vunpack.c.h.b16 %v3049
      %v3132 = vunpack.c.l.b16 %v3050
      %v3133 = vunpack.c.l.b16 %v3051
      %v3134 = vunpack.c.h.b16 %v3051
      %v3135 = vunpack.c.l.b16 %v3052
      %v3136 = vunpack.c.l.b16 %v3053
      %v3137 = vunpack.c.h.b16 %v3053
      %v3138 = vunpack.c.l.b16 %v3054
      %v3139 = vunpack.c.l.b16 %v3055
      %v3140 = vunpack.c.h.b16 %v3055
      %v3141 = vunpack.c.l.b16 %v3056
      %v3142 = vunpack.c.l.b16 %v3057
      %v3143 = vunpack.c.h.b16 %v3057
      %v3144 = vunpack.c.l.b16 %v3058
      %v3145 = vunpack.c.l.b16 %v3059
      %v3146 = vunpack.c.h.b16 %v3059
      %v3147 = vunpack.c.l.b16 %v3060
      %v3148 = vunpack.c.l.b16 %v3061
      %v3149 = vunpack.c.h.b16 %v3061
      %v3150 = vunpack.c.l.b16 %v3062
      %v3151 = vunpack.c.l.b16 %v3063
      %v3152 = vunpack.c.h.b16 %v3063
      %v3153 = vunpack.c.l.b16 %v3064
      %v3154 = vpack.c.b16 %v3109, %v3106
      %v3155 = vpack.c.b16 %v3110, %v3107
      %v3156 = vpack.c.b16 %v3111, %v3108
      %v3157 = vpack.c.b16 %v3115, %v3112
      %v3158 = vpack.c.b16 %v3116, %v3113
      %v3159 = vpack.c.b16 %v3117, %v3114
      %v3160 = vpack.c.b16 %v3121, %v3118
      %v3161 = vpack.c.b16 %v3122, %v3119
      %v3162 = vpack.c.b16 %v3123, %v3120
      %v3163 = vpack.c.b16 %v3127, %v3124
      %v3164 = vpack.c.b16 %v3128, %v3125
      %v3165 = vpack.c.b16 %v3129, %v3126
      %v3166 = vpack.c.b16 %v3133, %v3130
      %v3167 = vpack.c.b16 %v3134, %v3131
      %v3168 = vpack.c.b16 %v3135, %v3132
      %v3169 = vpack.c.b16 %v3139, %v3136
      %v3170 = vpack.c.b16 %v3140, %v3137
      %v3171 = vpack.c.b16 %v3141, %v3138
      %v3172 = vpack.c.b16 %v3145, %v3142
      %v3173 = vpack.c.b16 %v3146, %v3143
      %v3174 = vpack.c.b16 %v3147, %v3144
      %v3175 = vpack.c.b16 %v3151, %v3148
      %v3176 = vpack.c.b16 %v3152, %v3149
      %v3177 = vpack.c.b16 %v3153, %v3150
      %3202 = vmatpush.bf16.msra.mxu0 %v3175
      %3203 = vmatpush.bf16.msra.mxu0 %v3172
      %3204 = vmatpush.bf16.msra.mxu0 %v3169
      %3205 = vmatpush.bf16.msra.mxu0 %v3166
      %3206 = vmatpush.bf16.msra.mxu0 %v3163
      %3207 = vmatpush.bf16.msra.mxu0 %v3160
      %3208 = vmatpush.bf16.msra.mxu0 %v3157
      %3209 = vmatpush.bf16.msra.mxu0 %v3154
      %3210 = vmatmul.bf16.gmra.mxu0 %v3031
      %v3211 = vpop.f32.mrf.mxu0
      %v3212 = vadd.f32 %v3068, %v3211
      %v3213 = vpop.f32.mrf.mxu0
      %v3214 = vadd.f32 %v3068, %v3213
      %3215 = vdwg.mxu0
      %3216 = vmatpush.bf16.msra.mxu0 %v3176
      %3217 = vmatpush.bf16.msra.mxu0 %v3173
      %3218 = vmatpush.bf16.msra.mxu0 %v3170
      %3219 = vmatpush.bf16.msra.mxu0 %v3167
      %3220 = vmatpush.bf16.msra.mxu0 %v3164
      %3221 = vmatpush.bf16.msra.mxu0 %v3161
      %3222 = vmatpush.bf16.msra.mxu0 %v3158
      %3223 = vmatpush.bf16.msra.mxu0 %v3155
      %3224 = vmatmul.bf16.gmra.mxu0 %v3031
      %v3225 = vpop.f32.mrf.mxu0
      %v3226 = vadd.f32 %v3069, %v3225
      %v3227 = vpop.f32.mrf.mxu0
      %v3228 = vadd.f32 %v3069, %v3227
      %3229 = vdwg.mxu0
      %3230 = vmatpush.bf16.msra.mxu0 %v3177
      %3231 = vmatpush.bf16.msra.mxu0 %v3174
      %3232 = vmatpush.bf16.msra.mxu0 %v3171
      %3233 = vmatpush.bf16.msra.mxu0 %v3168
      %3234 = vmatpush.bf16.msra.mxu0 %v3165
      %3235 = vmatpush.bf16.msra.mxu0 %v3162
      %3236 = vmatpush.bf16.msra.mxu0 %v3159
      %3237 = vmatpush.bf16.msra.mxu0 %v3156
      %3238 = vmatmul.bf16.gmra.mxu0 %v3031
      %v3239 = vpop.f32.mrf.mxu0
      %v3240 = vadd.f32 %v3070, %v3239
      %v3241 = vpop.f32.mrf.mxu0
      %v3242 = vadd.f32 %v3070, %v3241
      %3243 = vdwg.mxu0
      %v3244 = vpack.c.bf16 %v3226, %v3212
      %v3245 = vpack.c.bf16 %v3240, %v3240
      %v3246 = vpack.c.bf16 %v3228, %v3214
      %v3247 = vpack.c.bf16 %v3242, %v3242
      %v3250 = vunpack.c.l.b16 %v3244
      %v3251 = vunpack.c.l.b16 %v3246
      %v3252 = vpack.c.b16 %v3251, %v3250
      %v3253 = vunpack.c.h.b16 %v3244
      %v3254 = vunpack.c.h.b16 %v3246
      %v3255 = vpack.c.b16 %v3254, %v3253
      %v3257 = vsel %vm1506, %v3252, 0
      %v3260 = vsel %vm1506, %v3255, 0
      %3262 = vmatpush.bf16.xpose.msra.mxu0 0
      %3263 = vmatpush.bf16.xpose.msra.mxu0 0
      %3264 = vmatpush.bf16.xpose.msra.mxu0 0
      %3265 = vmatpush.bf16.xpose.msra.mxu0 0
      %3266 = vmatpush.bf16.xpose.msra.mxu0 0
      %3267 = vmatpush.bf16.xpose.msra.mxu0 0
      %3268 = vmatpush.bf16.xpose.msra.mxu0 0
      %3269 = vmatpush.bf16.xpose.msra.mxu0 %v3260
      %3270 = vmatmul.bf16.gmra.mxu0 %v3257
      %v3271 = vpop.f32.mrf.mxu0
      %v3272 = vadd.f32 0.0, %v3271
      %v3273 = vpop.f32.mrf.mxu0
      %v3274 = vadd.f32 0.0, %v3273
      %3275 = vdwg.mxu0
      %3276 = vrot.lane.b32.xlu0 %v3252, 96
      %v3277 = vpop.permute.xlu0 %3276
      %3278 = vrot.lane.b32.xlu0 %v3255, 96
      %v3279 = vpop.permute.xlu0 %3278
      %v3281 = vsel %vm1506, %v3277, 0
      %v3284 = vsel %vm1506, %v3279, 0
      %3286 = vmatpush.bf16.xpose.msra.mxu0 0
      %3287 = vmatpush.bf16.xpose.msra.mxu0 0
      %3288 = vmatpush.bf16.xpose.msra.mxu0 0
      %3289 = vmatpush.bf16.xpose.msra.mxu0 0
      %3290 = vmatpush.bf16.xpose.msra.mxu0 0
      %3291 = vmatpush.bf16.xpose.msra.mxu0 0
      %3292 = vmatpush.bf16.xpose.msra.mxu0 0
      %3293 = vmatpush.bf16.xpose.msra.mxu0 %v3284
      %3294 = vmatmul.bf16.gmra.mxu0 %v3281
      %v3295 = vpop.f32.mrf.mxu0
      %v3296 = vadd.f32 0.0, %v3295
      %v3297 = vpop.f32.mrf.mxu0
      %v3298 = vadd.f32 0.0, %v3297
      %3299 = vdwg.mxu0
      %3300 = vrot.lane.b32.xlu0 %v3252, 64
      %v3301 = vpop.permute.xlu0 %3300
      %3302 = vrot.lane.b32.xlu0 %v3255, 64
      %v3303 = vpop.permute.xlu0 %3302
      %v3305 = vsel %vm1506, %v3301, 0
      %v3308 = vsel %vm1506, %v3303, 0
      %3310 = vmatpush.bf16.xpose.msra.mxu0 0
      %3311 = vmatpush.bf16.xpose.msra.mxu0 0
      %3312 = vmatpush.bf16.xpose.msra.mxu0 0
      %3313 = vmatpush.bf16.xpose.msra.mxu0 0
      %3314 = vmatpush.bf16.xpose.msra.mxu0 0
      %3315 = vmatpush.bf16.xpose.msra.mxu0 0
      %3316 = vmatpush.bf16.xpose.msra.mxu0 0
      %3317 = vmatpush.bf16.xpose.msra.mxu0 %v3308
      %3318 = vmatmul.bf16.gmra.mxu0 %v3305
      %v3319 = vpop.f32.mrf.mxu0
      %v3320 = vadd.f32 0.0, %v3319
      %v3321 = vpop.f32.mrf.mxu0
      %v3322 = vadd.f32 0.0, %v3321
      %3323 = vdwg.mxu0
      %3324 = vrot.lane.b32.xlu0 %v3252, 32
      %v3325 = vpop.permute.xlu0 %3324
      %3326 = vrot.lane.b32.xlu0 %v3255, 32
      %v3327 = vpop.permute.xlu0 %3326
      %v3329 = vsel %vm1506, %v3325, 0
      %v3332 = vsel %vm1506, %v3327, 0
      %3334 = vmatpush.bf16.xpose.msra.mxu0 0
      %3335 = vmatpush.bf16.xpose.msra.mxu0 0
      %3336 = vmatpush.bf16.xpose.msra.mxu0 0
      %3337 = vmatpush.bf16.xpose.msra.mxu0 0
      %3338 = vmatpush.bf16.xpose.msra.mxu0 0
      %3339 = vmatpush.bf16.xpose.msra.mxu0 0
      %3340 = vmatpush.bf16.xpose.msra.mxu0 0
      %3341 = vmatpush.bf16.xpose.msra.mxu0 %v3332
      %3342 = vmatmul.bf16.gmra.mxu0 %v3329
      %v3343 = vpop.f32.mrf.mxu0
      %v3344 = vadd.f32 0.0, %v3343
      %v3345 = vpop.f32.mrf.mxu0
      %v3346 = vadd.f32 0.0, %v3345
      %3347 = vdwg.mxu0
      %v3348 = vsel %vm1599, %v3272, -inf
      %3349 = vmax.xlane.f32.xlu0 %v3348
      %v3350 = vpop.xlane.xlu0 %3349
      %v3351 = vsel %vm1599, %v3274, -inf
      %3352 = vmax.xlane.f32.xlu0 %v3351
      %v3353 = vpop.xlane.xlu0 %3352
      %v3354 = vsel %vm1599, %v3296, -inf
      %3355 = vmax.xlane.f32.xlu0 %v3354
      %v3356 = vpop.xlane.xlu0 %3355
      %v3357 = vsel %vm1599, %v3298, -inf
      %3358 = vmax.xlane.f32.xlu0 %v3357
      %v3359 = vpop.xlane.xlu0 %3358
      %v3360 = vsel %vm1599, %v3320, -inf
      %3361 = vmax.xlane.f32.xlu0 %v3360
      %v3362 = vpop.xlane.xlu0 %3361
      %v3363 = vsel %vm1599, %v3322, -inf
      %3364 = vmax.xlane.f32.xlu0 %v3363
      %v3365 = vpop.xlane.xlu0 %3364
      %v3366 = vsel %vm1599, %v3344, -inf
      %3367 = vmax.xlane.f32.xlu0 %v3366
      %v3368 = vpop.xlane.xlu0 %3367
      %v3369 = vsel %vm1599, %v3346, -inf
      %3370 = vmax.xlane.f32.xlu0 %v3369
      %v3371 = vpop.xlane.xlu0 %3370
      %v3372 = vsub.f32 %v3272, %v3350
      %v3373 = vsub.f32 %v3274, %v3353
      %v3374 = vsub.f32 %v3296, %v3356
      %v3375 = vsub.f32 %v3298, %v3359
      %v3376 = vsub.f32 %v3320, %v3362
      %v3377 = vsub.f32 %v3322, %v3365
      %v3378 = vsub.f32 %v3344, %v3368
      %v3379 = vsub.f32 %v3346, %v3371
      %v3380 = vmul.f32 %v3372, 1.442695
      %v3381 = vpow.pop %v3380
      %v3382 = vmul.f32 %v3373, 1.442695
      %v3383 = vpow.pop %v3382
      %v3384 = vmul.f32 %v3374, 1.442695
      %v3385 = vpow.pop %v3384
      %v3386 = vmul.f32 %v3375, 1.442695
      %v3387 = vpow.pop %v3386
      %v3388 = vmul.f32 %v3376, 1.442695
      %v3389 = vpow.pop %v3388
      %v3390 = vmul.f32 %v3377, 1.442695
      %v3391 = vpow.pop %v3390
      %v3392 = vmul.f32 %v3378, 1.442695
      %v3393 = vpow.pop %v3392
      %v3394 = vmul.f32 %v3379, 1.442695
      %v3395 = vpow.pop %v3394
      %v3396 = vsel %vm1599, %v3381, 0.0
      %3397 = vadd.xlane.f32.xlu0 %v3396
      %v3398 = vpop.xlane.xlu0 %3397
      %v3399 = vsel %vm1599, %v3383, 0.0
      %3400 = vadd.xlane.f32.xlu0 %v3399
      %v3401 = vpop.xlane.xlu0 %3400
      %v3402 = vsel %vm1599, %v3385, 0.0
      %3403 = vadd.xlane.f32.xlu0 %v3402
      %v3404 = vpop.xlane.xlu0 %3403
      %v3405 = vsel %vm1599, %v3387, 0.0
      %3406 = vadd.xlane.f32.xlu0 %v3405
      %v3407 = vpop.xlane.xlu0 %3406
      %v3408 = vsel %vm1599, %v3389, 0.0
      %3409 = vadd.xlane.f32.xlu0 %v3408
      %v3410 = vpop.xlane.xlu0 %3409
      %v3411 = vsel %vm1599, %v3391, 0.0
      %3412 = vadd.xlane.f32.xlu0 %v3411
      %v3413 = vpop.xlane.xlu0 %3412
      %v3414 = vsel %vm1599, %v3393, 0.0
      %3415 = vadd.xlane.f32.xlu0 %v3414
      %v3416 = vpop.xlane.xlu0 %3415
      %v3417 = vsel %vm1599, %v3395, 0.0
      %3418 = vadd.xlane.f32.xlu0 %v3417
      %v3419 = vpop.xlane.xlu0 %3418
      %v3420 = vrcp.pop %v3398
      %v3421 = vmul.f32 %v3398, %v3420
      %v3422 = vsub.f32 1.0, %v3421
      %v3423 = vmul.f32 %v3420, %v3422
      %v3424 = vadd.f32 %v3420, %v3423
      %vm3425 = vweird.f32 %v3398
      %vm3426 = vweird.f32 %v3420
      %vm3427 = vmor %vm3425, %vm3426
      %v3428 = vsel %vm3427, %v3420, %v3424
      %v3429 = vand.u32 2147483647, %v3398
      %vm3430 = vcmp.eq.f32.partialorder %v3429, 8.507059e+37
      %v3431 = vand.u32 %v3398, 2147483648
      %v3432 = vor.u32 1.1754944e-38, %v3431
      %v3433 = vsel %vm3430, %v3432, %v3428
      %v3434 = vmul.f32 %v3381, %v3433
      %v3435 = vrcp.pop %v3401
      %v3436 = vmul.f32 %v3401, %v3435
      %v3437 = vsub.f32 1.0, %v3436
      %v3438 = vmul.f32 %v3435, %v3437
      %v3439 = vadd.f32 %v3435, %v3438
      %vm3440 = vweird.f32 %v3401
      %vm3441 = vweird.f32 %v3435
      %vm3442 = vmor %vm3440, %vm3441
      %v3443 = vsel %vm3442, %v3435, %v3439
      %v3444 = vand.u32 2147483647, %v3401
      %vm3445 = vcmp.eq.f32.partialorder %v3444, 8.507059e+37
      %v3446 = vand.u32 %v3401, 2147483648
      %v3447 = vor.u32 1.1754944e-38, %v3446
      %v3448 = vsel %vm3445, %v3447, %v3443
      %v3449 = vmul.f32 %v3383, %v3448
      %v3450 = vrcp.pop %v3404
      %v3451 = vmul.f32 %v3404, %v3450
      %v3452 = vsub.f32 1.0, %v3451
      %v3453 = vmul.f32 %v3450, %v3452
      %v3454 = vadd.f32 %v3450, %v3453
      %vm3455 = vweird.f32 %v3404
      %vm3456 = vweird.f32 %v3450
      %vm3457 = vmor %vm3455, %vm3456
      %v3458 = vsel %vm3457, %v3450, %v3454
      %v3459 = vand.u32 2147483647, %v3404
      %vm3460 = vcmp.eq.f32.partialorder %v3459, 8.507059e+37
      %v3461 = vand.u32 %v3404, 2147483648
      %v3462 = vor.u32 1.1754944e-38, %v3461
      %v3463 = vsel %vm3460, %v3462, %v3458
      %v3464 = vmul.f32 %v3385, %v3463
      %v3465 = vrcp.pop %v3407
      %v3466 = vmul.f32 %v3407, %v3465
      %v3467 = vsub.f32 1.0, %v3466
      %v3468 = vmul.f32 %v3465, %v3467
      %v3469 = vadd.f32 %v3465, %v3468
      %vm3470 = vweird.f32 %v3407
      %vm3471 = vweird.f32 %v3465
      %vm3472 = vmor %vm3470, %vm3471
      %v3473 = vsel %vm3472, %v3465, %v3469
      %v3474 = vand.u32 2147483647, %v3407
      %vm3475 = vcmp.eq.f32.partialorder %v3474, 8.507059e+37
      %v3476 = vand.u32 %v3407, 2147483648
      %v3477 = vor.u32 1.1754944e-38, %v3476
      %v3478 = vsel %vm3475, %v3477, %v3473
      %v3479 = vmul.f32 %v3387, %v3478
      %v3480 = vrcp.pop %v3410
      %v3481 = vmul.f32 %v3410, %v3480
      %v3482 = vsub.f32 1.0, %v3481
      %v3483 = vmul.f32 %v3480, %v3482
      %v3484 = vadd.f32 %v3480, %v3483
      %vm3485 = vweird.f32 %v3410
      %vm3486 = vweird.f32 %v3480
      %vm3487 = vmor %vm3485, %vm3486
      %v3488 = vsel %vm3487, %v3480, %v3484
      %v3489 = vand.u32 2147483647, %v3410
      %vm3490 = vcmp.eq.f32.partialorder %v3489, 8.507059e+37
      %v3491 = vand.u32 %v3410, 2147483648
      %v3492 = vor.u32 1.1754944e-38, %v3491
      %v3493 = vsel %vm3490, %v3492, %v3488
      %v3494 = vmul.f32 %v3389, %v3493
      %v3495 = vrcp.pop %v3413
      %v3496 = vmul.f32 %v3413, %v3495
      %v3497 = vsub.f32 1.0, %v3496
      %v3498 = vmul.f32 %v3495, %v3497
      %v3499 = vadd.f32 %v3495, %v3498
      %vm3500 = vweird.f32 %v3413
      %vm3501 = vweird.f32 %v3495
      %vm3502 = vmor %vm3500, %vm3501
      %v3503 = vsel %vm3502, %v3495, %v3499
      %v3504 = vand.u32 2147483647, %v3413
      %vm3505 = vcmp.eq.f32.partialorder %v3504, 8.507059e+37
      %v3506 = vand.u32 %v3413, 2147483648
      %v3507 = vor.u32 1.1754944e-38, %v3506
      %v3508 = vsel %vm3505, %v3507, %v3503
      %v3509 = vmul.f32 %v3391, %v3508
      %v3510 = vrcp.pop %v3416
      %v3511 = vmul.f32 %v3416, %v3510
      %v3512 = vsub.f32 1.0, %v3511
      %v3513 = vmul.f32 %v3510, %v3512
      %v3514 = vadd.f32 %v3510, %v3513
      %vm3515 = vweird.f32 %v3416
      %vm3516 = vweird.f32 %v3510
      %vm3517 = vmor %vm3515, %vm3516
      %v3518 = vsel %vm3517, %v3510, %v3514
      %v3519 = vand.u32 2147483647, %v3416
      %vm3520 = vcmp.eq.f32.partialorder %v3519, 8.507059e+37
      %v3521 = vand.u32 %v3416, 2147483648
      %v3522 = vor.u32 1.1754944e-38, %v3521
      %v3523 = vsel %vm3520, %v3522, %v3518
      %v3524 = vmul.f32 %v3393, %v3523
      %v3525 = vrcp.pop %v3419
      %v3526 = vmul.f32 %v3419, %v3525
      %v3527 = vsub.f32 1.0, %v3526
      %v3528 = vmul.f32 %v3525, %v3527
      %v3529 = vadd.f32 %v3525, %v3528
      %vm3530 = vweird.f32 %v3419
      %vm3531 = vweird.f32 %v3525
      %vm3532 = vmor %vm3530, %vm3531
      %v3533 = vsel %vm3532, %v3525, %v3529
      %v3534 = vand.u32 2147483647, %v3419
      %vm3535 = vcmp.eq.f32.partialorder %v3534, 8.507059e+37
      %v3536 = vand.u32 %v3419, 2147483648
      %v3537 = vor.u32 1.1754944e-38, %v3536
      %v3538 = vsel %vm3535, %v3537, %v3533
      %v3539 = vmul.f32 %v3395, %v3538
      %v3540 = vpack.c.bf16 %v3434, %v3434
      %v3541 = vpack.c.bf16 %v3449, %v3449
      %v3542 = vpack.c.bf16 %v3464, %v3464
      %v3543 = vpack.c.bf16 %v3479, %v3479
      %v3544 = vpack.c.bf16 %v3494, %v3494
      %v3545 = vpack.c.bf16 %v3509, %v3509
      %v3546 = vpack.c.bf16 %v3524, %v3524
      %v3547 = vpack.c.bf16 %v3539, %v3539
      %v3550 = vunpack.c.l.b16 %v3540
      %v3551 = vunpack.c.l.b16 %v3541
      %v3552 = vpack.c.b16 %v3551, %v3550
      %v3555 = vunpack.c.l.b16 %v3245
      %v3556 = vunpack.c.l.b16 %v3247
      %v3557 = vpack.c.b16 %v3556, %v3555
      %v3560 = vsel %vm1599, %v3552, 0
      %3562 = vmatpush.bf16.msra.mxu0 0
      %3563 = vmatpush.bf16.msra.mxu0 0
      %3564 = vmatpush.bf16.msra.mxu0 0
      %3565 = vmatpush.bf16.msra.mxu0 0
      %3566 = vmatpush.bf16.msra.mxu0 0
      %3567 = vmatpush.bf16.msra.mxu0 0
      %3568 = vmatpush.bf16.msra.mxu0 0
      %3569 = vmatpush.bf16.msra.mxu0 %v3557
      %3570 = vmatmul.bf16.gmra.mxu0 %v3560
      %v3571 = vpop.f32.mrf.mxu0
      %v3572 = vadd.f32 0.0, %v3571
      %v3573 = vpop.f32.mrf.mxu0
      %v3574 = vadd.f32 0.0, %v3573
      %3575 = vdwg.mxu0
      %v3578 = vunpack.c.l.b16 %v3542
      %v3579 = vunpack.c.l.b16 %v3543
      %v3580 = vpack.c.b16 %v3579, %v3578
      %3581 = vrot.lane.b32.xlu0 %v3557, 96
      %v3582 = vpop.permute.xlu0 %3581
      %v3585 = vsel %vm1599, %v3580, 0
      %3587 = vmatpush.bf16.msra.mxu0 0
      %3588 = vmatpush.bf16.msra.mxu0 0
      %3589 = vmatpush.bf16.msra.mxu0 0
      %3590 = vmatpush.bf16.msra.mxu0 0
      %3591 = vmatpush.bf16.msra.mxu0 0
      %3592 = vmatpush.bf16.msra.mxu0 0
      %3593 = vmatpush.bf16.msra.mxu0 0
      %3594 = vmatpush.bf16.msra.mxu0 %v3582
      %3595 = vmatmul.bf16.gmra.mxu0 %v3585
      %v3596 = vpop.f32.mrf.mxu0
      %v3597 = vadd.f32 0.0, %v3596
      %v3598 = vpop.f32.mrf.mxu0
      %v3599 = vadd.f32 0.0, %v3598
      %3600 = vdwg.mxu0
      %v3603 = vunpack.c.l.b16 %v3544
      %v3604 = vunpack.c.l.b16 %v3545
      %v3605 = vpack.c.b16 %v3604, %v3603
      %3606 = vrot.lane.b32.xlu0 %v3557, 64
      %v3607 = vpop.permute.xlu0 %3606
      %v3610 = vsel %vm1599, %v3605, 0
      %3612 = vmatpush.bf16.msra.mxu0 0
      %3613 = vmatpush.bf16.msra.mxu0 0
      %3614 = vmatpush.bf16.msra.mxu0 0
      %3615 = vmatpush.bf16.msra.mxu0 0
      %3616 = vmatpush.bf16.msra.mxu0 0
      %3617 = vmatpush.bf16.msra.mxu0 0
      %3618 = vmatpush.bf16.msra.mxu0 0
      %3619 = vmatpush.bf16.msra.mxu0 %v3607
      %3620 = vmatmul.bf16.gmra.mxu0 %v3610
      %v3621 = vpop.f32.mrf.mxu0
      %v3622 = vadd.f32 0.0, %v3621
      %v3623 = vpop.f32.mrf.mxu0
      %v3624 = vadd.f32 0.0, %v3623
      %3625 = vdwg.mxu0
      %v3628 = vunpack.c.l.b16 %v3546
      %v3629 = vunpack.c.l.b16 %v3547
      %v3630 = vpack.c.b16 %v3629, %v3628
      %3631 = vrot.lane.b32.xlu0 %v3557, 32
      %v3632 = vpop.permute.xlu0 %3631
      %v3635 = vsel %vm1599, %v3630, 0
      %3637 = vmatpush.bf16.msra.mxu0 0
      %3638 = vmatpush.bf16.msra.mxu0 0
      %3639 = vmatpush.bf16.msra.mxu0 0
      %3640 = vmatpush.bf16.msra.mxu0 0
      %3641 = vmatpush.bf16.msra.mxu0 0
      %3642 = vmatpush.bf16.msra.mxu0 0
      %3643 = vmatpush.bf16.msra.mxu0 0
      %3644 = vmatpush.bf16.msra.mxu0 %v3632
      %3645 = vmatmul.bf16.gmra.mxu0 %v3635
      %v3646 = vpop.f32.mrf.mxu0
      %v3647 = vadd.f32 0.0, %v3646
      %v3648 = vpop.f32.mrf.mxu0
      %v3649 = vadd.f32 0.0, %v3648
      %3650 = vdwg.mxu0
      %3653 = vrot.lane.b32.xlu0 %v3597, 32
      %v3654 = vpop.permute.xlu0 %3653
      %3655 = vrot.lane.b32.xlu0 %v3599, 32
      %v3656 = vpop.permute.xlu0 %3655
      %3661 = vrot.lane.b32.xlu0 %v3622, 64
      %v3662 = vpop.permute.xlu0 %3661
      %3663 = vrot.lane.b32.xlu0 %v3624, 64
      %v3664 = vpop.permute.xlu0 %3663
      %3669 = vrot.lane.b32.xlu0 %v3647, 96
      %v3670 = vpop.permute.xlu0 %3669
      %3671 = vrot.lane.b32.xlu0 %v3649, 96
      %v3672 = vpop.permute.xlu0 %3671
      %v3675 = vsel %vm1506, %v3572, %v3654
      %v3676 = vsel %vm1506, %v3574, %v3656
      %v3677 = vsel %vm1929, %v3675, %v3662
      %v3678 = vsel %vm1929, %v3676, %v3664
      %v3679 = vsel %vm1932, %v3677, %v3670
      %v3680 = vsel %vm1932, %v3678, %v3672
      %v3681 = vpack.c.bf16 %v3680, %v3679
      %s3682 = scalar_lea.vmem %s5, 64
      %v3683 = vld [vmem:[%s3682] sm:$0xf]
      %v3684 = vld [vmem:[%s3682 + $0x4] sm:$0xf]
      %v3685 = vld [vmem:[%s3682 + $0x8] sm:$0xf]
      %v3686 = vld [vmem:[%s3682 + $0xc] sm:$0xf]
      %v3687 = vld [vmem:[%s3682 + $0x10] sm:$0xf]
      %v3688 = vld [vmem:[%s3682 + $0x14] sm:$0xf]
      %v3689 = vld [vmem:[%s3682 + $0x18] sm:$0xf]
      %v3690 = vld [vmem:[%s3682 + $0x1c] sm:$0xf]
      %v3691 = vld [vmem:[%s3682 + $0x20] sm:$0xf]
      %v3692 = vld [vmem:[%s3682 + $0x24] sm:$0xf]
      %v3693 = vld [vmem:[%s3682 + $0x28] sm:$0xf]
      %v3694 = vld [vmem:[%s3682 + $0x2c] sm:$0xf]
      %v3695 = vld [vmem:[%s3682 + $0x30] sm:$0xf]
      %v3696 = vld [vmem:[%s3682 + $0x34] sm:$0xf]
      %v3697 = vld [vmem:[%s3682 + $0x38] sm:$0xf]
      %v3698 = vld [vmem:[%s3682 + $0x3c] sm:$0xf]
      %v3715 = vunpack.c.l.b16 %v3683
      %v3716 = vunpack.c.l.b16 %v3684
      %v3717 = vunpack.c.l.b16 %v3685
      %v3718 = vunpack.c.l.b16 %v3686
      %v3719 = vunpack.c.l.b16 %v3687
      %v3720 = vunpack.c.l.b16 %v3688
      %v3721 = vunpack.c.l.b16 %v3689
      %v3722 = vunpack.c.l.b16 %v3690
      %v3723 = vunpack.c.l.b16 %v3691
      %v3724 = vunpack.c.l.b16 %v3692
      %v3725 = vunpack.c.l.b16 %v3693
      %v3726 = vunpack.c.l.b16 %v3694
      %v3727 = vunpack.c.l.b16 %v3695
      %v3728 = vunpack.c.l.b16 %v3696
      %v3729 = vunpack.c.l.b16 %v3697
      %v3730 = vunpack.c.l.b16 %v3698
      %v3731 = vpack.c.b16 %v3716, %v3715
      %v3732 = vpack.c.b16 %v3718, %v3717
      %v3733 = vpack.c.b16 %v3720, %v3719
      %v3734 = vpack.c.b16 %v3722, %v3721
      %v3735 = vpack.c.b16 %v3724, %v3723
      %v3736 = vpack.c.b16 %v3726, %v3725
      %v3737 = vpack.c.b16 %v3728, %v3727
      %v3738 = vpack.c.b16 %v3730, %v3729
      %3747 = vmatpush.bf16.msra.mxu0 %v3738
      %3748 = vmatpush.bf16.msra.mxu0 %v3737
      %3749 = vmatpush.bf16.msra.mxu0 %v3736
      %3750 = vmatpush.bf16.msra.mxu0 %v3735
      %3751 = vmatpush.bf16.msra.mxu0 %v3734
      %3752 = vmatpush.bf16.msra.mxu0 %v3733
      %3753 = vmatpush.bf16.msra.mxu0 %v3732
      %3754 = vmatpush.bf16.msra.mxu0 %v3731
      %3755 = vmatmul.bf16.gmra.mxu0 %v3681
      %v3756 = vpop.f32.mrf.mxu0
      %v3757 = vadd.f32 0.0, %v3756
      %v3758 = vpop.f32.mrf.mxu0
      %v3759 = vadd.f32 0.0, %v3758
      %3760 = vdwg.mxu0
      %v3761 = vadd.f32 %v2975, %v3757
      %v3762 = vadd.f32 %v2976, %v3759
      %s3763 = scalar_lea.vmem %s6, 1
      %v3764 = vld [vmem:[%s3763] sm:$0x1]
      %v3766 = vperm.slane %v3764, 0
      %v3768 = vadd.f32 %v3761, %v3766
      %v3769 = vadd.f32 %v3762, %v3766
      %s3770 = scalar_lea.vmem %s13, 1
      %v3771 = vld [vmem:[%s3770] sm:$0x1]
      %s3772 = scalar_lea.vmem %s14, 1
      %v3773 = vld [vmem:[%s3772] sm:$0x1]
      %3774 = vadd.xlane.f32.xlu0 %v3768
      %v3775 = vpop.xlane.xlu0 %3774
      %3776 = vadd.xlane.f32.xlu0 %v3769
      %v3777 = vpop.xlane.xlu0 %3776
      %v3778 = vmul.f32 %v3775, %v1236
      %v3779 = vmul.f32 %v3777, %v1236
      %v3780 = vsub.f32 %v3768, %v3778
      %v3781 = vsub.f32 %v3769, %v3779
      %v3782 = vmul.f32 %v3780, %v3780
      %v3783 = vmul.f32 %v3781, %v3781
      %3784 = vadd.xlane.f32.xlu0 %v3782
      %v3785 = vpop.xlane.xlu0 %3784
      %3786 = vadd.xlane.f32.xlu0 %v3783
      %v3787 = vpop.xlane.xlu0 %3786
      %v3788 = vmul.f32 %v3785, %v1236
      %v3789 = vmul.f32 %v3787, %v1236
      %v3790 = vadd.f32 %v3788, 1e-05
      %v3791 = vadd.f32 %v3789, 1e-05
      %v3792 = vrsqrt.pop %v3790
      %v3793 = vmul.f32 %v3792, %v3790
      %v3794 = vmul.f32 %v3793, %v3792
      %v3795 = vmul.f32 0.5, %v3794
      %v3796 = vsub.f32 1.5, %v3795
      %v3797 = vmul.f32 %v3792, %v3796
      %vm3798 = vweird.f32 %v3790
      %vm3799 = vweird.f32 %v3792
      %vm3800 = vmor %vm3798, %vm3799
      %v3801 = vsel %vm3800, %v3792, %v3797
      %v3802 = vrsqrt.pop %v3791
      %v3803 = vmul.f32 %v3802, %v3791
      %v3804 = vmul.f32 %v3803, %v3802
      %v3805 = vmul.f32 0.5, %v3804
      %v3806 = vsub.f32 1.5, %v3805
      %v3807 = vmul.f32 %v3802, %v3806
      %vm3808 = vweird.f32 %v3791
      %vm3809 = vweird.f32 %v3802
      %vm3810 = vmor %vm3808, %vm3809
      %v3811 = vsel %vm3810, %v3802, %v3807
      %v3812 = vmul.f32 %v3780, %v3801
      %v3813 = vmul.f32 %v3781, %v3811
      %v3815 = vperm.slane %v3771, 0
      %v3817 = vmul.f32 %v3812, %v3815
      %v3818 = vmul.f32 %v3813, %v3815
      %v3820 = vperm.slane %v3773, 0
      %v3822 = vadd.f32 %v3817, %v3820
      %v3823 = vadd.f32 %v3818, %v3820
      %v3824 = vpack.c.bf16 %v3823, %v3822
      %s3825 = scalar_lea.vmem %s7, 256
      %v3826 = vld [vmem:[%s3825] sm:$0xff]
      %v3827 = vld [vmem:[%s3825 + $0x8] sm:$0xff]
      %v3828 = vld [vmem:[%s3825 + $0x10] sm:$0xff]
      %v3829 = vld [vmem:[%s3825 + $0x18] sm:$0xff]
      %v3830 = vld [vmem:[%s3825 + $0x20] sm:$0xff]
      %v3831 = vld [vmem:[%s3825 + $0x28] sm:$0xff]
      %v3832 = vld [vmem:[%s3825 + $0x30] sm:$0xff]
      %v3833 = vld [vmem:[%s3825 + $0x38] sm:$0xff]
      %v3834 = vld [vmem:[%s3825 + $0x40] sm:$0xff]
      %v3835 = vld [vmem:[%s3825 + $0x48] sm:$0xff]
      %v3836 = vld [vmem:[%s3825 + $0x50] sm:$0xff]
      %v3837 = vld [vmem:[%s3825 + $0x58] sm:$0xff]
      %v3838 = vld [vmem:[%s3825 + $0x60] sm:$0xff]
      %v3839 = vld [vmem:[%s3825 + $0x68] sm:$0xff]
      %v3840 = vld [vmem:[%s3825 + $0x70] sm:$0xff]
      %v3841 = vld [vmem:[%s3825 + $0x78] sm:$0xff]
      %v3842 = vld [vmem:[%s3825 + $0x80] sm:$0xff]
      %v3843 = vld [vmem:[%s3825 + $0x88] sm:$0xff]
      %v3844 = vld [vmem:[%s3825 + $0x90] sm:$0xff]
      %v3845 = vld [vmem:[%s3825 + $0x98] sm:$0xff]
      %v3846 = vld [vmem:[%s3825 + $0xa0] sm:$0xff]
      %v3847 = vld [vmem:[%s3825 + $0xa8] sm:$0xff]
      %v3848 = vld [vmem:[%s3825 + $0xb0] sm:$0xff]
      %v3849 = vld [vmem:[%s3825 + $0xb8] sm:$0xff]
      %v3850 = vld [vmem:[%s3825 + $0xc0] sm:$0xff]
      %v3851 = vld [vmem:[%s3825 + $0xc8] sm:$0xff]
      %v3852 = vld [vmem:[%s3825 + $0xd0] sm:$0xff]
      %v3853 = vld [vmem:[%s3825 + $0xd8] sm:$0xff]
      %v3854 = vld [vmem:[%s3825 + $0xe0] sm:$0xff]
      %v3855 = vld [vmem:[%s3825 + $0xe8] sm:$0xff]
      %v3856 = vld [vmem:[%s3825 + $0xf0] sm:$0xff]
      %v3857 = vld [vmem:[%s3825 + $0xf8] sm:$0xff]
      %s3858 = scalar_lea.vmem %s8, 4
      %v3859 = vld [vmem:[%s3858] sm:$0xf]
      %v3861 = vperm.slane %v3859, 0
      %v3862 = vperm.slane %v3859, 1
      %v3863 = vperm.slane %v3859, 2
      %v3864 = vperm.slane %v3859, 3
      %v3901 = vunpack.c.l.b16 %v3826
      %v3902 = vunpack.c.h.b16 %v3826
      %v3903 = vunpack.c.l.b16 %v3827
      %v3904 = vunpack.c.h.b16 %v3827
      %v3905 = vunpack.c.l.b16 %v3828
      %v3906 = vunpack.c.h.b16 %v3828
      %v3907 = vunpack.c.l.b16 %v3829
      %v3908 = vunpack.c.h.b16 %v3829
      %v3909 = vunpack.c.l.b16 %v3830
      %v3910 = vunpack.c.h.b16 %v3830
      %v3911 = vunpack.c.l.b16 %v3831
      %v3912 = vunpack.c.h.b16 %v3831
      %v3913 = vunpack.c.l.b16 %v3832
      %v3914 = vunpack.c.h.b16 %v3832
      %v3915 = vunpack.c.l.b16 %v3833
      %v3916 = vunpack.c.h.b16 %v3833
      %v3917 = vunpack.c.l.b16 %v3834
      %v3918 = vunpack.c.h.b16 %v3834
      %v3919 = vunpack.c.l.b16 %v3835
      %v3920 = vunpack.c.h.b16 %v3835
      %v3921 = vunpack.c.l.b16 %v3836
      %v3922 = vunpack.c.h.b16 %v3836
      %v3923 = vunpack.c.l.b16 %v3837
      %v3924 = vunpack.c.h.b16 %v3837
      %v3925 = vunpack.c.l.b16 %v3838
      %v3926 = vunpack.c.h.b16 %v3838
      %v3927 = vunpack.c.l.b16 %v3839
      %v3928 = vunpack.c.h.b16 %v3839
      %v3929 = vunpack.c.l.b16 %v3840
      %v3930 = vunpack.c.h.b16 %v3840
      %v3931 = vunpack.c.l.b16 %v3841
      %v3932 = vunpack.c.h.b16 %v3841
      %v3933 = vunpack.c.l.b16 %v3842
      %v3934 = vunpack.c.h.b16 %v3842
      %v3935 = vunpack.c.l.b16 %v3843
      %v3936 = vunpack.c.h.b16 %v3843
      %v3937 = vunpack.c.l.b16 %v3844
      %v3938 = vunpack.c.h.b16 %v3844
      %v3939 = vunpack.c.l.b16 %v3845
      %v3940 = vunpack.c.h.b16 %v3845
      %v3941 = vunpack.c.l.b16 %v3846
      %v3942 = vunpack.c.h.b16 %v3846
      %v3943 = vunpack.c.l.b16 %v3847
      %v3944 = vunpack.c.h.b16 %v3847
      %v3945 = vunpack.c.l.b16 %v3848
      %v3946 = vunpack.c.h.b16 %v3848
      %v3947 = vunpack.c.l.b16 %v3849
      %v3948 = vunpack.c.h.b16 %v3849
      %v3949 = vunpack.c.l.b16 %v3850
      %v3950 = vunpack.c.h.b16 %v3850
      %v3951 = vunpack.c.l.b16 %v3851
      %v3952 = vunpack.c.h.b16 %v3851
      %v3953 = vunpack.c.l.b16 %v3852
      %v3954 = vunpack.c.h.b16 %v3852
      %v3955 = vunpack.c.l.b16 %v3853
      %v3956 = vunpack.c.h.b16 %v3853
      %v3957 = vunpack.c.l.b16 %v3854
      %v3958 = vunpack.c.h.b16 %v3854
      %v3959 = vunpack.c.l.b16 %v3855
      %v3960 = vunpack.c.h.b16 %v3855
      %v3961 = vunpack.c.l.b16 %v3856
      %v3962 = vunpack.c.h.b16 %v3856
      %v3963 = vunpack.c.l.b16 %v3857
      %v3964 = vunpack.c.h.b16 %v3857
      %v3965 = vpack.c.b16 %v3905, %v3901
      %v3966 = vpack.c.b16 %v3906, %v3902
      %v3967 = vpack.c.b16 %v3907, %v3903
      %v3968 = vpack.c.b16 %v3908, %v3904
      %v3969 = vpack.c.b16 %v3913, %v3909
      %v3970 = vpack.c.b16 %v3914, %v3910
      %v3971 = vpack.c.b16 %v3915, %v3911
      %v3972 = vpack.c.b16 %v3916, %v3912
      %v3973 = vpack.c.b16 %v3921, %v3917
      %v3974 = vpack.c.b16 %v3922, %v3918
      %v3975 = vpack.c.b16 %v3923, %v3919
      %v3976 = vpack.c.b16 %v3924, %v3920
      %v3977 = vpack.c.b16 %v3929, %v3925
      %v3978 = vpack.c.b16 %v3930, %v3926
      %v3979 = vpack.c.b16 %v3931, %v3927
      %v3980 = vpack.c.b16 %v3932, %v3928
      %v3981 = vpack.c.b16 %v3937, %v3933
      %v3982 = vpack.c.b16 %v3938, %v3934
      %v3983 = vpack.c.b16 %v3939, %v3935
      %v3984 = vpack.c.b16 %v3940, %v3936
      %v3985 = vpack.c.b16 %v3945, %v3941
      %v3986 = vpack.c.b16 %v3946, %v3942
      %v3987 = vpack.c.b16 %v3947, %v3943
      %v3988 = vpack.c.b16 %v3948, %v3944
      %v3989 = vpack.c.b16 %v3953, %v3949
      %v3990 = vpack.c.b16 %v3954, %v3950
      %v3991 = vpack.c.b16 %v3955, %v3951
      %v3992 = vpack.c.b16 %v3956, %v3952
      %v3993 = vpack.c.b16 %v3961, %v3957
      %v3994 = vpack.c.b16 %v3962, %v3958
      %v3995 = vpack.c.b16 %v3963, %v3959
      %v3996 = vpack.c.b16 %v3964, %v3960
      %4029 = vmatpush.bf16.msra.mxu0 %v3993
      %4030 = vmatpush.bf16.msra.mxu0 %v3989
      %4031 = vmatpush.bf16.msra.mxu0 %v3985
      %4032 = vmatpush.bf16.msra.mxu0 %v3981
      %4033 = vmatpush.bf16.msra.mxu0 %v3977
      %4034 = vmatpush.bf16.msra.mxu0 %v3973
      %4035 = vmatpush.bf16.msra.mxu0 %v3969
      %4036 = vmatpush.bf16.msra.mxu0 %v3965
      %4037 = vmatmul.bf16.gmra.mxu0 %v3824
      %v4038 = vpop.f32.mrf.mxu0
      %v4039 = vadd.f32 %v3861, %v4038
      %v4040 = vpop.f32.mrf.mxu0
      %v4041 = vadd.f32 %v3861, %v4040
      %4042 = vdwg.mxu0
      %4043 = vmatpush.bf16.msra.mxu0 %v3994
      %4044 = vmatpush.bf16.msra.mxu0 %v3990
      %4045 = vmatpush.bf16.msra.mxu0 %v3986
      %4046 = vmatpush.bf16.msra.mxu0 %v3982
      %4047 = vmatpush.bf16.msra.mxu0 %v3978
      %4048 = vmatpush.bf16.msra.mxu0 %v3974
      %4049 = vmatpush.bf16.msra.mxu0 %v3970
      %4050 = vmatpush.bf16.msra.mxu0 %v3966
      %4051 = vmatmul.bf16.gmra.mxu0 %v3824
      %v4052 = vpop.f32.mrf.mxu0
      %v4053 = vadd.f32 %v3862, %v4052
      %v4054 = vpop.f32.mrf.mxu0
      %v4055 = vadd.f32 %v3862, %v4054
      %4056 = vdwg.mxu0
      %4057 = vmatpush.bf16.msra.mxu0 %v3995
      %4058 = vmatpush.bf16.msra.mxu0 %v3991
      %4059 = vmatpush.bf16.msra.mxu0 %v3987
      %4060 = vmatpush.bf16.msra.mxu0 %v3983
      %4061 = vmatpush.bf16.msra.mxu0 %v3979
      %4062 = vmatpush.bf16.msra.mxu0 %v3975
      %4063 = vmatpush.bf16.msra.mxu0 %v3971
      %4064 = vmatpush.bf16.msra.mxu0 %v3967
      %4065 = vmatmul.bf16.gmra.mxu0 %v3824
      %v4066 = vpop.f32.mrf.mxu0
      %v4067 = vadd.f32 %v3863, %v4066
      %v4068 = vpop.f32.mrf.mxu0
      %v4069 = vadd.f32 %v3863, %v4068
      %4070 = vdwg.mxu0
      %4071 = vmatpush.bf16.msra.mxu0 %v3996
      %4072 = vmatpush.bf16.msra.mxu0 %v3992
      %4073 = vmatpush.bf16.msra.mxu0 %v3988
      %4074 = vmatpush.bf16.msra.mxu0 %v3984
      %4075 = vmatpush.bf16.msra.mxu0 %v3980
      %4076 = vmatpush.bf16.msra.mxu0 %v3976
      %4077 = vmatpush.bf16.msra.mxu0 %v3972
      %4078 = vmatpush.bf16.msra.mxu0 %v3968
      %4079 = vmatmul.bf16.gmra.mxu0 %v3824
      %v4080 = vpop.f32.mrf.mxu0
      %v4081 = vadd.f32 %v3864, %v4080
      %v4082 = vpop.f32.mrf.mxu0
      %v4083 = vadd.f32 %v3864, %v4082
      %4084 = vdwg.mxu0
      %v4085 = vmul.f32 %v4039, 0.5
      %v4086 = vmul.f32 %v4053, 0.5
      %v4087 = vmul.f32 %v4067, 0.5
      %v4088 = vmul.f32 %v4081, 0.5
      %v4089 = vmul.f32 %v4041, 0.5
      %v4090 = vmul.f32 %v4055, 0.5
      %v4091 = vmul.f32 %v4069, 0.5
      %v4092 = vmul.f32 %v4083, 0.5
      %v4093 = vmul.f32 %v4039, 0.70710677
      %v4094 = vmul.f32 %v4053, 0.70710677
      %v4095 = vmul.f32 %v4067, 0.70710677
      %v4096 = vmul.f32 %v4081, 0.70710677
      %v4097 = vmul.f32 %v4041, 0.70710677
      %v4098 = vmul.f32 %v4055, 0.70710677
      %v4099 = vmul.f32 %v4069, 0.70710677
      %v4100 = vmul.f32 %v4083, 0.70710677
      %v4101 = vand.u32 2147483647, %v4093
      %v4102 = vand.u32 2147483647, %v4094
      %v4103 = vand.u32 2147483647, %v4095
      %v4104 = vand.u32 2147483647, %v4096
      %v4105 = vand.u32 2147483647, %v4097
      %v4106 = vand.u32 2147483647, %v4098
      %v4107 = vand.u32 2147483647, %v4099
      %v4108 = vand.u32 2147483647, %v4100
      %v4109 = vmul.f32 %v4101, 0.3275911
      %v4110 = vmul.f32 %v4102, 0.3275911
      %v4111 = vmul.f32 %v4103, 0.3275911
      %v4112 = vmul.f32 %v4104, 0.3275911
      %v4113 = vmul.f32 %v4105, 0.3275911
      %v4114 = vmul.f32 %v4106, 0.3275911
      %v4115 = vmul.f32 %v4107, 0.3275911
      %v4116 = vmul.f32 %v4108, 0.3275911
      %v4117 = vadd.f32 %v4109, 1.0
      %v4118 = vadd.f32 %v4110, 1.0
      %v4119 = vadd.f32 %v4111, 1.0
      %v4120 = vadd.f32 %v4112, 1.0
      %v4121 = vadd.f32 %v4113, 1.0
      %v4122 = vadd.f32 %v4114, 1.0
      %v4123 = vadd.f32 %v4115, 1.0
      %v4124 = vadd.f32 %v4116, 1.0
      %v4125 = vrcp.pop %v4117
      %v4126 = vmul.f32 %v4117, %v4125
      %v4127 = vsub.f32 1.0, %v4126
      %v4128 = vmul.f32 %v4125, %v4127
      %v4129 = vadd.f32 %v4125, %v4128
      %vm4130 = vweird.f32 %v4117
      %vm4131 = vweird.f32 %v4125
      %vm4132 = vmor %vm4130, %vm4131
      %v4133 = vsel %vm4132, %v4125, %v4129
      %v4134 = vand.u32 2147483647, %v4117
      %vm4135 = vcmp.eq.f32.partialorder %v4134, 8.507059e+37
      %v4136 = vand.u32 %v4117, 2147483648
      %v4137 = vor.u32 1.1754944e-38, %v4136
      %v4138 = vsel %vm4135, %v4137, %v4133
      %v4139 = vmul.f32 1.0, %v4138
      %v4140 = vrcp.pop %v4118
      %v4141 = vmul.f32 %v4118, %v4140
      %v4142 = vsub.f32 1.0, %v4141
      %v4143 = vmul.f32 %v4140, %v4142
      %v4144 = vadd.f32 %v4140, %v4143
      %vm4145 = vweird.f32 %v4118
      %vm4146 = vweird.f32 %v4140
      %vm4147 = vmor %vm4145, %vm4146
      %v4148 = vsel %vm4147, %v4140, %v4144
      %v4149 = vand.u32 2147483647, %v4118
      %vm4150 = vcmp.eq.f32.partialorder %v4149, 8.507059e+37
      %v4151 = vand.u32 %v4118, 2147483648
      %v4152 = vor.u32 1.1754944e-38, %v4151
      %v4153 = vsel %vm4150, %v4152, %v4148
      %v4154 = vmul.f32 1.0, %v4153
      %v4155 = vrcp.pop %v4119
      %v4156 = vmul.f32 %v4119, %v4155
      %v4157 = vsub.f32 1.0, %v4156
      %v4158 = vmul.f32 %v4155, %v4157
      %v4159 = vadd.f32 %v4155, %v4158
      %vm4160 = vweird.f32 %v4119
      %vm4161 = vweird.f32 %v4155
      %vm4162 = vmor %vm4160, %vm4161
      %v4163 = vsel %vm4162, %v4155, %v4159
      %v4164 = vand.u32 2147483647, %v4119
      %vm4165 = vcmp.eq.f32.partialorder %v4164, 8.507059e+37
      %v4166 = vand.u32 %v4119, 2147483648
      %v4167 = vor.u32 1.1754944e-38, %v4166
      %v4168 = vsel %vm4165, %v4167, %v4163
      %v4169 = vmul.f32 1.0, %v4168
      %v4170 = vrcp.pop %v4120
      %v4171 = vmul.f32 %v4120, %v4170
      %v4172 = vsub.f32 1.0, %v4171
      %v4173 = vmul.f32 %v4170, %v4172
      %v4174 = vadd.f32 %v4170, %v4173
      %vm4175 = vweird.f32 %v4120
      %vm4176 = vweird.f32 %v4170
      %vm4177 = vmor %vm4175, %vm4176
      %v4178 = vsel %vm4177, %v4170, %v4174
      %v4179 = vand.u32 2147483647, %v4120
      %vm4180 = vcmp.eq.f32.partialorder %v4179, 8.507059e+37
      %v4181 = vand.u32 %v4120, 2147483648
      %v4182 = vor.u32 1.1754944e-38, %v4181
      %v4183 = vsel %vm4180, %v4182, %v4178
      %v4184 = vmul.f32 1.0, %v4183
      %v4185 = vrcp.pop %v4121
      %v4186 = vmul.f32 %v4121, %v4185
      %v4187 = vsub.f32 1.0, %v4186
      %v4188 = vmul.f32 %v4185, %v4187
      %v4189 = vadd.f32 %v4185, %v4188
      %vm4190 = vweird.f32 %v4121
      %vm4191 = vweird.f32 %v4185
      %vm4192 = vmor %vm4190, %vm4191
      %v4193 = vsel %vm4192, %v4185, %v4189
      %v4194 = vand.u32 2147483647, %v4121
      %vm4195 = vcmp.eq.f32.partialorder %v4194, 8.507059e+37
      %v4196 = vand.u32 %v4121, 2147483648
      %v4197 = vor.u32 1.1754944e-38, %v4196
      %v4198 = vsel %vm4195, %v4197, %v4193
      %v4199 = vmul.f32 1.0, %v4198
      %v4200 = vrcp.pop %v4122
      %v4201 = vmul.f32 %v4122, %v4200
      %v4202 = vsub.f32 1.0, %v4201
      %v4203 = vmul.f32 %v4200, %v4202
      %v4204 = vadd.f32 %v4200, %v4203
      %vm4205 = vweird.f32 %v4122
      %vm4206 = vweird.f32 %v4200
      %vm4207 = vmor %vm4205, %vm4206
      %v4208 = vsel %vm4207, %v4200, %v4204
      %v4209 = vand.u32 2147483647, %v4122
      %vm4210 = vcmp.eq.f32.partialorder %v4209, 8.507059e+37
      %v4211 = vand.u32 %v4122, 2147483648
      %v4212 = vor.u32 1.1754944e-38, %v4211
      %v4213 = vsel %vm4210, %v4212, %v4208
      %v4214 = vmul.f32 1.0, %v4213
      %v4215 = vrcp.pop %v4123
      %v4216 = vmul.f32 %v4123, %v4215
      %v4217 = vsub.f32 1.0, %v4216
      %v4218 = vmul.f32 %v4215, %v4217
      %v4219 = vadd.f32 %v4215, %v4218
      %vm4220 = vweird.f32 %v4123
      %vm4221 = vweird.f32 %v4215
      %vm4222 = vmor %vm4220, %vm4221
      %v4223 = vsel %vm4222, %v4215, %v4219
      %v4224 = vand.u32 2147483647, %v4123
      %vm4225 = vcmp.eq.f32.partialorder %v4224, 8.507059e+37
      %v4226 = vand.u32 %v4123, 2147483648
      %v4227 = vor.u32 1.1754944e-38, %v4226
      %v4228 = vsel %vm4225, %v4227, %v4223
      %v4229 = vmul.f32 1.0, %v4228
      %v4230 = vrcp.pop %v4124
      %v4231 = vmul.f32 %v4124, %v4230
      %v4232 = vsub.f32 1.0, %v4231
      %v4233 = vmul.f32 %v4230, %v4232
      %v4234 = vadd.f32 %v4230, %v4233
      %vm4235 = vweird.f32 %v4124
      %vm4236 = vweird.f32 %v4230
      %vm4237 = vmor %vm4235, %vm4236
      %v4238 = vsel %vm4237, %v4230, %v4234
      %v4239 = vand.u32 2147483647, %v4124
      %vm4240 = vcmp.eq.f32.partialorder %v4239, 8.507059e+37
      %v4241 = vand.u32 %v4124, 2147483648
      %v4242 = vor.u32 1.1754944e-38, %v4241
      %v4243 = vsel %vm4240, %v4242, %v4238
      %v4244 = vmul.f32 1.0, %v4243
      %v4245 = vmul.f32 %v4139, 1.0614054
      %v4246 = vmul.f32 %v4154, 1.0614054
      %v4247 = vmul.f32 %v4169, 1.0614054
      %v4248 = vmul.f32 %v4184, 1.0614054
      %v4249 = vmul.f32 %v4199, 1.0614054
      %v4250 = vmul.f32 %v4214, 1.0614054
      %v4251 = vmul.f32 %v4229, 1.0614054
      %v4252 = vmul.f32 %v4244, 1.0614054
      %v4253 = vadd.f32 %v4245, -1.4531521
      %v4254 = vadd.f32 %v4246, -1.4531521
      %v4255 = vadd.f32 %v4247, -1.4531521
      %v4256 = vadd.f32 %v4248, -1.4531521
      %v4257 = vadd.f32 %v4249, -1.4531521
      %v4258 = vadd.f32 %v4250, -1.4531521
      %v4259 = vadd.f32 %v4251, -1.4531521
      %v4260 = vadd.f32 %v4252, -1.4531521
      %v4261 = vmul.f32 %v4253, %v4139
      %v4262 = vmul.f32 %v4254, %v4154
      %v4263 = vmul.f32 %v4255, %v4169
      %v4264 = vmul.f32 %v4256, %v4184
      %v4265 = vmul.f32 %v4257, %v4199
      %v4266 = vmul.f32 %v4258, %v4214
      %v4267 = vmul.f32 %v4259, %v4229
      %v4268 = vmul.f32 %v4260, %v4244
      %v4269 = vadd.f32 %v4261, 1.4214138
      %v4270 = vadd.f32 %v4262, 1.4214138
      %v4271 = vadd.f32 %v4263, 1.4214138
      %v4272 = vadd.f32 %v4264, 1.4214138
      %v4273 = vadd.f32 %v4265, 1.4214138
      %v4274 = vadd.f32 %v4266, 1.4214138
      %v4275 = vadd.f32 %v4267, 1.4214138
      %v4276 = vadd.f32 %v4268, 1.4214138
      %v4277 = vmul.f32 %v4269, %v4139
      %v4278 = vmul.f32 %v4270, %v4154
      %v4279 = vmul.f32 %v4271, %v4169
      %v4280 = vmul.f32 %v4272, %v4184
      %v4281 = vmul.f32 %v4273, %v4199
      %v4282 = vmul.f32 %v4274, %v4214
      %v4283 = vmul.f32 %v4275, %v4229
      %v4284 = vmul.f32 %v4276, %v4244
      %v4285 = vadd.f32 %v4277, -0.28449672
      %v4286 = vadd.f32 %v4278, -0.28449672
      %v4287 = vadd.f32 %v4279, -0.28449672
      %v4288 = vadd.f32 %v4280, -0.28449672
      %v4289 = vadd.f32 %v4281, -0.28449672
      %v4290 = vadd.f32 %v4282, -0.28449672
      %v4291 = vadd.f32 %v4283, -0.28449672
      %v4292 = vadd.f32 %v4284, -0.28449672
      %v4293 = vmul.f32 %v4285, %v4139
      %v4294 = vmul.f32 %v4286, %v4154
      %v4295 = vmul.f32 %v4287, %v4169
      %v4296 = vmul.f32 %v4288, %v4184
      %v4297 = vmul.f32 %v4289, %v4199
      %v4298 = vmul.f32 %v4290, %v4214
      %v4299 = vmul.f32 %v4291, %v4229
      %v4300 = vmul.f32 %v4292, %v4244
      %v4301 = vadd.f32 %v4293, 0.2548296
      %v4302 = vadd.f32 %v4294, 0.2548296
      %v4303 = vadd.f32 %v4295, 0.2548296
      %v4304 = vadd.f32 %v4296, 0.2548296
      %v4305 = vadd.f32 %v4297, 0.2548296
      %v4306 = vadd.f32 %v4298, 0.2548296
      %v4307 = vadd.f32 %v4299, 0.2548296
      %v4308 = vadd.f32 %v4300, 0.2548296
      %v4309 = vmul.f32 %v4301, %v4139
      %v4310 = vmul.f32 %v4302, %v4154
      %v4311 = vmul.f32 %v4303, %v4169
      %v4312 = vmul.f32 %v4304, %v4184
      %v4313 = vmul.f32 %v4305, %v4199
      %v4314 = vmul.f32 %v4306, %v4214
      %v4315 = vmul.f32 %v4307, %v4229
      %v4316 = vmul.f32 %v4308, %v4244
      %v4317 = vsub.f32 0.0, %v4101
      %v4318 = vsub.f32 0.0, %v4102
      %v4319 = vsub.f32 0.0, %v4103
      %v4320 = vsub.f32 0.0, %v4104
      %v4321 = vsub.f32 0.0, %v4105
      %v4322 = vsub.f32 0.0, %v4106
      %v4323 = vsub.f32 0.0, %v4107
      %v4324 = vsub.f32 0.0, %v4108
      %v4325 = vmul.f32 %v4317, %v4101
      %v4326 = vmul.f32 %v4318, %v4102
      %v4327 = vmul.f32 %v4319, %v4103
      %v4328 = vmul.f32 %v4320, %v4104
      %v4329 = vmul.f32 %v4321, %v4105
      %v4330 = vmul.f32 %v4322, %v4106
      %v4331 = vmul.f32 %v4323, %v4107
      %v4332 = vmul.f32 %v4324, %v4108
      %v4333 = vmul.f32 %v4325, 1.442695
      %v4334 = vpow.pop %v4333
      %v4335 = vmul.f32 %v4326, 1.442695
      %v4336 = vpow.pop %v4335
      %v4337 = vmul.f32 %v4327, 1.442695
      %v4338 = vpow.pop %v4337
      %v4339 = vmul.f32 %v4328, 1.442695
      %v4340 = vpow.pop %v4339
      %v4341 = vmul.f32 %v4329, 1.442695
      %v4342 = vpow.pop %v4341
      %v4343 = vmul.f32 %v4330, 1.442695
      %v4344 = vpow.pop %v4343
      %v4345 = vmul.f32 %v4331, 1.442695
      %v4346 = vpow.pop %v4345
      %v4347 = vmul.f32 %v4332, 1.442695
      %v4348 = vpow.pop %v4347
      %v4349 = vmul.f32 %v4309, %v4334
      %v4350 = vmul.f32 %v4310, %v4336
      %v4351 = vmul.f32 %v4311, %v4338
      %v4352 = vmul.f32 %v4312, %v4340
      %v4353 = vmul.f32 %v4313, %v4342
      %v4354 = vmul.f32 %v4314, %v4344
      %v4355 = vmul.f32 %v4315, %v4346
      %v4356 = vmul.f32 %v4316, %v4348
      %v4357 = vsub.f32 1.0, %v4349
      %v4358 = vsub.f32 1.0, %v4350
      %v4359 = vsub.f32 1.0, %v4351
      %v4360 = vsub.f32 1.0, %v4352
      %v4361 = vsub.f32 1.0, %v4353
      %v4362 = vsub.f32 1.0, %v4354
      %v4363 = vsub.f32 1.0, %v4355
      %v4364 = vsub.f32 1.0, %v4356
      %vm4365 = vcmp.lt.f32.partialorder %v4093, 0.0
      %vm4366 = vcmp.lt.f32.partialorder %v4094, 0.0
      %vm4367 = vcmp.lt.f32.partialorder %v4095, 0.0
      %vm4368 = vcmp.lt.f32.partialorder %v4096, 0.0
      %vm4369 = vcmp.lt.f32.partialorder %v4097, 0.0
      %vm4370 = vcmp.lt.f32.partialorder %v4098, 0.0
      %vm4371 = vcmp.lt.f32.partialorder %v4099, 0.0
      %vm4372 = vcmp.lt.f32.partialorder %v4100, 0.0
      %v4373 = vsub.f32 0.0, %v4357
      %v4374 = vsub.f32 0.0, %v4358
      %v4375 = vsub.f32 0.0, %v4359
      %v4376 = vsub.f32 0.0, %v4360
      %v4377 = vsub.f32 0.0, %v4361
      %v4378 = vsub.f32 0.0, %v4362
      %v4379 = vsub.f32 0.0, %v4363
      %v4380 = vsub.f32 0.0, %v4364
      %v4381 = vsel %vm4365, %v4373, %v4357
      %v4382 = vsel %vm4366, %v4374, %v4358
      %v4383 = vsel %vm4367, %v4375, %v4359
      %v4384 = vsel %vm4368, %v4376, %v4360
      %v4385 = vsel %vm4369, %v4377, %v4361
      %v4386 = vsel %vm4370, %v4378, %v4362
      %v4387 = vsel %vm4371, %v4379, %v4363
      %v4388 = vsel %vm4372, %v4380, %v4364
      %v4389 = vadd.f32 %v4381, 1.0
      %v4390 = vadd.f32 %v4382, 1.0
      %v4391 = vadd.f32 %v4383, 1.0
      %v4392 = vadd.f32 %v4384, 1.0
      %v4393 = vadd.f32 %v4385, 1.0
      %v4394 = vadd.f32 %v4386, 1.0
      %v4395 = vadd.f32 %v4387, 1.0
      %v4396 = vadd.f32 %v4388, 1.0
      %v4397 = vmul.f32 %v4085, %v4389
      %v4398 = vmul.f32 %v4086, %v4390
      %v4399 = vmul.f32 %v4087, %v4391
      %v4400 = vmul.f32 %v4088, %v4392
      %v4401 = vmul.f32 %v4089, %v4393
      %v4402 = vmul.f32 %v4090, %v4394
      %v4403 = vmul.f32 %v4091, %v4395
      %v4404 = vmul.f32 %v4092, %v4396
      %v4405 = vpack.c.bf16 %v4401, %v4397
      %v4406 = vpack.c.bf16 %v4402, %v4398
      %v4407 = vpack.c.bf16 %v4403, %v4399
      %v4408 = vpack.c.bf16 %v4404, %v4400
      %s4409 = scalar_lea.vmem %s9, 256
      %v4410 = vld [vmem:[%s4409] sm:$0xf]
      %v4411 = vld [vmem:[%s4409 + $0x4] sm:$0xf]
      %v4412 = vld [vmem:[%s4409 + $0x8] sm:$0xf]
      %v4413 = vld [vmem:[%s4409 + $0xc] sm:$0xf]
      %v4414 = vld [vmem:[%s4409 + $0x10] sm:$0xf]
      %v4415 = vld [vmem:[%s4409 + $0x14] sm:$0xf]
      %v4416 = vld [vmem:[%s4409 + $0x18] sm:$0xf]
      %v4417 = vld [vmem:[%s4409 + $0x1c] sm:$0xf]
      %v4418 = vld [vmem:[%s4409 + $0x20] sm:$0xf]
      %v4419 = vld [vmem:[%s4409 + $0x24] sm:$0xf]
      %v4420 = vld [vmem:[%s4409 + $0x28] sm:$0xf]
      %v4421 = vld [vmem:[%s4409 + $0x2c] sm:$0xf]
      %v4422 = vld [vmem:[%s4409 + $0x30] sm:$0xf]
      %v4423 = vld [vmem:[%s4409 + $0x34] sm:$0xf]
      %v4424 = vld [vmem:[%s4409 + $0x38] sm:$0xf]
      %v4425 = vld [vmem:[%s4409 + $0x3c] sm:$0xf]
      %v4426 = vld [vmem:[%s4409 + $0x40] sm:$0xf]
      %v4427 = vld [vmem:[%s4409 + $0x44] sm:$0xf]
      %v4428 = vld [vmem:[%s4409 + $0x48] sm:$0xf]
      %v4429 = vld [vmem:[%s4409 + $0x4c] sm:$0xf]
      %v4430 = vld [vmem:[%s4409 + $0x50] sm:$0xf]
      %v4431 = vld [vmem:[%s4409 + $0x54] sm:$0xf]
      %v4432 = vld [vmem:[%s4409 + $0x58] sm:$0xf]
      %v4433 = vld [vmem:[%s4409 + $0x5c] sm:$0xf]
      %v4434 = vld [vmem:[%s4409 + $0x60] sm:$0xf]
      %v4435 = vld [vmem:[%s4409 + $0x64] sm:$0xf]
      %v4436 = vld [vmem:[%s4409 + $0x68] sm:$0xf]
      %v4437 = vld [vmem:[%s4409 + $0x6c] sm:$0xf]
      %v4438 = vld [vmem:[%s4409 + $0x70] sm:$0xf]
      %v4439 = vld [vmem:[%s4409 + $0x74] sm:$0xf]
      %v4440 = vld [vmem:[%s4409 + $0x78] sm:$0xf]
      %v4441 = vld [vmem:[%s4409 + $0x7c] sm:$0xf]
      %v4442 = vld [vmem:[%s4409 + $0x80] sm:$0xf]
      %v4443 = vld [vmem:[%s4409 + $0x84] sm:$0xf]
      %v4444 = vld [vmem:[%s4409 + $0x88] sm:$0xf]
      %v4445 = vld [vmem:[%s4409 + $0x8c] sm:$0xf]
      %v4446 = vld [vmem:[%s4409 + $0x90] sm:$0xf]
      %v4447 = vld [vmem:[%s4409 + $0x94] sm:$0xf]
      %v4448 = vld [vmem:[%s4409 + $0x98] sm:$0xf]
      %v4449 = vld [vmem:[%s4409 + $0x9c] sm:$0xf]
      %v4450 = vld [vmem:[%s4409 + $0xa0] sm:$0xf]
      %v4451 = vld [vmem:[%s4409 + $0xa4] sm:$0xf]
      %v4452 = vld [vmem:[%s4409 + $0xa8] sm:$0xf]
      %v4453 = vld [vmem:[%s4409 + $0xac] sm:$0xf]
      %v4454 = vld [vmem:[%s4409 + $0xb0] sm:$0xf]
      %v4455 = vld [vmem:[%s4409 + $0xb4] sm:$0xf]
      %v4456 = vld [vmem:[%s4409 + $0xb8] sm:$0xf]
      %v4457 = vld [vmem:[%s4409 + $0xbc] sm:$0xf]
      %v4458 = vld [vmem:[%s4409 + $0xc0] sm:$0xf]
      %v4459 = vld [vmem:[%s4409 + $0xc4] sm:$0xf]
      %v4460 = vld [vmem:[%s4409 + $0xc8] sm:$0xf]
      %v4461 = vld [vmem:[%s4409 + $0xcc] sm:$0xf]
      %v4462 = vld [vmem:[%s4409 + $0xd0] sm:$0xf]
      %v4463 = vld [vmem:[%s4409 + $0xd4] sm:$0xf]
      %v4464 = vld [vmem:[%s4409 + $0xd8] sm:$0xf]
      %v4465 = vld [vmem:[%s4409 + $0xdc] sm:$0xf]
      %v4466 = vld [vmem:[%s4409 + $0xe0] sm:$0xf]
      %v4467 = vld [vmem:[%s4409 + $0xe4] sm:$0xf]
      %v4468 = vld [vmem:[%s4409 + $0xe8] sm:$0xf]
      %v4469 = vld [vmem:[%s4409 + $0xec] sm:$0xf]
      %v4470 = vld [vmem:[%s4409 + $0xf0] sm:$0xf]
      %v4471 = vld [vmem:[%s4409 + $0xf4] sm:$0xf]
      %v4472 = vld [vmem:[%s4409 + $0xf8] sm:$0xf]
      %v4473 = vld [vmem:[%s4409 + $0xfc] sm:$0xf]
      %v4538 = vunpack.c.l.b16 %v4410
      %v4539 = vunpack.c.l.b16 %v4411
      %v4540 = vunpack.c.l.b16 %v4412
      %v4541 = vunpack.c.l.b16 %v4413
      %v4542 = vunpack.c.l.b16 %v4414
      %v4543 = vunpack.c.l.b16 %v4415
      %v4544 = vunpack.c.l.b16 %v4416
      %v4545 = vunpack.c.l.b16 %v4417
      %v4546 = vunpack.c.l.b16 %v4418
      %v4547 = vunpack.c.l.b16 %v4419
      %v4548 = vunpack.c.l.b16 %v4420
      %v4549 = vunpack.c.l.b16 %v4421
      %v4550 = vunpack.c.l.b16 %v4422
      %v4551 = vunpack.c.l.b16 %v4423
      %v4552 = vunpack.c.l.b16 %v4424
      %v4553 = vunpack.c.l.b16 %v4425
      %v4554 = vunpack.c.l.b16 %v4426
      %v4555 = vunpack.c.l.b16 %v4427
      %v4556 = vunpack.c.l.b16 %v4428
      %v4557 = vunpack.c.l.b16 %v4429
      %v4558 = vunpack.c.l.b16 %v4430
      %v4559 = vunpack.c.l.b16 %v4431
      %v4560 = vunpack.c.l.b16 %v4432
      %v4561 = vunpack.c.l.b16 %v4433
      %v4562 = vunpack.c.l.b16 %v4434
      %v4563 = vunpack.c.l.b16 %v4435
      %v4564 = vunpack.c.l.b16 %v4436
      %v4565 = vunpack.c.l.b16 %v4437
      %v4566 = vunpack.c.l.b16 %v4438
      %v4567 = vunpack.c.l.b16 %v4439
      %v4568 = vunpack.c.l.b16 %v4440
      %v4569 = vunpack.c.l.b16 %v4441
      %v4570 = vunpack.c.l.b16 %v4442
      %v4571 = vunpack.c.l.b16 %v4443
      %v4572 = vunpack.c.l.b16 %v4444
      %v4573 = vunpack.c.l.b16 %v4445
      %v4574 = vunpack.c.l.b16 %v4446
      %v4575 = vunpack.c.l.b16 %v4447
      %v4576 = vunpack.c.l.b16 %v4448
      %v4577 = vunpack.c.l.b16 %v4449
      %v4578 = vunpack.c.l.b16 %v4450
      %v4579 = vunpack.c.l.b16 %v4451
      %v4580 = vunpack.c.l.b16 %v4452
      %v4581 = vunpack.c.l.b16 %v4453
      %v4582 = vunpack.c.l.b16 %v4454
      %v4583 = vunpack.c.l.b16 %v4455
      %v4584 = vunpack.c.l.b16 %v4456
      %v4585 = vunpack.c.l.b16 %v4457
      %v4586 = vunpack.c.l.b16 %v4458
      %v4587 = vunpack.c.l.b16 %v4459
      %v4588 = vunpack.c.l.b16 %v4460
      %v4589 = vunpack.c.l.b16 %v4461
      %v4590 = vunpack.c.l.b16 %v4462
      %v4591 = vunpack.c.l.b16 %v4463
      %v4592 = vunpack.c.l.b16 %v4464
      %v4593 = vunpack.c.l.b16 %v4465
      %v4594 = vunpack.c.l.b16 %v4466
      %v4595 = vunpack.c.l.b16 %v4467
      %v4596 = vunpack.c.l.b16 %v4468
      %v4597 = vunpack.c.l.b16 %v4469
      %v4598 = vunpack.c.l.b16 %v4470
      %v4599 = vunpack.c.l.b16 %v4471
      %v4600 = vunpack.c.l.b16 %v4472
      %v4601 = vunpack.c.l.b16 %v4473
      %v4602 = vpack.c.b16 %v4539, %v4538
      %v4603 = vpack.c.b16 %v4541, %v4540
      %v4604 = vpack.c.b16 %v4543, %v4542
      %v4605 = vpack.c.b16 %v4545, %v4544
      %v4606 = vpack.c.b16 %v4547, %v4546
      %v4607 = vpack.c.b16 %v4549, %v4548
      %v4608 = vpack.c.b16 %v4551, %v4550
      %v4609 = vpack.c.b16 %v4553, %v4552
      %v4610 = vpack.c.b16 %v4555, %v4554
      %v4611 = vpack.c.b16 %v4557, %v4556
      %v4612 = vpack.c.b16 %v4559, %v4558
      %v4613 = vpack.c.b16 %v4561, %v4560
      %v4614 = vpack.c.b16 %v4563, %v4562
      %v4615 = vpack.c.b16 %v4565, %v4564
      %v4616 = vpack.c.b16 %v4567, %v4566
      %v4617 = vpack.c.b16 %v4569, %v4568
      %v4618 = vpack.c.b16 %v4571, %v4570
      %v4619 = vpack.c.b16 %v4573, %v4572
      %v4620 = vpack.c.b16 %v4575, %v4574
      %v4621 = vpack.c.b16 %v4577, %v4576
      %v4622 = vpack.c.b16 %v4579, %v4578
      %v4623 = vpack.c.b16 %v4581, %v4580
      %v4624 = vpack.c.b16 %v4583, %v4582
      %v4625 = vpack.c.b16 %v4585, %v4584
      %v4626 = vpack.c.b16 %v4587, %v4586
      %v4627 = vpack.c.b16 %v4589, %v4588
      %v4628 = vpack.c.b16 %v4591, %v4590
      %v4629 = vpack.c.b16 %v4593, %v4592
      %v4630 = vpack.c.b16 %v4595, %v4594
      %v4631 = vpack.c.b16 %v4597, %v4596
      %v4632 = vpack.c.b16 %v4599, %v4598
      %v4633 = vpack.c.b16 %v4601, %v4600
      %4666 = vmatpush.bf16.msra.mxu0 %v4609
      %4667 = vmatpush.bf16.msra.mxu0 %v4608
      %4668 = vmatpush.bf16.msra.mxu0 %v4607
      %4669 = vmatpush.bf16.msra.mxu0 %v4606
      %4670 = vmatpush.bf16.msra.mxu0 %v4605
      %4671 = vmatpush.bf16.msra.mxu0 %v4604
      %4672 = vmatpush.bf16.msra.mxu0 %v4603
      %4673 = vmatpush.bf16.msra.mxu0 %v4602
      %4674 = vmatmul.bf16.gmra.mxu0 %v4405
      %v4675 = vpop.f32.mrf.mxu0
      %v4676 = vadd.f32 0.0, %v4675
      %v4677 = vpop.f32.mrf.mxu0
      %v4678 = vadd.f32 0.0, %v4677
      %4679 = vdwg.mxu0
      %4680 = vmatpush.bf16.msra.mxu0 %v4617
      %4681 = vmatpush.bf16.msra.mxu0 %v4616
      %4682 = vmatpush.bf16.msra.mxu0 %v4615
      %4683 = vmatpush.bf16.msra.mxu0 %v4614
      %4684 = vmatpush.bf16.msra.mxu0 %v4613
      %4685 = vmatpush.bf16.msra.mxu0 %v4612
      %4686 = vmatpush.bf16.msra.mxu0 %v4611
      %4687 = vmatpush.bf16.msra.mxu0 %v4610
      %4688 = vmatmul.bf16.gmra.mxu0 %v4406
      %v4689 = vpop.f32.mrf.mxu0
      %v4690 = vadd.f32 %v4676, %v4689
      %v4691 = vpop.f32.mrf.mxu0
      %v4692 = vadd.f32 %v4678, %v4691
      %4693 = vdwg.mxu0
      %4694 = vmatpush.bf16.msra.mxu0 %v4625
      %4695 = vmatpush.bf16.msra.mxu0 %v4624
      %4696 = vmatpush.bf16.msra.mxu0 %v4623
      %4697 = vmatpush.bf16.msra.mxu0 %v4622
      %4698 = vmatpush.bf16.msra.mxu0 %v4621
      %4699 = vmatpush.bf16.msra.mxu0 %v4620
      %4700 = vmatpush.bf16.msra.mxu0 %v4619
      %4701 = vmatpush.bf16.msra.mxu0 %v4618
      %4702 = vmatmul.bf16.gmra.mxu0 %v4407
      %v4703 = vpop.f32.mrf.mxu0
      %v4704 = vadd.f32 %v4690, %v4703
      %v4705 = vpop.f32.mrf.mxu0
      %v4706 = vadd.f32 %v4692, %v4705
      %4707 = vdwg.mxu0
      %4708 = vmatpush.bf16.msra.mxu0 %v4633
      %4709 = vmatpush.bf16.msra.mxu0 %v4632
      %4710 = vmatpush.bf16.msra.mxu0 %v4631
      %4711 = vmatpush.bf16.msra.mxu0 %v4630
      %4712 = vmatpush.bf16.msra.mxu0 %v4629
      %4713 = vmatpush.bf16.msra.mxu0 %v4628
      %4714 = vmatpush.bf16.msra.mxu0 %v4627
      %4715 = vmatpush.bf16.msra.mxu0 %v4626
      %4716 = vmatmul.bf16.gmra.mxu0 %v4408
      %v4717 = vpop.f32.mrf.mxu0
      %v4718 = vadd.f32 %v4704, %v4717
      %v4719 = vpop.f32.mrf.mxu0
      %v4720 = vadd.f32 %v4706, %v4719
      %4721 = vdwg.mxu0
      %v4722 = vadd.f32 %v3768, %v4718
      %v4723 = vadd.f32 %v3769, %v4720
      %s4724 = scalar_lea.vmem %s10, 1
      %v4725 = vld [vmem:[%s4724] sm:$0x1]
      %v4727 = vperm.slane %v4725, 0
      %v4729 = vadd.f32 %v4722, %v4727
      %v4730 = vadd.f32 %v4723, %v4727
      %v4731 = vld [vmem:[%s15] sm:$0x1]
      %v4732 = vld [vmem:[%s16] sm:$0x1]
      %4733 = vadd.xlane.f32.xlu0 %v4729
      %v4734 = vpop.xlane.xlu0 %4733
      %4735 = vadd.xlane.f32.xlu0 %v4730
      %v4736 = vpop.xlane.xlu0 %4735
      %v4737 = vmul.f32 %v4734, %v1236
      %v4738 = vmul.f32 %v4736, %v1236
      %v4739 = vsub.f32 %v4729, %v4737
      %v4740 = vsub.f32 %v4730, %v4738
      %v4741 = vmul.f32 %v4739, %v4739
      %v4742 = vmul.f32 %v4740, %v4740
      %4743 = vadd.xlane.f32.xlu0 %v4741
      %v4744 = vpop.xlane.xlu0 %4743
      %4745 = vadd.xlane.f32.xlu0 %v4742
      %v4746 = vpop.xlane.xlu0 %4745
      %v4747 = vmul.f32 %v4744, %v1236
      %v4748 = vmul.f32 %v4746, %v1236
      %v4749 = vadd.f32 %v4747, 1e-05
      %v4750 = vadd.f32 %v4748, 1e-05
      %v4751 = vrsqrt.pop %v4749
      %v4752 = vmul.f32 %v4751, %v4749
      %v4753 = vmul.f32 %v4752, %v4751
      %v4754 = vmul.f32 0.5, %v4753
      %v4755 = vsub.f32 1.5, %v4754
      %v4756 = vmul.f32 %v4751, %v4755
      %vm4757 = vweird.f32 %v4749
      %vm4758 = vweird.f32 %v4751
      %vm4759 = vmor %vm4757, %vm4758
      %v4760 = vsel %vm4759, %v4751, %v4756
      %v4761 = vrsqrt.pop %v4750
      %v4762 = vmul.f32 %v4761, %v4750
      %v4763 = vmul.f32 %v4762, %v4761
      %v4764 = vmul.f32 0.5, %v4763
      %v4765 = vsub.f32 1.5, %v4764
      %v4766 = vmul.f32 %v4761, %v4765
      %vm4767 = vweird.f32 %v4750
      %vm4768 = vweird.f32 %v4761
      %vm4769 = vmor %vm4767, %vm4768
      %v4770 = vsel %vm4769, %v4761, %v4766
      %v4771 = vmul.f32 %v4739, %v4760
      %v4772 = vmul.f32 %v4740, %v4770
      %v4774 = vperm.slane %v4731, 0
      %v4776 = vmul.f32 %v4771, %v4774
      %v4777 = vmul.f32 %v4772, %v4774
      %v4779 = vperm.slane %v4732, 0
      %v4781 = vadd.f32 %v4776, %v4779
      %v4782 = vadd.f32 %v4777, %v4779
      %4783 = vst [vmem:[%s548] sm:$0xff] %v4781
      %4784 = vst [vmem:[%s548 + $0x8] sm:$0xff] %v4782
      %p4785 = scmp.lt.s32.totalorder %s28, 1
      %s4786 = scalar_select %p4785, %s28, 1
      %s4787 = smul.addr %s4786, 2
      %s4788 = smul.addr %s4787, 8
      %s4789 = scalar_lea.vmem %s17, %s4788
      // Predicated region
      $region89: #{backbone_forward.1} parent=87 // pred_check
        %p4790 = pneg %p408
      $region90: #{backbone_forward.1} parent=87 // pred_check_branch
        %4792 = sbr.rel (%p4790) target = $region92
      $region91: #{backbone_forward.1} parent=87 // pred_region
        _
      $region92: #{backbone_forward.1} parent=87 // pred_fallthru
        _
    $region88: #{backbone_forward.1} parent=5 // pred_fallthru
      _
    %p4793 = scmp.le.s32.totalorder 2, %s23
    // Predicated region
    $region93: #{backbone_forward.1} parent=5 // pred_check
      %p4794 = pneg %p4793
    $region94: #{backbone_forward.1} parent=5 // pred_check_branch
      %4796 = sbr.rel (%p4794) target = $region96
    $region95: #{backbone_forward.1} parent=5 // pred_region
      %s4797 = ssub.s32 %s23, 2
      // Predicated region
      $region97: #{backbone_forward.1} parent=95 // pred_check
        %p4798 = pneg %p414
      $region98: #{backbone_forward.1} parent=95 // pred_check_branch
        %4800 = sbr.rel (%p4798) target = $region100
      $region99: #{backbone_forward.1} parent=95 // pred_region
        %p4801 = scmp.lt.s32.totalorder %s29, 1
        %s4802 = scalar_select %p4801, %s29, 1
        %s4803 = smul.addr %s4802, 2
        %s4804 = smul.addr %s4803, 8
        %s4805 = scalar_lea.vmem %s17, %s4804
      $region100: #{backbone_forward.1} parent=95 // pred_fallthru
        _
    $region96: #{backbone_forward.1} parent=5 // pred_fallthru
      _
  $region6: #{backbone_forward.1} parent=0 // loop_footer
    %s27 = sadd.s32 1, %s23
  $region7: #{backbone_forward.1} parent=0 // loop_footer_branch
    %22 = sbr.rel target = $region3
  $region8: #{backbone_forward.1} parent=0 // loop_exit
    _

</llo_original>
